<compile_context>
chip_gen: v6e
topology: v6e:2x2x1
jax: 0.10.0
libtpu: 0.0.40
codegen_flags: <defaults>
</compile_context>

<pallas_src>
import math

import jax
import jax.numpy as jnp
from jax import lax
from jax.experimental import pallas as pl
from jax.experimental.pallas import tpu as pltpu


def _round_up(v, m):
    return ((v + m - 1) // m) * m


# ---------------------------------------------------------------------------
# Fused Pallas kernel: encode + 3 attention blocks (flash-streamed) + heads
# ---------------------------------------------------------------------------
def _make_fused_kernel(n_blocks, tile_j, n_real):
    def kernel(enc_in_ref, cond_ref, batch_ref,
               wenc_ref, wqkv_ref, bqkv_ref,
               wnode_ref, wg1_ref, wg2_ref, bias_ref,
               node_out_ref, glob_out_ref,
               k_scr, v_scr, m_scr, l_scr, acc_scr):
        f32 = jnp.float32
        bf16 = jnp.bfloat16
        n_pad, hp = cond_ref.shape
        num_tiles = n_pad // tile_j

        # ---- fused input encoding: h = [coord|attr|t|0] @ Wenc + (bias+condition) ----
        h = (jnp.dot(enc_in_ref[...], wenc_ref[...], preferred_element_type=f32)
             + cond_ref[...])                                           # (n_pad, hp)

        # ---- 3x equivariant-attention h updates, streamed over key tiles ----
        for blk in range(n_blocks):
            # fused Q/K/V; 1/sqrt(H) already folded into the Q segment.
            qkv = (jnp.dot(h, wqkv_ref[blk], preferred_element_type=f32)
                   + bqkv_ref[blk:blk + 1, :])                          # (n_pad, 3*hp)
            q_bf = qkv[:, 0:hp].astype(bf16)                            # lane-aligned slice
            k_scr[...] = qkv[:, hp:2 * hp].astype(bf16)
            v_scr[...] = qkv[:, 2 * hp:3 * hp].astype(bf16)

            m_scr[...] = jnp.full_like(m_scr, -1e30)
            l_scr[...] = jnp.zeros_like(l_scr)
            acc_scr[...] = jnp.zeros_like(acc_scr)

            @pl.loop(0, num_tiles)
            def _(jt):
                j0 = pl.multiple_of(jt * tile_j, tile_j)
                k_t = k_scr[pl.ds(j0, tile_j), :]                       # (tile_j, hp) bf16
                v_t = v_scr[pl.ds(j0, tile_j), :]
                # scores for this key tile (bf16 operands, f32 accumulate)
                s = lax.dot_general(q_bf, k_t, (((1,), (1,)), ((), ())),
                                    preferred_element_type=f32)         # (n_pad, tile_j)
                # mask padded key columns (additive, stays finite -> exp underflows to 0)
                lane = lax.broadcasted_iota(jnp.int32, (1, tile_j), 1) + j0
                s = s + jnp.where(lane < n_real,
                                  jnp.float32(0.0), jnp.float32(-1e30))
                # online softmax update
                m_prev = m_scr[...]
                m_new = jnp.maximum(m_prev, jnp.max(s, axis=-1, keepdims=True))
                alpha = jnp.exp(m_prev - m_new)
                p = jnp.exp(s - m_new)
                l_scr[...] = alpha * l_scr[...] + jnp.sum(p, axis=-1, keepdims=True)
                acc_scr[...] = alpha * acc_scr[...] + jnp.dot(
                    p.astype(bf16), v_t, preferred_element_type=f32)
                m_scr[...] = m_new

            h = h + acc_scr[...] * pl.reciprocal(l_scr[...], approx=True)

        # ---- output heads (lane-dense packed slabs) ----
        node_w = node_out_ref.shape[1]
        node_out_ref[...] = (jnp.dot(h, wnode_ref[...], preferred_element_type=f32)
                             + bias_ref[0:1, 0:node_w])                 # [coord|attr|0]

        # scatter_mean pooling via a normalized one-hot matmul built in-kernel
        g = glob_out_ref.shape[0]
        glob_w = glob_out_ref.shape[1]
        seg = batch_ref[...]                                            # (1, n_pad) int32
        gids = lax.broadcasted_iota(jnp.int32, (g, n_pad), 0)           # (g, n_pad)
        onehot = (seg == gids).astype(f32)                              # padded cols -> 0
        counts = jnp.maximum(jnp.sum(onehot, axis=-1, keepdims=True), 1.0)
        h_graph = jnp.dot(onehot / counts, h, preferred_element_type=f32)
        g1 = jnp.maximum(jnp.dot(h_graph, wg1_ref[...], preferred_element_type=f32)
                         + bias_ref[1:2, 0:hp], 0.0)
        glob_out_ref[...] = (jnp.dot(g1, wg2_ref[...], preferred_element_type=f32)
                             + bias_ref[2:3, 0:glob_w])

    return kernel


# ---------------------------------------------------------------------------
# Parameter init (deterministic, PyTorch nn.Linear-style uniform)
# ---------------------------------------------------------------------------
def init_params(key, node_attr_dim, global_dim, hidden_dim):
    keys = iter(jax.random.split(key, 64))

    def lin(fan_in, fan_out):
        kw, kb = jax.random.split(next(keys))
        bound = 1.0 / math.sqrt(fan_in)
        w = jax.random.uniform(kw, (fan_in, fan_out), jnp.float32, -bound, bound)
        b = jax.random.uniform(kb, (1, fan_out), jnp.float32, -bound, bound)
        return w, b

    params = {
        "coord_enc": lin(2, hidden_dim),
        "attr_enc": lin(node_attr_dim, hidden_dim),
        "time_proj": lin(1, hidden_dim),
        "blocks": [],
        "coord_out": lin(hidden_dim, 2),
        "attr_out": lin(hidden_dim, node_attr_dim),
        "g1": lin(hidden_dim, hidden_dim),
        "g2": lin(hidden_dim, global_dim),
    }
    for _ in range(3):
        params["blocks"].append({
            "q": lin(hidden_dim, hidden_dim),
            "k": lin(hidden_dim, hidden_dim),
            "v": lin(hidden_dim, hidden_dim),
            "e1": lin(2, hidden_dim),      # edge / coord MLP params: dead w.r.t. outputs,
            "e2": lin(hidden_dim, hidden_dim),  # kept so the pure-JAX reference mirrors the
            "cm": lin(hidden_dim, 1),      # torch module exactly.
        })
    return params


# ---------------------------------------------------------------------------
# Forward pass: one fused pallas_call
# ---------------------------------------------------------------------------
def decoder_forward_pallas(params, theta_coord, theta_attr, theta_global, t,
                           condition, batch, num_graphs, *, tile_j=None):
    del theta_global  # unused in the reference forward()
    f32 = jnp.float32
    N, H = condition.shape
    A = theta_attr.shape[1]
    G = int(num_graphs)
    Gd = params["g2"][0].shape[1]

    # --- generation-aware VMEM budget / key-tile size ---
    try:
        vmem_cap = int(getattr(pltpu.get_tpu_info(), "vmem_capacity_bytes",
                               64 * 1024 * 1024))
    except Exception:  # pragma: no cover - conservative fallback
        vmem_cap = 64 * 1024 * 1024
    vmem_limit = (vmem_cap * 3) // 4
    if tile_j is None:
        tile_j = 256 if vmem_cap >= 96 * 1024 * 1024 else 128  # v5e/v6e vs v7x

    n128 = _round_up(max(N, 1), 128)
    tile_eff = max(128, min((tile_j // 128) * 128, n128))
    N_pad = _round_up(N, tile_eff)
    H_pad = _round_up(H, 128)
    node_pad = _round_up(2 + A, 128)
    glob_pad = _round_up(Gd, 128)
    bias_w = max(node_pad, H_pad, glob_pad)

    def pad2(a, rows, cols):
        a = a.astype(f32)
        return jnp.pad(a, ((0, rows - a.shape[0]), (0, cols - a.shape[1])))

    # --- fused encoder input [coord|attr|t|0] and weight [Wc;Wa;Wt;0]; bias -> condition ---
    Wc, bc = params["coord_enc"]
    Wa, ba = params["attr_enc"]
    Wt, bt = params["time_proj"]
    k_pad = _round_up(2 + A + 1, 8)
    enc_in = pad2(jnp.concatenate([theta_coord, theta_attr, t], axis=1), N_pad, k_pad)
    W_enc = pad2(jnp.concatenate([Wc, Wa, Wt], axis=0), k_pad, H_pad)
    cond_pb = pad2(condition.astype(f32) + (bc + ba + bt), N_pad, H_pad)

    # --- per-block fused Q/K/V, each segment padded to a full 128-lane slab ---
    scale = 1.0 / math.sqrt(H)
    wqkv_l, bqkv_l = [], []
    for blk in params["blocks"]:
        Wq, bq = blk["q"]
        Wk, bk = blk["k"]
        Wv, bv = blk["v"]
        wqkv_l.append(jnp.concatenate(
            [pad2(Wq * scale, H_pad, H_pad), pad2(Wk, H_pad, H_pad),
             pad2(Wv, H_pad, H_pad)], axis=1))
        bqkv_l.append(jnp.concatenate(
            [pad2(bq * scale, 1, H_pad), pad2(bk, 1, H_pad),
             pad2(bv, 1, H_pad)], axis=1)[0])
    Wqkv = jnp.stack(wqkv_l)                                            # (3, H_pad, 3*H_pad)
    bqkv = jnp.stack(bqkv_l)                                            # (3, 3*H_pad)

    # --- packed, lane-dense head weights / biases ---
    Wco, bco = params["coord_out"]
    Wat, bat = params["attr_out"]
    Wg1, bg1 = params["g1"]
    Wg2, bg2 = params["g2"]
    W_node = pad2(jnp.concatenate([Wco, Wat], axis=1), H_pad, node_pad)
    W_g1 = pad2(Wg1, H_pad, H_pad)
    W_g2 = pad2(Wg2, H_pad, glob_pad)
    bias_pack = jnp.stack([
        pad2(jnp.concatenate([bco, bat], axis=1), 1, bias_w)[0],
        pad2(bg1, 1, bias_w)[0],
        pad2(bg2, 1, bias_w)[0],
    ])                                                                  # (3, bias_w)

    # padded node rows get a sentinel graph id (== G) so they never enter the pooling
    batch2d = jnp.pad(batch.astype(jnp.int32), (0, N_pad - N),
                      constant_values=G).reshape(1, N_pad)

    vmem = pl.BlockSpec(memory_space=pltpu.MemorySpace.VMEM)
    kernel = _make_fused_kernel(len(params["blocks"]), tile_eff, N)

    node_out, glob_out = pl.pallas_call(
        kernel,
        out_shape=(jax.ShapeDtypeStruct((N_pad, node_pad), f32),
                   jax.ShapeDtypeStruct((G, glob_pad), f32)),
        in_specs=[vmem] * 10,
        out_specs=(vmem, vmem),
        scratch_shapes=[
            pltpu.VMEM((N_pad, H_pad), jnp.bfloat16),   # K (bf16 MXU operand)
            pltpu.VMEM((N_pad, H_pad), jnp.bfloat16),   # V (bf16 MXU operand)
            pltpu.VMEM((N_pad, 1), f32),                # running softmax max m
            pltpu.VMEM((N_pad, 1), f32),                # running softmax denom l
            pltpu.VMEM((N_pad, H_pad), f32),            # running weighted-V accumulator
        ],
        compiler_params=pltpu.CompilerParams(vmem_limit_bytes=vmem_limit),
    )(enc_in, cond_pb, batch2d, W_enc, Wqkv, bqkv,
      W_node, W_g1, W_g2, bias_pack)

    coord_pred = node_out[:N, 0:2]
    attr_pred = node_out[:N, 2:2 + A]
    global_pred = glob_out[:, :Gd]
    return coord_pred, attr_pred, global_pred


# ---------------------------------------------------------------------------
# Pure-JAX reference (mirrors the PyTorch forward exactly, incl. the x branch)
# ---------------------------------------------------------------------------
def _lin(x, wb):
    w, b = wb
    return x @ w + b


def reference_forward(params, theta_coord, theta_attr, t, condition, batch, num_graphs):
    h = (_lin(theta_coord, params["coord_enc"]) + _lin(theta_attr, params["attr_enc"])
         + condition + _lin(t, params["time_proj"]))
    x = theta_coord
    H = h.shape[-1]
    for blk in params["blocks"]:
        # NOTE: the x / edge-MLP branch is computed here to mirror the torch module,
        # but it never influences h or the returned tensors.
        rel_x = x[:, None, :] - x[None, :, :]
        edge_feat = jnp.maximum(rel_x @ blk["e1"][0] + blk["e1"][1], 0.0) @ blk["e2"][0] + blk["e2"][1]
        q = _lin(h, blk["q"])[:, None, :]
        k = _lin(h, blk["k"])[None, :, :]
        attn_score = (q * k).sum(-1) / (H ** 0.5)
        attn = jax.nn.softmax(attn_score, axis=-1)
        v = _lin(h, blk["v"])
        agg_h = attn @ v
        delta_x = (edge_feat @ blk["cm"][0] + blk["cm"][1]) * rel_x
        delta_x = jnp.sum(attn[:, :, None] * delta_x, axis=1)
        h = h + agg_h
        x = x + delta_x
    coord_pred = _lin(h, params["coord_out"])
    attr_pred = _lin(h, params["attr_out"])
    G = int(num_graphs)
    seg_sum = jax.ops.segment_sum(h, batch, num_segments=G)
    counts = jax.ops.segment_sum(jnp.ones((h.shape[0],), jnp.float32), batch, num_segments=G)
    h_graph = seg_sum / jnp.maximum(counts, 1.0)[:, None]
    global_pred = _lin(jnp.maximum(_lin(h_graph, params["g1"]), 0.0), params["g2"])
    return coord_pred, attr_pred, global_pred


# ---------------------------------------------------------------------------
if __name__ == "__main__":
    node_attr_dim, global_dim, hidden_dim = 4, 3, 32
    N, num_graphs = 8, 2

    key = jax.random.PRNGKey(0)
    pkey, dkey = jax.random.split(key)
    params = init_params(pkey, node_attr_dim, global_dim, hidden_dim)

    k1, k2, k3, k4, k5 = jax.random.split(dkey, 5)
    theta_coord = jax.random.normal(k1, (N, 2), jnp.float32)
    theta_attr = jax.random.normal(k2, (N, node_attr_dim), jnp.float32)
    theta_global = jax.random.normal(k3, (num_graphs, global_dim), jnp.float32)  # unused
    t = jax.random.uniform(k4, (N, 1), jnp.float32)
    condition = jax.random.normal(k5, (N, hidden_dim), jnp.float32)  # already-encoded cond
    batch = jnp.array([0, 0, 0, 0, 1, 1, 1, 1], dtype=jnp.int32)

    coord_pred, attr_pred, global_pred = decoder_forward_pallas(
        params, theta_coord, theta_attr, theta_global, t, condition, batch, num_graphs)
    jax.block_until_ready((coord_pred, attr_pred, global_pred))

    rc, ra, rg = reference_forward(params, theta_coord, theta_attr, t, condition, batch,
                                   num_graphs)

    assert coord_pred.shape == (N, 2)
    assert attr_pred.shape == (N, node_attr_dim)
    assert global_pred.shape == (num_graphs, global_dim)
    # 3e-2 tolerance: bf16 operands on the two O(N^2) attention matmuls (f32 accumulate)
    # plus the approx softmax reciprocal compound over 3 blocks.
    assert jnp.allclose(coord_pred, rc, atol=3e-2, rtol=3e-2)
    assert jnp.allclose(attr_pred, ra, atol=3e-2, rtol=3e-2)
    assert jnp.allclose(global_pred, rg, atol=3e-2, rtol=3e-2)

    print("KERNEL_OK")
</pallas_src>

<mosaic_0001>
module attributes {stable_mosaic.version = 11 : i64} {
  func.func @kernel(%arg0: memref<128x8xf32, #tpu.memory_space<vmem>>, %arg1: memref<128x128xf32, #tpu.memory_space<vmem>>, %arg2: memref<1x128xi32, #tpu.memory_space<vmem>>, %arg3: memref<8x128xf32, #tpu.memory_space<vmem>>, %arg4: memref<3x128x384xf32, #tpu.memory_space<vmem>>, %arg5: memref<3x384xf32, #tpu.memory_space<vmem>>, %arg6: memref<128x128xf32, #tpu.memory_space<vmem>>, %arg7: memref<128x128xf32, #tpu.memory_space<vmem>>, %arg8: memref<128x128xf32, #tpu.memory_space<vmem>>, %arg9: memref<3x128xf32, #tpu.memory_space<vmem>>, %arg10: memref<128x128xf32, #tpu.memory_space<vmem>>, %arg11: memref<2x128xf32, #tpu.memory_space<vmem>>, %arg12: memref<128x128xbf16, #tpu.memory_space<vmem>>, %arg13: memref<128x128xbf16, #tpu.memory_space<vmem>>, %arg14: memref<128x1xf32, #tpu.memory_space<vmem>>, %arg15: memref<128x1xf32, #tpu.memory_space<vmem>>, %arg16: memref<128x128xf32, #tpu.memory_space<vmem>>) attributes {dimension_semantics = [], scalar_prefetch = 0 : i64, scratch_operands = 5 : i64, tpu.core_type = #tpu.core_type<tc>} {
    %c0 = arith.constant 0 : index
    %c0_0 = arith.constant 0 : index
    %0 = vector.load %arg0[%c0, %c0_0] : memref<128x8xf32, #tpu.memory_space<vmem>>, vector<128x8xf32>
    %c0_1 = arith.constant 0 : index
    %c0_2 = arith.constant 0 : index
    %1 = vector.load %arg3[%c0_1, %c0_2] : memref<8x128xf32, #tpu.memory_space<vmem>>, vector<8x128xf32>
    %cst = arith.constant dense<0.000000e+00> : vector<128x128xf32>
    %2 = tpu.matmul %0, %1, %cst {dimension_numbers = #tpu.dot_dimension_numbers<[1], [0], [0], [1], [0, 0, 1, 1], [], []>} : vector<128x8xf32>, vector<8x128xf32>, vector<128x128xf32> -> vector<128x128xf32>
    %c0_3 = arith.constant 0 : index
    %c0_4 = arith.constant 0 : index
    %3 = vector.load %arg1[%c0_3, %c0_4] : memref<128x128xf32, #tpu.memory_space<vmem>>, vector<128x128xf32>
    %4 = arith.addf %2, %3 : vector<128x128xf32>
    %c0_5 = arith.constant 0 : index
    %c0_6 = arith.constant 0 : index
    %c0_7 = arith.constant 0 : index
    %5 = vector.load %arg4[%c0_5, %c0_6, %c0_7] : memref<3x128x384xf32, #tpu.memory_space<vmem>>, vector<1x128x384xf32>
    %6 = vector.shape_cast %5 : vector<1x128x384xf32> to vector<128x384xf32>
    %cst_8 = arith.constant dense<0.000000e+00> : vector<128x384xf32>
    %7 = tpu.matmul %4, %6, %cst_8 {dimension_numbers = #tpu.dot_dimension_numbers<[1], [0], [0], [1], [0, 0, 1, 1], [], []>} : vector<128x128xf32>, vector<128x384xf32>, vector<128x384xf32> -> vector<128x384xf32>
    %c0_9 = arith.constant 0 : index
    %c0_10 = arith.constant 0 : index
    %8 = vector.load %arg5[%c0_9, %c0_10] : memref<3x384xf32, #tpu.memory_space<vmem>>, vector<1x384xf32>
    %9 = vector.broadcast %8 : vector<1x384xf32> to vector<128x384xf32>
    %10 = arith.addf %7, %9 : vector<128x384xf32>
    %11 = vector.extract_strided_slice %10 {offsets = [0, 0], sizes = [128, 128], strides = [1, 1]} : vector<128x384xf32> to vector<128x128xf32>
    %12 = arith.truncf %11 : vector<128x128xf32> to vector<128x128xbf16>
    %13 = vector.extract_strided_slice %10 {offsets = [0, 128], sizes = [128, 128], strides = [1, 1]} : vector<128x384xf32> to vector<128x128xf32>
    %14 = arith.truncf %13 : vector<128x128xf32> to vector<128x128xbf16>
    %c0_11 = arith.constant 0 : index
    %c0_12 = arith.constant 0 : index
    %15 = vector.load %arg12[%c0_11, %c0_12] : memref<128x128xbf16, #tpu.memory_space<vmem>>, vector<128x128xbf16>
    tpu.vector_store %arg12[%c0_11, %c0_12], %14 {strides = array<i32>} : memref<128x128xbf16, #tpu.memory_space<vmem>>, vector<128x128xbf16>,
    %16 = vector.extract_strided_slice %10 {offsets = [0, 256], sizes = [128, 128], strides = [1, 1]} : vector<128x384xf32> to vector<128x128xf32>
    %17 = arith.truncf %16 : vector<128x128xf32> to vector<128x128xbf16>
    %c0_13 = arith.constant 0 : index
    %c0_14 = arith.constant 0 : index
    %18 = vector.load %arg13[%c0_13, %c0_14] : memref<128x128xbf16, #tpu.memory_space<vmem>>, vector<128x128xbf16>
    tpu.vector_store %arg13[%c0_13, %c0_14], %17 {strides = array<i32>} : memref<128x128xbf16, #tpu.memory_space<vmem>>, vector<128x128xbf16>,
    %cst_15 = arith.constant -1.000000e+30 : f32
    %19 = vector.broadcast %cst_15 : f32 to vector<128x1xf32>
    %c0_16 = arith.constant 0 : index
    %c0_17 = arith.constant 0 : index
    %20 = vector.load %arg14[%c0_16, %c0_17] : memref<128x1xf32, #tpu.memory_space<vmem>>, vector<128x1xf32>
    tpu.vector_store %arg14[%c0_16, %c0_17], %19 {strides = array<i32>} : memref<128x1xf32, #tpu.memory_space<vmem>>, vector<128x1xf32>,
    %cst_18 = arith.constant 0.000000e+00 : f32
    %21 = vector.broadcast %cst_18 : f32 to vector<128x1xf32>
    %c0_19 = arith.constant 0 : index
    %c0_20 = arith.constant 0 : index
    %22 = vector.load %arg15[%c0_19, %c0_20] : memref<128x1xf32, #tpu.memory_space<vmem>>, vector<128x1xf32>
    tpu.vector_store %arg15[%c0_19, %c0_20], %21 {strides = array<i32>} : memref<128x1xf32, #tpu.memory_space<vmem>>, vector<128x1xf32>,
    %cst_21 = arith.constant 0.000000e+00 : f32
    %23 = vector.broadcast %cst_21 : f32 to vector<128x128xf32>
    %c0_22 = arith.constant 0 : index
    %c0_23 = arith.constant 0 : index
    %24 = vector.load %arg16[%c0_22, %c0_23] : memref<128x128xf32, #tpu.memory_space<vmem>>, vector<128x128xf32>
    tpu.vector_store %arg16[%c0_22, %c0_23], %23 {strides = array<i32>} : memref<128x128xf32, #tpu.memory_space<vmem>>, vector<128x128xf32>,
    %c0_i32 = arith.constant 0 : i32
    %c1_i32 = arith.constant 1 : i32
    %25 = arith.muli %c0_i32, %c1_i32 : i32
    %c0_i32_24 = arith.constant 0 : i32
    %26 = arith.addi %c0_i32_24, %25 : i32
    %c128_i32 = arith.constant 128 : i32
    %27 = arith.muli %26, %c128_i32 : i32
    %28 = tpu.assume_multiple %27, 128 : i32
    %29 = arith.index_cast %28 : i32 to index
    %c0_25 = arith.constant 0 : index
    %30 = vector.load %arg12[%29, %c0_25] : memref<128x128xbf16, #tpu.memory_space<vmem>>, vector<128x128xbf16>
    %31 = arith.index_cast %28 : i32 to index
    %c0_26 = arith.constant 0 : index
    %32 = vector.load %arg13[%31, %c0_26] : memref<128x128xbf16, #tpu.memory_space<vmem>>, vector<128x128xbf16>
    %cst_27 = arith.constant dense<0.000000e+00> : vector<128x128xf32>
    %33 = tpu.matmul %12, %30, %cst_27 {dimension_numbers = #tpu.dot_dimension_numbers<[1], [1], [0], [0], [0, 0, 1, 0], [], []>} : vector<128x128xbf16>, vector<128x128xbf16>, vector<128x128xf32> -> vector<128x128xf32>
    %34 = tpu.iota {dimensions = array<i32: 1>} : vector<1x128xi32>
    %35 = vector.broadcast %28 : i32 to vector<1x128xi32>
    %36 = arith.addi %34, %35 : vector<1x128xi32>
    %c8_i32 = arith.constant 8 : i32
    %37 = vector.broadcast %c8_i32 : i32 to vector<1x128xi32>
    %38 = arith.cmpi slt, %36, %37 : vector<1x128xi32>
    %cst_28 = arith.constant 0.000000e+00 : f32
    %cst_29 = arith.constant -1.000000e+30 : f32
    %39 = vector.broadcast %cst_28 : f32 to vector<1x128xf32>
    %40 = vector.broadcast %cst_29 : f32 to vector<1x128xf32>
    %41 = arith.select %38, %39, %40 : vector<1x128xi1>, vector<1x128xf32>
    %42 = vector.broadcast %41 : vector<1x128xf32> to vector<128x128xf32>
    %43 = arith.addf %33, %42 : vector<128x128xf32>
    %c0_30 = arith.constant 0 : index
    %c0_31 = arith.constant 0 : index
    %44 = vector.load %arg14[%c0_30, %c0_31] : memref<128x1xf32, #tpu.memory_space<vmem>>, vector<128x1xf32>
    %cst_32 = arith.constant dense<0xFF800000> : vector<128xf32>
    %45 = vector.multi_reduction <maximumf>, %43, %cst_32 [1] : vector<128x128xf32> to vector<128xf32>
    %46 = vector.shape_cast %45 : vector<128xf32> to vector<128x1xf32>
    %47 = arith.maximumf %44, %46 : vector<128x1xf32>
    %48 = arith.subf %44, %47 : vector<128x1xf32>
    %49 = math.exp %48 : vector<128x1xf32>
    %50 = vector.broadcast %47 : vector<128x1xf32> to vector<128x128xf32>
    %51 = arith.subf %43, %50 : vector<128x128xf32>
    %52 = math.exp %51 : vector<128x128xf32>
    %c0_33 = arith.constant 0 : index
    %c0_34 = arith.constant 0 : index
    %53 = vector.load %arg15[%c0_33, %c0_34] : memref<128x1xf32, #tpu.memory_space<vmem>>, vector<128x1xf32>
    %54 = arith.mulf %49, %53 : vector<128x1xf32>
    %cst_35 = arith.constant dense<0.000000e+00> : vector<128xf32>
    %55 = vector.multi_reduction <add>, %52, %cst_35 [1] : vector<128x128xf32> to vector<128xf32>
    %56 = vector.shape_cast %55 : vector<128xf32> to vector<128x1xf32>
    %57 = arith.addf %54, %56 : vector<128x1xf32>
    %c0_36 = arith.constant 0 : index
    %c0_37 = arith.constant 0 : index
    %58 = vector.load %arg15[%c0_36, %c0_37] : memref<128x1xf32, #tpu.memory_space<vmem>>, vector<128x1xf32>
    tpu.vector_store %arg15[%c0_36, %c0_37], %57 {strides = array<i32>} : memref<128x1xf32, #tpu.memory_space<vmem>>, vector<128x1xf32>,
    %c0_38 = arith.constant 0 : index
    %c0_39 = arith.constant 0 : index
    %59 = vector.load %arg16[%c0_38, %c0_39] : memref<128x128xf32, #tpu.memory_space<vmem>>, vector<128x128xf32>
    %60 = vector.broadcast %49 : vector<128x1xf32> to vector<128x128xf32>
    %61 = arith.mulf %60, %59 : vector<128x128xf32>
    %62 = arith.truncf %52 : vector<128x128xf32> to vector<128x128xbf16>
    %cst_40 = arith.constant dense<0.000000e+00> : vector<128x128xf32>
    %63 = tpu.matmul %62, %32, %cst_40 {dimension_numbers = #tpu.dot_dimension_numbers<[1], [0], [0], [1], [0, 0, 1, 1], [], []>} : vector<128x128xbf16>, vector<128x128xbf16>, vector<128x128xf32> -> vector<128x128xf32>
    %64 = arith.addf %61, %63 : vector<128x128xf32>
    %c0_41 = arith.constant 0 : index
    %c0_42 = arith.constant 0 : index
    %65 = vector.load %arg16[%c0_41, %c0_42] : memref<128x128xf32, #tpu.memory_space<vmem>>, vector<128x128xf32>
    tpu.vector_store %arg16[%c0_41, %c0_42], %64 {strides = array<i32>} : memref<128x128xf32, #tpu.memory_space<vmem>>, vector<128x128xf32>,
    %c0_43 = arith.constant 0 : index
    %c0_44 = arith.constant 0 : index
    %66 = vector.load %arg14[%c0_43, %c0_44] : memref<128x1xf32, #tpu.memory_space<vmem>>, vector<128x1xf32>
    tpu.vector_store %arg14[%c0_43, %c0_44], %47 {strides = array<i32>} : memref<128x1xf32, #tpu.memory_space<vmem>>, vector<128x1xf32>,
    %c1_i32_45 = arith.constant 1 : i32
    %c0_46 = arith.constant 0 : index
    %c0_47 = arith.constant 0 : index
    %67 = vector.load %arg16[%c0_46, %c0_47] : memref<128x128xf32, #tpu.memory_space<vmem>>, vector<128x128xf32>
    %c0_48 = arith.constant 0 : index
    %c0_49 = arith.constant 0 : index
    %68 = vector.load %arg15[%c0_48, %c0_49] : memref<128x1xf32, #tpu.memory_space<vmem>>, vector<128x1xf32>
    %69 = tpu.reciprocal %68 {approx = true} : vector<128x1xf32> -> vector<128x1xf32>
    %70 = vector.broadcast %69 : vector<128x1xf32> to vector<128x128xf32>
    %71 = arith.mulf %67, %70 : vector<128x128xf32>
    %72 = arith.addf %4, %71 : vector<128x128xf32>
    %c1 = arith.constant 1 : index
    %c0_50 = arith.constant 0 : index
    %c0_51 = arith.constant 0 : index
    %73 = vector.load %arg4[%c1, %c0_50, %c0_51] : memref<3x128x384xf32, #tpu.memory_space<vmem>>, vector<1x128x384xf32>
    %74 = vector.shape_cast %73 : vector<1x128x384xf32> to vector<128x384xf32>
    %cst_52 = arith.constant dense<0.000000e+00> : vector<128x384xf32>
    %75 = tpu.matmul %72, %74, %cst_52 {dimension_numbers = #tpu.dot_dimension_numbers<[1], [0], [0], [1], [0, 0, 1, 1], [], []>} : vector<128x128xf32>, vector<128x384xf32>, vector<128x384xf32> -> vector<128x384xf32>
    %c1_53 = arith.constant 1 : index
    %c0_54 = arith.constant 0 : index
    %76 = vector.load %arg5[%c1_53, %c0_54] : memref<3x384xf32, #tpu.memory_space<vmem>>, vector<1x384xf32>
    %77 = vector.broadcast %76 : vector<1x384xf32> to vector<128x384xf32>
    %78 = arith.addf %75, %77 : vector<128x384xf32>
    %79 = vector.extract_strided_slice %78 {offsets = [0, 0], sizes = [128, 128], strides = [1, 1]} : vector<128x384xf32> to vector<128x128xf32>
    %80 = arith.truncf %79 : vector<128x128xf32> to vector<128x128xbf16>
    %81 = vector.extract_strided_slice %78 {offsets = [0, 128], sizes = [128, 128], strides = [1, 1]} : vector<128x384xf32> to vector<128x128xf32>
    %82 = arith.truncf %81 : vector<128x128xf32> to vector<128x128xbf16>
    %c0_55 = arith.constant 0 : index
    %c0_56 = arith.constant 0 : index
    %83 = vector.load %arg12[%c0_55, %c0_56] : memref<128x128xbf16, #tpu.memory_space<vmem>>, vector<128x128xbf16>
    tpu.vector_store %arg12[%c0_55, %c0_56], %82 {strides = array<i32>} : memref<128x128xbf16, #tpu.memory_space<vmem>>, vector<128x128xbf16>,
    %84 = vector.extract_strided_slice %78 {offsets = [0, 256], sizes = [128, 128], strides = [1, 1]} : vector<128x384xf32> to vector<128x128xf32>
    %85 = arith.truncf %84 : vector<128x128xf32> to vector<128x128xbf16>
    %c0_57 = arith.constant 0 : index
    %c0_58 = arith.constant 0 : index
    %86 = vector.load %arg13[%c0_57, %c0_58] : memref<128x128xbf16, #tpu.memory_space<vmem>>, vector<128x128xbf16>
    tpu.vector_store %arg13[%c0_57, %c0_58], %85 {strides = array<i32>} : memref<128x128xbf16, #tpu.memory_space<vmem>>, vector<128x128xbf16>,
    %cst_59 = arith.constant -1.000000e+30 : f32
    %87 = vector.broadcast %cst_59 : f32 to vector<128x1xf32>
    %c0_60 = arith.constant 0 : index
    %c0_61 = arith.constant 0 : index
    %88 = vector.load %arg14[%c0_60, %c0_61] : memref<128x1xf32, #tpu.memory_space<vmem>>, vector<128x1xf32>
    tpu.vector_store %arg14[%c0_60, %c0_61], %87 {strides = array<i32>} : memref<128x1xf32, #tpu.memory_space<vmem>>, vector<128x1xf32>,
    %cst_62 = arith.constant 0.000000e+00 : f32
    %89 = vector.broadcast %cst_62 : f32 to vector<128x1xf32>
    %c0_63 = arith.constant 0 : index
    %c0_64 = arith.constant 0 : index
    %90 = vector.load %arg15[%c0_63, %c0_64] : memref<128x1xf32, #tpu.memory_space<vmem>>, vector<128x1xf32>
    tpu.vector_store %arg15[%c0_63, %c0_64], %89 {strides = array<i32>} : memref<128x1xf32, #tpu.memory_space<vmem>>, vector<128x1xf32>,
    %cst_65 = arith.constant 0.000000e+00 : f32
    %91 = vector.broadcast %cst_65 : f32 to vector<128x128xf32>
    %c0_66 = arith.constant 0 : index
    %c0_67 = arith.constant 0 : index
    %92 = vector.load %arg16[%c0_66, %c0_67] : memref<128x128xf32, #tpu.memory_space<vmem>>, vector<128x128xf32>
    tpu.vector_store %arg16[%c0_66, %c0_67], %91 {strides = array<i32>} : memref<128x128xf32, #tpu.memory_space<vmem>>, vector<128x128xf32>,
    %c0_i32_68 = arith.constant 0 : i32
    %c1_i32_69 = arith.constant 1 : i32
    %93 = arith.muli %c0_i32_68, %c1_i32_69 : i32
    %c0_i32_70 = arith.constant 0 : i32
    %94 = arith.addi %c0_i32_70, %93 : i32
    %c128_i32_71 = arith.constant 128 : i32
    %95 = arith.muli %94, %c128_i32_71 : i32
    %96 = tpu.assume_multiple %95, 128 : i32
    %97 = arith.index_cast %96 : i32 to index
    %c0_72 = arith.constant 0 : index
    %98 = vector.load %arg12[%97, %c0_72] : memref<128x128xbf16, #tpu.memory_space<vmem>>, vector<128x128xbf16>
    %99 = arith.index_cast %96 : i32 to index
    %c0_73 = arith.constant 0 : index
    %100 = vector.load %arg13[%99, %c0_73] : memref<128x128xbf16, #tpu.memory_space<vmem>>, vector<128x128xbf16>
    %cst_74 = arith.constant dense<0.000000e+00> : vector<128x128xf32>
    %101 = tpu.matmul %80, %98, %cst_74 {dimension_numbers = #tpu.dot_dimension_numbers<[1], [1], [0], [0], [0, 0, 1, 0], [], []>} : vector<128x128xbf16>, vector<128x128xbf16>, vector<128x128xf32> -> vector<128x128xf32>
    %102 = tpu.iota {dimensions = array<i32: 1>} : vector<1x128xi32>
    %103 = vector.broadcast %96 : i32 to vector<1x128xi32>
    %104 = arith.addi %102, %103 : vector<1x128xi32>
    %c8_i32_75 = arith.constant 8 : i32
    %105 = vector.broadcast %c8_i32_75 : i32 to vector<1x128xi32>
    %106 = arith.cmpi slt, %104, %105 : vector<1x128xi32>
    %cst_76 = arith.constant 0.000000e+00 : f32
    %cst_77 = arith.constant -1.000000e+30 : f32
    %107 = vector.broadcast %cst_76 : f32 to vector<1x128xf32>
    %108 = vector.broadcast %cst_77 : f32 to vector<1x128xf32>
    %109 = arith.select %106, %107, %108 : vector<1x128xi1>, vector<1x128xf32>
    %110 = vector.broadcast %109 : vector<1x128xf32> to vector<128x128xf32>
    %111 = arith.addf %101, %110 : vector<128x128xf32>
    %c0_78 = arith.constant 0 : index
    %c0_79 = arith.constant 0 : index
    %112 = vector.load %arg14[%c0_78, %c0_79] : memref<128x1xf32, #tpu.memory_space<vmem>>, vector<128x1xf32>
    %cst_80 = arith.constant dense<0xFF800000> : vector<128xf32>
    %113 = vector.multi_reduction <maximumf>, %111, %cst_80 [1] : vector<128x128xf32> to vector<128xf32>
    %114 = vector.shape_cast %113 : vector<128xf32> to vector<128x1xf32>
    %115 = arith.maximumf %112, %114 : vector<128x1xf32>
    %116 = arith.subf %112, %115 : vector<128x1xf32>
    %117 = math.exp %116 : vector<128x1xf32>
    %118 = vector.broadcast %115 : vector<128x1xf32> to vector<128x128xf32>
    %119 = arith.subf %111, %118 : vector<128x128xf32>
    %120 = math.exp %119 : vector<128x128xf32>
    %c0_81 = arith.constant 0 : index
    %c0_82 = arith.constant 0 : index
    %121 = vector.load %arg15[%c0_81, %c0_82] : memref<128x1xf32, #tpu.memory_space<vmem>>, vector<128x1xf32>
    %122 = arith.mulf %117, %121 : vector<128x1xf32>
    %cst_83 = arith.constant dense<0.000000e+00> : vector<128xf32>
    %123 = vector.multi_reduction <add>, %120, %cst_83 [1] : vector<128x128xf32> to vector<128xf32>
    %124 = vector.shape_cast %123 : vector<128xf32> to vector<128x1xf32>
    %125 = arith.addf %122, %124 : vector<128x1xf32>
    %c0_84 = arith.constant 0 : index
    %c0_85 = arith.constant 0 : index
    %126 = vector.load %arg15[%c0_84, %c0_85] : memref<128x1xf32, #tpu.memory_space<vmem>>, vector<128x1xf32>
    tpu.vector_store %arg15[%c0_84, %c0_85], %125 {strides = array<i32>} : memref<128x1xf32, #tpu.memory_space<vmem>>, vector<128x1xf32>,
    %c0_86 = arith.constant 0 : index
    %c0_87 = arith.constant 0 : index
    %127 = vector.load %arg16[%c0_86, %c0_87] : memref<128x128xf32, #tpu.memory_space<vmem>>, vector<128x128xf32>
    %128 = vector.broadcast %117 : vector<128x1xf32> to vector<128x128xf32>
    %129 = arith.mulf %128, %127 : vector<128x128xf32>
    %130 = arith.truncf %120 : vector<128x128xf32> to vector<128x128xbf16>
    %cst_88 = arith.constant dense<0.000000e+00> : vector<128x128xf32>
    %131 = tpu.matmul %130, %100, %cst_88 {dimension_numbers = #tpu.dot_dimension_numbers<[1], [0], [0], [1], [0, 0, 1, 1], [], []>} : vector<128x128xbf16>, vector<128x128xbf16>, vector<128x128xf32> -> vector<128x128xf32>
    %132 = arith.addf %129, %131 : vector<128x128xf32>
    %c0_89 = arith.constant 0 : index
    %c0_90 = arith.constant 0 : index
    %133 = vector.load %arg16[%c0_89, %c0_90] : memref<128x128xf32, #tpu.memory_space<vmem>>, vector<128x128xf32>
    tpu.vector_store %arg16[%c0_89, %c0_90], %132 {strides = array<i32>} : memref<128x128xf32, #tpu.memory_space<vmem>>, vector<128x128xf32>,
    %c0_91 = arith.constant 0 : index
    %c0_92 = arith.constant 0 : index
    %134 = vector.load %arg14[%c0_91, %c0_92] : memref<128x1xf32, #tpu.memory_space<vmem>>, vector<128x1xf32>
    tpu.vector_store %arg14[%c0_91, %c0_92], %115 {strides = array<i32>} : memref<128x1xf32, #tpu.memory_space<vmem>>, vector<128x1xf32>,
    %c1_i32_93 = arith.constant 1 : i32
    %c0_94 = arith.constant 0 : index
    %c0_95 = arith.constant 0 : index
    %135 = vector.load %arg16[%c0_94, %c0_95] : memref<128x128xf32, #tpu.memory_space<vmem>>, vector<128x128xf32>
    %c0_96 = arith.constant 0 : index
    %c0_97 = arith.constant 0 : index
    %136 = vector.load %arg15[%c0_96, %c0_97] : memref<128x1xf32, #tpu.memory_space<vmem>>, vector<128x1xf32>
    %137 = tpu.reciprocal %136 {approx = true} : vector<128x1xf32> -> vector<128x1xf32>
    %138 = vector.broadcast %137 : vector<128x1xf32> to vector<128x128xf32>
    %139 = arith.mulf %135, %138 : vector<128x128xf32>
    %140 = arith.addf %72, %139 : vector<128x128xf32>
    %c2 = arith.constant 2 : index
    %c0_98 = arith.constant 0 : index
    %c0_99 = arith.constant 0 : index
    %141 = vector.load %arg4[%c2, %c0_98, %c0_99] : memref<3x128x384xf32, #tpu.memory_space<vmem>>, vector<1x128x384xf32>
    %142 = vector.shape_cast %141 : vector<1x128x384xf32> to vector<128x384xf32>
    %cst_100 = arith.constant dense<0.000000e+00> : vector<128x384xf32>
    %143 = tpu.matmul %140, %142, %cst_100 {dimension_numbers = #tpu.dot_dimension_numbers<[1], [0], [0], [1], [0, 0, 1, 1], [], []>} : vector<128x128xf32>, vector<128x384xf32>, vector<128x384xf32> -> vector<128x384xf32>
    %c2_101 = arith.constant 2 : index
    %c0_102 = arith.constant 0 : index
    %144 = vector.load %arg5[%c2_101, %c0_102] : memref<3x384xf32, #tpu.memory_space<vmem>>, vector<1x384xf32>
    %145 = vector.broadcast %144 : vector<1x384xf32> to vector<128x384xf32>
    %146 = arith.addf %143, %145 : vector<128x384xf32>
    %147 = vector.extract_strided_slice %146 {offsets = [0, 0], sizes = [128, 128], strides = [1, 1]} : vector<128x384xf32> to vector<128x128xf32>
    %148 = arith.truncf %147 : vector<128x128xf32> to vector<128x128xbf16>
    %149 = vector.extract_strided_slice %146 {offsets = [0, 128], sizes = [128, 128], strides = [1, 1]} : vector<128x384xf32> to vector<128x128xf32>
    %150 = arith.truncf %149 : vector<128x128xf32> to vector<128x128xbf16>
    %c0_103 = arith.constant 0 : index
    %c0_104 = arith.constant 0 : index
    %151 = vector.load %arg12[%c0_103, %c0_104] : memref<128x128xbf16, #tpu.memory_space<vmem>>, vector<128x128xbf16>
    tpu.vector_store %arg12[%c0_103, %c0_104], %150 {strides = array<i32>} : memref<128x128xbf16, #tpu.memory_space<vmem>>, vector<128x128xbf16>,
    %152 = vector.extract_strided_slice %146 {offsets = [0, 256], sizes = [128, 128], strides = [1, 1]} : vector<128x384xf32> to vector<128x128xf32>
    %153 = arith.truncf %152 : vector<128x128xf32> to vector<128x128xbf16>
    %c0_105 = arith.constant 0 : index
    %c0_106 = arith.constant 0 : index
    %154 = vector.load %arg13[%c0_105, %c0_106] : memref<128x128xbf16, #tpu.memory_space<vmem>>, vector<128x128xbf16>
    tpu.vector_store %arg13[%c0_105, %c0_106], %153 {strides = array<i32>} : memref<128x128xbf16, #tpu.memory_space<vmem>>, vector<128x128xbf16>,
    %cst_107 = arith.constant -1.000000e+30 : f32
    %155 = vector.broadcast %cst_107 : f32 to vector<128x1xf32>
    %c0_108 = arith.constant 0 : index
    %c0_109 = arith.constant 0 : index
    %156 = vector.load %arg14[%c0_108, %c0_109] : memref<128x1xf32, #tpu.memory_space<vmem>>, vector<128x1xf32>
    tpu.vector_store %arg14[%c0_108, %c0_109], %155 {strides = array<i32>} : memref<128x1xf32, #tpu.memory_space<vmem>>, vector<128x1xf32>,
    %cst_110 = arith.constant 0.000000e+00 : f32
    %157 = vector.broadcast %cst_110 : f32 to vector<128x1xf32>
    %c0_111 = arith.constant 0 : index
    %c0_112 = arith.constant 0 : index
    %158 = vector.load %arg15[%c0_111, %c0_112] : memref<128x1xf32, #tpu.memory_space<vmem>>, vector<128x1xf32>
    tpu.vector_store %arg15[%c0_111, %c0_112], %157 {strides = array<i32>} : memref<128x1xf32, #tpu.memory_space<vmem>>, vector<128x1xf32>,
    %cst_113 = arith.constant 0.000000e+00 : f32
    %159 = vector.broadcast %cst_113 : f32 to vector<128x128xf32>
    %c0_114 = arith.constant 0 : index
    %c0_115 = arith.constant 0 : index
    %160 = vector.load %arg16[%c0_114, %c0_115] : memref<128x128xf32, #tpu.memory_space<vmem>>, vector<128x128xf32>
    tpu.vector_store %arg16[%c0_114, %c0_115], %159 {strides = array<i32>} : memref<128x128xf32, #tpu.memory_space<vmem>>, vector<128x128xf32>,
    %c0_i32_116 = arith.constant 0 : i32
    %c1_i32_117 = arith.constant 1 : i32
    %161 = arith.muli %c0_i32_116, %c1_i32_117 : i32
    %c0_i32_118 = arith.constant 0 : i32
    %162 = arith.addi %c0_i32_118, %161 : i32
    %c128_i32_119 = arith.constant 128 : i32
    %163 = arith.muli %162, %c128_i32_119 : i32
    %164 = tpu.assume_multiple %163, 128 : i32
    %165 = arith.index_cast %164 : i32 to index
    %c0_120 = arith.constant 0 : index
    %166 = vector.load %arg12[%165, %c0_120] : memref<128x128xbf16, #tpu.memory_space<vmem>>, vector<128x128xbf16>
    %167 = arith.index_cast %164 : i32 to index
    %c0_121 = arith.constant 0 : index
    %168 = vector.load %arg13[%167, %c0_121] : memref<128x128xbf16, #tpu.memory_space<vmem>>, vector<128x128xbf16>
    %cst_122 = arith.constant dense<0.000000e+00> : vector<128x128xf32>
    %169 = tpu.matmul %148, %166, %cst_122 {dimension_numbers = #tpu.dot_dimension_numbers<[1], [1], [0], [0], [0, 0, 1, 0], [], []>} : vector<128x128xbf16>, vector<128x128xbf16>, vector<128x128xf32> -> vector<128x128xf32>
    %170 = tpu.iota {dimensions = array<i32: 1>} : vector<1x128xi32>
    %171 = vector.broadcast %164 : i32 to vector<1x128xi32>
    %172 = arith.addi %170, %171 : vector<1x128xi32>
    %c8_i32_123 = arith.constant 8 : i32
    %173 = vector.broadcast %c8_i32_123 : i32 to vector<1x128xi32>
    %174 = arith.cmpi slt, %172, %173 : vector<1x128xi32>
    %cst_124 = arith.constant 0.000000e+00 : f32
    %cst_125 = arith.constant -1.000000e+30 : f32
    %175 = vector.broadcast %cst_124 : f32 to vector<1x128xf32>
    %176 = vector.broadcast %cst_125 : f32 to vector<1x128xf32>
    %177 = arith.select %174, %175, %176 : vector<1x128xi1>, vector<1x128xf32>
    %178 = vector.broadcast %177 : vector<1x128xf32> to vector<128x128xf32>
    %179 = arith.addf %169, %178 : vector<128x128xf32>
    %c0_126 = arith.constant 0 : index
    %c0_127 = arith.constant 0 : index
    %180 = vector.load %arg14[%c0_126, %c0_127] : memref<128x1xf32, #tpu.memory_space<vmem>>, vector<128x1xf32>
    %cst_128 = arith.constant dense<0xFF800000> : vector<128xf32>
    %181 = vector.multi_reduction <maximumf>, %179, %cst_128 [1] : vector<128x128xf32> to vector<128xf32>
    %182 = vector.shape_cast %181 : vector<128xf32> to vector<128x1xf32>
    %183 = arith.maximumf %180, %182 : vector<128x1xf32>
    %184 = arith.subf %180, %183 : vector<128x1xf32>
    %185 = math.exp %184 : vector<128x1xf32>
    %186 = vector.broadcast %183 : vector<128x1xf32> to vector<128x128xf32>
    %187 = arith.subf %179, %186 : vector<128x128xf32>
    %188 = math.exp %187 : vector<128x128xf32>
    %c0_129 = arith.constant 0 : index
    %c0_130 = arith.constant 0 : index
    %189 = vector.load %arg15[%c0_129, %c0_130] : memref<128x1xf32, #tpu.memory_space<vmem>>, vector<128x1xf32>
    %190 = arith.mulf %185, %189 : vector<128x1xf32>
    %cst_131 = arith.constant dense<0.000000e+00> : vector<128xf32>
    %191 = vector.multi_reduction <add>, %188, %cst_131 [1] : vector<128x128xf32> to vector<128xf32>
    %192 = vector.shape_cast %191 : vector<128xf32> to vector<128x1xf32>
    %193 = arith.addf %190, %192 : vector<128x1xf32>
    %c0_132 = arith.constant 0 : index
    %c0_133 = arith.constant 0 : index
    %194 = vector.load %arg15[%c0_132, %c0_133] : memref<128x1xf32, #tpu.memory_space<vmem>>, vector<128x1xf32>
    tpu.vector_store %arg15[%c0_132, %c0_133], %193 {strides = array<i32>} : memref<128x1xf32, #tpu.memory_space<vmem>>, vector<128x1xf32>,
    %c0_134 = arith.constant 0 : index
    %c0_135 = arith.constant 0 : index
    %195 = vector.load %arg16[%c0_134, %c0_135] : memref<128x128xf32, #tpu.memory_space<vmem>>, vector<128x128xf32>
    %196 = vector.broadcast %185 : vector<128x1xf32> to vector<128x128xf32>
    %197 = arith.mulf %196, %195 : vector<128x128xf32>
    %198 = arith.truncf %188 : vector<128x128xf32> to vector<128x128xbf16>
    %cst_136 = arith.constant dense<0.000000e+00> : vector<128x128xf32>
    %199 = tpu.matmul %198, %168, %cst_136 {dimension_numbers = #tpu.dot_dimension_numbers<[1], [0], [0], [1], [0, 0, 1, 1], [], []>} : vector<128x128xbf16>, vector<128x128xbf16>, vector<128x128xf32> -> vector<128x128xf32>
    %200 = arith.addf %197, %199 : vector<128x128xf32>
    %c0_137 = arith.constant 0 : index
    %c0_138 = arith.constant 0 : index
    %201 = vector.load %arg16[%c0_137, %c0_138] : memref<128x128xf32, #tpu.memory_space<vmem>>, vector<128x128xf32>
    tpu.vector_store %arg16[%c0_137, %c0_138], %200 {strides = array<i32>} : memref<128x128xf32, #tpu.memory_space<vmem>>, vector<128x128xf32>,
    %c0_139 = arith.constant 0 : index
    %c0_140 = arith.constant 0 : index
    %202 = vector.load %arg14[%c0_139, %c0_140] : memref<128x1xf32, #tpu.memory_space<vmem>>, vector<128x1xf32>
    tpu.vector_store %arg14[%c0_139, %c0_140], %183 {strides = array<i32>} : memref<128x1xf32, #tpu.memory_space<vmem>>, vector<128x1xf32>,
    %c1_i32_141 = arith.constant 1 : i32
    %c0_142 = arith.constant 0 : index
    %c0_143 = arith.constant 0 : index
    %203 = vector.load %arg16[%c0_142, %c0_143] : memref<128x128xf32, #tpu.memory_space<vmem>>, vector<128x128xf32>
    %c0_144 = arith.constant 0 : index
    %c0_145 = arith.constant 0 : index
    %204 = vector.load %arg15[%c0_144, %c0_145] : memref<128x1xf32, #tpu.memory_space<vmem>>, vector<128x1xf32>
    %205 = tpu.reciprocal %204 {approx = true} : vector<128x1xf32> -> vector<128x1xf32>
    %206 = vector.broadcast %205 : vector<128x1xf32> to vector<128x128xf32>
    %207 = arith.mulf %203, %206 : vector<128x128xf32>
    %208 = arith.addf %140, %207 : vector<128x128xf32>
    %c0_146 = arith.constant 0 : index
    %c0_147 = arith.constant 0 : index
    %209 = vector.load %arg6[%c0_146, %c0_147] : memref<128x128xf32, #tpu.memory_space<vmem>>, vector<128x128xf32>
    %cst_148 = arith.constant dense<0.000000e+00> : vector<128x128xf32>
    %210 = tpu.matmul %208, %209, %cst_148 {dimension_numbers = #tpu.dot_dimension_numbers<[1], [0], [0], [1], [0, 0, 1, 1], [], []>} : vector<128x128xf32>, vector<128x128xf32>, vector<128x128xf32> -> vector<128x128xf32>
    %c0_149 = arith.constant 0 : index
    %c0_150 = arith.constant 0 : index
    %211 = vector.load %arg9[%c0_149, %c0_150] : memref<3x128xf32, #tpu.memory_space<vmem>>, vector<1x128xf32>
    %212 = vector.broadcast %211 : vector<1x128xf32> to vector<128x128xf32>
    %213 = arith.addf %210, %212 : vector<128x128xf32>
    %c0_151 = arith.constant 0 : index
    %c0_152 = arith.constant 0 : index
    %214 = vector.load %arg10[%c0_151, %c0_152] : memref<128x128xf32, #tpu.memory_space<vmem>>, vector<128x128xf32>
    tpu.vector_store %arg10[%c0_151, %c0_152], %213 {strides = array<i32>} : memref<128x128xf32, #tpu.memory_space<vmem>>, vector<128x128xf32>,
    %c0_153 = arith.constant 0 : index
    %c0_154 = arith.constant 0 : index
    %215 = vector.load %arg2[%c0_153, %c0_154] : memref<1x128xi32, #tpu.memory_space<vmem>>, vector<1x128xi32>
    %216 = tpu.iota {dimensions = array<i32: 0>} : vector<2x128xi32>
    %217 = vector.broadcast %215 : vector<1x128xi32> to vector<2x128xi32>
    %218 = arith.cmpi eq, %217, %216 : vector<2x128xi32>
    %219 = arith.extui %218 : vector<2x128xi1> to vector<2x128xi32>
    %220 = arith.sitofp %219 : vector<2x128xi32> to vector<2x128xf32>
    %cst_155 = arith.constant dense<0.000000e+00> : vector<2xf32>
    %221 = vector.multi_reduction <add>, %220, %cst_155 [1] : vector<2x128xf32> to vector<2xf32>
    %222 = vector.shape_cast %221 : vector<2xf32> to vector<2x1xf32>
    %cst_156 = arith.constant 1.000000e+00 : f32
    %223 = vector.broadcast %cst_156 : f32 to vector<2x1xf32>
    %224 = arith.maximumf %222, %223 : vector<2x1xf32>
    %225 = vector.broadcast %224 : vector<2x1xf32> to vector<2x128xf32>
    %226 = arith.divf %220, %225 : vector<2x128xf32>
    %cst_157 = arith.constant dense<0.000000e+00> : vector<2x128xf32>
    %227 = tpu.matmul %226, %208, %cst_157 {dimension_numbers = #tpu.dot_dimension_numbers<[1], [0], [0], [1], [0, 0, 1, 1], [], []>} : vector<2x128xf32>, vector<128x128xf32>, vector<2x128xf32> -> vector<2x128xf32>
    %c0_158 = arith.constant 0 : index
    %c0_159 = arith.constant 0 : index
    %228 = vector.load %arg7[%c0_158, %c0_159] : memref<128x128xf32, #tpu.memory_space<vmem>>, vector<128x128xf32>
    %cst_160 = arith.constant dense<0.000000e+00> : vector<2x128xf32>
    %229 = tpu.matmul %227, %228, %cst_160 {dimension_numbers = #tpu.dot_dimension_numbers<[1], [0], [0], [1], [0, 0, 1, 1], [], []>} : vector<2x128xf32>, vector<128x128xf32>, vector<2x128xf32> -> vector<2x128xf32>
    %c1_161 = arith.constant 1 : index
    %c0_162 = arith.constant 0 : index
    %230 = vector.load %arg9[%c1_161, %c0_162] : memref<3x128xf32, #tpu.memory_space<vmem>>, vector<1x128xf32>
    %231 = vector.broadcast %230 : vector<1x128xf32> to vector<2x128xf32>
    %232 = arith.addf %229, %231 : vector<2x128xf32>
    %cst_163 = arith.constant 0.000000e+00 : f32
    %233 = vector.broadcast %cst_163 : f32 to vector<2x128xf32>
    %234 = arith.maximumf %232, %233 : vector<2x128xf32>
    %c0_164 = arith.constant 0 : index
    %c0_165 = arith.constant 0 : index
    %235 = vector.load %arg8[%c0_164, %c0_165] : memref<128x128xf32, #tpu.memory_space<vmem>>, vector<128x128xf32>
    %cst_166 = arith.constant dense<0.000000e+00> : vector<2x128xf32>
    %236 = tpu.matmul %234, %235, %cst_166 {dimension_numbers = #tpu.dot_dimension_numbers<[1], [0], [0], [1], [0, 0, 1, 1], [], []>} : vector<2x128xf32>, vector<128x128xf32>, vector<2x128xf32> -> vector<2x128xf32>
    %c2_167 = arith.constant 2 : index
    %c0_168 = arith.constant 0 : index
    %237 = vector.load %arg9[%c2_167, %c0_168] : memref<3x128xf32, #tpu.memory_space<vmem>>, vector<1x128xf32>
    %238 = vector.broadcast %237 : vector<1x128xf32> to vector<2x128xf32>
    %239 = arith.addf %236, %238 : vector<2x128xf32>
    %c0_169 = arith.constant 0 : index
    %c0_170 = arith.constant 0 : index
    %240 = vector.load %arg11[%c0_169, %c0_170] : memref<2x128xf32, #tpu.memory_space<vmem>>, vector<2x128xf32>
    tpu.vector_store %arg11[%c0_169, %c0_170], %239 {strides = array<i32>} : memref<2x128xf32, #tpu.memory_space<vmem>>, vector<2x128xf32>,
    return
  }
}

</mosaic_0001>

<llo_original>
// kernel: tpu_custom_call.1
$region0: #{tpu_custom_call.1}
  #allocation0 [shape = 'u32[]', space=smem, size = 0x4, offset = 0x4, fixed_abs, tag = 'smem constant byte address 0x4 - core index']
  #allocation1 [shape = 'u32[144,128]{1,0:T(1,128)}', space=vmem, size = 0x12000, scoped, tag = 'internal scratch']
  #allocation2 [shape = 'bf16[128,128]{1,0:T(8,128)(2,1)}', space=vmem, size = 0x8000, scoped, tag = 'scratch operand']
  #allocation3 [shape = 'bf16[128,128]{1,0:T(8,128)(2,1)}', space=vmem, size = 0x8000, scoped, tag = 'scratch operand']
  #allocation4 [shape = 'f32[128,1]{1,0:T(8,128)}', space=vmem, size = 0x10000, scoped, tag = 'scratch operand']
  #allocation5 [shape = 'f32[128,1]{1,0:T(8,128)}', space=vmem, size = 0x10000, scoped, tag = 'scratch operand']
  #allocation6 [shape = 'f32[128,128]{1,0:T(8,128)}', space=vmem, size = 0x10000, scoped, tag = 'scratch operand']
  %s0 = inlined_call_operand.vmem [shape: f32[128,8], index: 0, kind: input, shape index: {}]
  %s1 = inlined_call_operand.vmem [shape: f32[128,128], index: 1, kind: input, shape index: {}]
  %s2 = inlined_call_operand.vmem [shape: s32[1,128], index: 2, kind: input, shape index: {}]
  %s3 = inlined_call_operand.hbm [shape: f32[8,128], index: 3, kind: input, shape index: {}]
  %s4 = inlined_call_operand.hbm [shape: f32[3,128,384], index: 4, kind: input, shape index: {}]
  %s5 = inlined_call_operand.vmem [shape: f32[3,384], index: 5, kind: input, shape index: {}]
  %s6 = inlined_call_operand.hbm [shape: f32[128,128], index: 6, kind: input, shape index: {}]
  %s7 = inlined_call_operand.hbm [shape: f32[128,128], index: 7, kind: input, shape index: {}]
  %s8 = inlined_call_operand.hbm [shape: f32[128,128], index: 8, kind: input, shape index: {}]
  %s9 = inlined_call_operand.vmem [shape: f32[3,128], index: 9, kind: input, shape index: {}]
  %s10 = inlined_call_operand.hbm [shape: f32[128,128], index: 10, kind: output, shape index: {0}]
  %s11 = inlined_call_operand.hbm [shape: f32[2,128], index: 11, kind: output, shape index: {1}]
  %12 = xla_tuple %s10, %s11
  %s13 = sld [smem:[#allocation0]]
  $region78: #{tpu_custom_call.1} parent=0
    _
  %s15 = ssub.s32 1, %s13
  %s16 = scalar_select 0, %s15, %s13
  $region1: #{tpu_custom_call.1} parent=0
    #allocation7 [shape = 'u8[4096]{0}', space=vmem, size = 0x1000, scoped, tag = 'input window, operand 3, single buffered']
    #allocation8 [shape = 's32[1]{0}', space=sflag, size = 0x4, scoped, tag = 'scoped memory for tpu_custom_call.1']
    #allocation9 [shape = 's32[1]{0}', space=sflag, size = 0x4, scoped, tag = 'scoped memory for tpu_custom_call.1']
    #allocation10 [shape = 'u8[589824]{0}', space=vmem, size = 0x90000, scoped, tag = 'input window, operand 4, single buffered']
    #allocation11 [shape = 's32[1]{0}', space=sflag, size = 0x4, scoped, tag = 'scoped memory for tpu_custom_call.1']
    #allocation12 [shape = 'u8[65536]{0}', space=vmem, size = 0x10000, scoped, tag = 'input window, operand 6, single buffered']
    #allocation13 [shape = 'u8[65536]{0}', space=vmem, size = 0x10000, scoped, tag = 'input window, operand 7, single buffered']
    #allocation14 [shape = 's32[1]{0}', space=sflag, size = 0x4, scoped, tag = 'scoped memory for tpu_custom_call.1']
    #allocation15 [shape = 'u8[65536]{0}', space=vmem, size = 0x10000, scoped, tag = 'input window, operand 8, single buffered']
    #allocation16 [shape = 'u8[65536]{0}', space=vmem, size = 0x10000, scoped, tag = 'output window, operand 0, single buffered']
    #allocation17 [shape = 'u8[1024]{0}', space=vmem, size = 0x400, scoped, tag = 'output window, operand 1, single buffered']
    #allocation18 [shape = 's32[1]{0}', space=sflag, size = 0x4, scoped, tag = 'scoped memory for tpu_custom_call.1']
    %17 = vsyncpa [#allocation8], 0
    %18 = vsyncpa [#allocation11], 0
    %19 = vsyncpa [#allocation14], 0
    %20 = vsyncpa [#allocation9], 0
    %21 = vsyncpa [#allocation18], 0
    // Predicated region
    $region2: #{tpu_custom_call.1} parent=1 // pred_check
      _
    $region3: #{tpu_custom_call.1} parent=1 // pred_check_branch
      %23 = sbr.rel (0) target = $region5
    $region4: #{tpu_custom_call.1} parent=1 // pred_region
      _
    $region5: #{tpu_custom_call.1} parent=1 // pred_fallthru
      _
    // Predicated region
    $region6: #{tpu_custom_call.1} parent=1 // pred_check
      _
    $region7: #{tpu_custom_call.1} parent=1 // pred_check_branch
      %25 = sbr.rel (0) target = $region9
    $region8: #{tpu_custom_call.1} parent=1 // pred_region
      _
    $region9: #{tpu_custom_call.1} parent=1 // pred_fallthru
      _
    // Predicated region
    $region10: #{tpu_custom_call.1} parent=1 // pred_check
      _
    $region11: #{tpu_custom_call.1} parent=1 // pred_check_branch
      %27 = sbr.rel (0) target = $region13
    $region12: #{tpu_custom_call.1} parent=1 // pred_region
      _
    $region13: #{tpu_custom_call.1} parent=1 // pred_fallthru
      _
    // Predicated region
    $region14: #{tpu_custom_call.1} parent=1 // pred_check
      _
    $region15: #{tpu_custom_call.1} parent=1 // pred_check_branch
      %29 = sbr.rel (0) target = $region17
    $region16: #{tpu_custom_call.1} parent=1 // pred_region
      %s31 = ssub.s32 128, 128
      %32 = vsyncadd [#allocation8], %s31
      %s34 = sshll.u32 [#allocation7], 4
      %s35 = int_to_ptr.vmem [resolvable:$true] %s34
      %37 = dma.hbm_to_vmem [thread:$0]  %s3, 128, %s35, [#allocation8]
    $region17: #{tpu_custom_call.1} parent=1 // pred_fallthru
      _
    // Predicated region
    $region18: #{tpu_custom_call.1} parent=1 // pred_check
      _
    $region19: #{tpu_custom_call.1} parent=1 // pred_check_branch
      %39 = sbr.rel (0) target = $region21
    $region20: #{tpu_custom_call.1} parent=1 // pred_region
      %s41 = ssub.s32 18432, 18432
      %42 = vsyncadd [#allocation11], %s41
      %s43 = sshll.u32 [#allocation10], 4
      %s44 = int_to_ptr.vmem [resolvable:$true] %s43
      %49 = dma.hbm_to_vmem [thread:$0]  %s4, 18432, %s44, [#allocation11], 384, 384, 24
    $region21: #{tpu_custom_call.1} parent=1 // pred_fallthru
      _
    // Predicated region
    $region22: #{tpu_custom_call.1} parent=1 // pred_check
      _
    $region23: #{tpu_custom_call.1} parent=1 // pred_check_branch
      %51 = sbr.rel (0) target = $region25
    $region24: #{tpu_custom_call.1} parent=1 // pred_region
      _
    $region25: #{tpu_custom_call.1} parent=1 // pred_fallthru
      _
    // Predicated region
    $region26: #{tpu_custom_call.1} parent=1 // pred_check
      _
    $region27: #{tpu_custom_call.1} parent=1 // pred_check_branch
      %53 = sbr.rel (0) target = $region29
    $region28: #{tpu_custom_call.1} parent=1 // pred_region
      %s55 = ssub.s32 2048, 2048
      %56 = vsyncadd [#allocation11], %s55
      %s57 = sshll.u32 [#allocation12], 4
      %s58 = int_to_ptr.vmem [resolvable:$true] %s57
      %63 = dma.hbm_to_vmem [thread:$0]  %s6, 2048, %s58, [#allocation11], 128, 128, 8
    $region29: #{tpu_custom_call.1} parent=1 // pred_fallthru
      _
    // Predicated region
    $region30: #{tpu_custom_call.1} parent=1 // pred_check
      _
    $region31: #{tpu_custom_call.1} parent=1 // pred_check_branch
      %65 = sbr.rel (0) target = $region33
    $region32: #{tpu_custom_call.1} parent=1 // pred_region
      %s67 = ssub.s32 2048, 2048
      %68 = vsyncadd [#allocation14], %s67
      %s69 = sshll.u32 [#allocation13], 4
      %s70 = int_to_ptr.vmem [resolvable:$true] %s69
      %75 = dma.hbm_to_vmem [thread:$0]  %s7, 2048, %s70, [#allocation14], 128, 128, 8
    $region33: #{tpu_custom_call.1} parent=1 // pred_fallthru
      _
    // Predicated region
    $region34: #{tpu_custom_call.1} parent=1 // pred_check
      _
    $region35: #{tpu_custom_call.1} parent=1 // pred_check_branch
      %77 = sbr.rel (0) target = $region37
    $region36: #{tpu_custom_call.1} parent=1 // pred_region
      %s79 = ssub.s32 2048, 2048
      %80 = vsyncadd [#allocation14], %s79
      %s81 = sshll.u32 [#allocation15], 4
      %s82 = int_to_ptr.vmem [resolvable:$true] %s81
      %87 = dma.hbm_to_vmem [thread:$0]  %s8, 2048, %s82, [#allocation14], 128, 128, 8
    $region37: #{tpu_custom_call.1} parent=1 // pred_fallthru
      _
    // Predicated region
    $region38: #{tpu_custom_call.1} parent=1 // pred_check
      _
    $region39: #{tpu_custom_call.1} parent=1 // pred_check_branch
      %89 = sbr.rel (0) target = $region41
    $region40: #{tpu_custom_call.1} parent=1 // pred_region
      _
    $region41: #{tpu_custom_call.1} parent=1 // pred_fallthru
      _
    // Predicated region
    $region42: #{tpu_custom_call.1} parent=1 // pred_check
      _
    $region43: #{tpu_custom_call.1} parent=1 // pred_check_branch
      %91 = sbr.rel (0) target = $region45
    $region44: #{tpu_custom_call.1} parent=1 // pred_region
      %92 = dma.done [#allocation8], 128
    $region45: #{tpu_custom_call.1} parent=1 // pred_fallthru
      _
    // Predicated region
    $region46: #{tpu_custom_call.1} parent=1 // pred_check
      _
    $region47: #{tpu_custom_call.1} parent=1 // pred_check_branch
      %94 = sbr.rel (0) target = $region49
    $region48: #{tpu_custom_call.1} parent=1 // pred_region
      %95 = dma.done [#allocation11], 18432
    $region49: #{tpu_custom_call.1} parent=1 // pred_fallthru
      _
    // Predicated region
    $region50: #{tpu_custom_call.1} parent=1 // pred_check
      _
    $region51: #{tpu_custom_call.1} parent=1 // pred_check_branch
      %97 = sbr.rel (0) target = $region53
    $region52: #{tpu_custom_call.1} parent=1 // pred_region
      %98 = dma.done [#allocation11], 2048
    $region53: #{tpu_custom_call.1} parent=1 // pred_fallthru
      _
    // Predicated region
    $region54: #{tpu_custom_call.1} parent=1 // pred_check
      _
    $region55: #{tpu_custom_call.1} parent=1 // pred_check_branch
      %100 = sbr.rel (0) target = $region57
    $region56: #{tpu_custom_call.1} parent=1 // pred_region
      %101 = dma.done [#allocation14], 2048
    $region57: #{tpu_custom_call.1} parent=1 // pred_fallthru
      _
    // Predicated region
    $region58: #{tpu_custom_call.1} parent=1 // pred_check
      _
    $region59: #{tpu_custom_call.1} parent=1 // pred_check_branch
      %103 = sbr.rel (0) target = $region61
    $region60: #{tpu_custom_call.1} parent=1 // pred_region
      %104 = dma.done [#allocation14], 2048
    $region61: #{tpu_custom_call.1} parent=1 // pred_fallthru
      _
    %v106 = vld [vmem:[%s0] sm:$0xff]
    %v107 = vld [vmem:[%s0 + $0x8] sm:$0xff]
    %v108 = vld [vmem:[%s0 + $0x10] sm:$0xff]
    %v109 = vld [vmem:[%s0 + $0x18] sm:$0xff]
    %v110 = vld [vmem:[%s0 + $0x20] sm:$0xff]
    %v111 = vld [vmem:[%s0 + $0x28] sm:$0xff]
    %v112 = vld [vmem:[%s0 + $0x30] sm:$0xff]
    %v113 = vld [vmem:[%s0 + $0x38] sm:$0xff]
    %v114 = vld [vmem:[%s0 + $0x40] sm:$0xff]
    %v115 = vld [vmem:[%s0 + $0x48] sm:$0xff]
    %v116 = vld [vmem:[%s0 + $0x50] sm:$0xff]
    %v117 = vld [vmem:[%s0 + $0x58] sm:$0xff]
    %v118 = vld [vmem:[%s0 + $0x60] sm:$0xff]
    %v119 = vld [vmem:[%s0 + $0x68] sm:$0xff]
    %v120 = vld [vmem:[%s0 + $0x70] sm:$0xff]
    %v121 = vld [vmem:[%s0 + $0x78] sm:$0xff]
    %v122 = vld [vmem:[#allocation7] sm:$0xff]
    %v123 = vld [vmem:[%s1] sm:$0xff]
    %v124 = vld [vmem:[%s1 + $0x8] sm:$0xff]
    %v125 = vld [vmem:[%s1 + $0x10] sm:$0xff]
    %v126 = vld [vmem:[%s1 + $0x18] sm:$0xff]
    %v127 = vld [vmem:[%s1 + $0x20] sm:$0xff]
    %v128 = vld [vmem:[%s1 + $0x28] sm:$0xff]
    %v129 = vld [vmem:[%s1 + $0x30] sm:$0xff]
    %v130 = vld [vmem:[%s1 + $0x38] sm:$0xff]
    %v131 = vld [vmem:[%s1 + $0x40] sm:$0xff]
    %v132 = vld [vmem:[%s1 + $0x48] sm:$0xff]
    %v133 = vld [vmem:[%s1 + $0x50] sm:$0xff]
    %v134 = vld [vmem:[%s1 + $0x58] sm:$0xff]
    %v135 = vld [vmem:[%s1 + $0x60] sm:$0xff]
    %v136 = vld [vmem:[%s1 + $0x68] sm:$0xff]
    %v137 = vld [vmem:[%s1 + $0x70] sm:$0xff]
    %v138 = vld [vmem:[%s1 + $0x78] sm:$0xff]
    %vm139 = vcmask 64512
    %v141 = vsel %vm139, %v106, 0
    %v144 = vsel %vm139, %v107, 0
    %v147 = vsel %vm139, %v108, 0
    %v150 = vsel %vm139, %v109, 0
    %v153 = vsel %vm139, %v110, 0
    %v156 = vsel %vm139, %v111, 0
    %v159 = vsel %vm139, %v112, 0
    %v162 = vsel %vm139, %v113, 0
    %v165 = vsel %vm139, %v114, 0
    %v168 = vsel %vm139, %v115, 0
    %v171 = vsel %vm139, %v116, 0
    %v174 = vsel %vm139, %v117, 0
    %v177 = vsel %vm139, %v118, 0
    %v180 = vsel %vm139, %v119, 0
    %v183 = vsel %vm139, %v120, 0
    %v186 = vsel %vm139, %v121, 0
    %188 = vmatprep.subr.mxu0 0.0
    %189 = vmatpush1.msra.mxu0 0.0
    %190 = vmatprep.subr.mxu0 0.0
    %191 = vmatpush1.msra.mxu0 0.0
    %192 = vmatprep.subr.mxu0 0.0
    %193 = vmatpush1.msra.mxu0 0.0
    %194 = vmatprep.subr.mxu0 0.0
    %195 = vmatpush1.msra.mxu0 0.0
    %196 = vmatprep.subr.mxu0 0.0
    %197 = vmatpush1.msra.mxu0 0.0
    %198 = vmatprep.subr.mxu0 0.0
    %199 = vmatpush1.msra.mxu0 0.0
    %200 = vmatprep.subr.mxu0 0.0
    %201 = vmatpush1.msra.mxu0 0.0
    %202 = vmatprep.subr.mxu0 0.0
    %203 = vmatpush1.msra.mxu0 0.0
    %204 = vmatprep.subr.mxu0 0.0
    %205 = vmatpush1.msra.mxu0 0.0
    %206 = vmatprep.subr.mxu0 0.0
    %207 = vmatpush1.msra.mxu0 0.0
    %208 = vmatprep.subr.mxu0 0.0
    %209 = vmatpush1.msra.mxu0 0.0
    %210 = vmatprep.subr.mxu0 0.0
    %211 = vmatpush1.msra.mxu0 0.0
    %212 = vmatprep.subr.mxu0 0.0
    %213 = vmatpush1.msra.mxu0 0.0
    %214 = vmatprep.subr.mxu0 0.0
    %215 = vmatpush1.msra.mxu0 0.0
    %216 = vmatprep.subr.mxu0 0.0
    %217 = vmatpush1.msra.mxu0 0.0
    %218 = vmatprep.subr.mxu0 0.0
    %219 = vmatpush1.msra.mxu0 %v122
    %220 = vmatprep.subr.mxu0 0.0
    %221 = vmatpush2.msra.mxu0 0.0
    %222 = vmatprep.subr.mxu0 0.0
    %223 = vmatpush2.msra.mxu0 0.0
    %224 = vmatprep.subr.mxu0 0.0
    %225 = vmatpush2.msra.mxu0 0.0
    %226 = vmatprep.subr.mxu0 0.0
    %227 = vmatpush2.msra.mxu0 0.0
    %228 = vmatprep.subr.mxu0 0.0
    %229 = vmatpush2.msra.mxu0 0.0
    %230 = vmatprep.subr.mxu0 0.0
    %231 = vmatpush2.msra.mxu0 0.0
    %232 = vmatprep.subr.mxu0 0.0
    %233 = vmatpush2.msra.mxu0 0.0
    %234 = vmatprep.subr.mxu0 0.0
    %235 = vmatpush2.msra.mxu0 0.0
    %236 = vmatprep.subr.mxu0 0.0
    %237 = vmatpush2.msra.mxu0 0.0
    %238 = vmatprep.subr.mxu0 0.0
    %239 = vmatpush2.msra.mxu0 0.0
    %240 = vmatprep.subr.mxu0 0.0
    %241 = vmatpush2.msra.mxu0 0.0
    %242 = vmatprep.subr.mxu0 0.0
    %243 = vmatpush2.msra.mxu0 0.0
    %244 = vmatprep.subr.mxu0 0.0
    %245 = vmatpush2.msra.mxu0 0.0
    %246 = vmatprep.subr.mxu0 0.0
    %247 = vmatpush2.msra.mxu0 0.0
    %248 = vmatprep.subr.mxu0 0.0
    %249 = vmatpush2.msra.mxu0 0.0
    %250 = vmatprep.subr.mxu0 0.0
    %251 = vmatpush2.msra.mxu0 0.0
    %252 = vmatprep.mubr.f32.mxu0 0.0
    %253 = vmatmul.mubr.f32.gmra.mxu0 %v141
    %v254 = vpop.f32.mrf.mxu0
    %v255 = vadd.f32 %v123, %v254
    %v256 = vpop.f32.mrf.mxu0
    %257 = vmatprep.mubr.f32.mxu0 0.0
    %258 = vmatmul.mubr.f32.gmra.mxu0 %v144
    %v259 = vpop.f32.mrf.mxu0
    %v260 = vadd.f32 %v124, %v259
    %v261 = vpop.f32.mrf.mxu0
    %262 = vmatprep.mubr.f32.mxu0 0.0
    %263 = vmatmul.mubr.f32.gmra.mxu0 %v147
    %v264 = vpop.f32.mrf.mxu0
    %v265 = vadd.f32 %v125, %v264
    %v266 = vpop.f32.mrf.mxu0
    %267 = vmatprep.mubr.f32.mxu0 0.0
    %268 = vmatmul.mubr.f32.gmra.mxu0 %v150
    %v269 = vpop.f32.mrf.mxu0
    %v270 = vadd.f32 %v126, %v269
    %v271 = vpop.f32.mrf.mxu0
    %272 = vmatprep.mubr.f32.mxu0 0.0
    %273 = vmatmul.mubr.f32.gmra.mxu0 %v153
    %v274 = vpop.f32.mrf.mxu0
    %v275 = vadd.f32 %v127, %v274
    %v276 = vpop.f32.mrf.mxu0
    %277 = vmatprep.mubr.f32.mxu0 0.0
    %278 = vmatmul.mubr.f32.gmra.mxu0 %v156
    %v279 = vpop.f32.mrf.mxu0
    %v280 = vadd.f32 %v128, %v279
    %v281 = vpop.f32.mrf.mxu0
    %282 = vmatprep.mubr.f32.mxu0 0.0
    %283 = vmatmul.mubr.f32.gmra.mxu0 %v159
    %v284 = vpop.f32.mrf.mxu0
    %v285 = vadd.f32 %v129, %v284
    %v286 = vpop.f32.mrf.mxu0
    %287 = vmatprep.mubr.f32.mxu0 0.0
    %288 = vmatmul.mubr.f32.gmra.mxu0 %v162
    %v289 = vpop.f32.mrf.mxu0
    %v290 = vadd.f32 %v130, %v289
    %v291 = vpop.f32.mrf.mxu0
    %292 = vmatprep.mubr.f32.mxu0 0.0
    %293 = vmatmul.mubr.f32.gmra.mxu0 %v165
    %v294 = vpop.f32.mrf.mxu0
    %v295 = vadd.f32 %v131, %v294
    %v296 = vpop.f32.mrf.mxu0
    %297 = vmatprep.mubr.f32.mxu0 0.0
    %298 = vmatmul.mubr.f32.gmra.mxu0 %v168
    %v299 = vpop.f32.mrf.mxu0
    %v300 = vadd.f32 %v132, %v299
    %v301 = vpop.f32.mrf.mxu0
    %302 = vmatprep.mubr.f32.mxu0 0.0
    %303 = vmatmul.mubr.f32.gmra.mxu0 %v171
    %v304 = vpop.f32.mrf.mxu0
    %v305 = vadd.f32 %v133, %v304
    %v306 = vpop.f32.mrf.mxu0
    %307 = vmatprep.mubr.f32.mxu0 0.0
    %308 = vmatmul.mubr.f32.gmra.mxu0 %v174
    %v309 = vpop.f32.mrf.mxu0
    %v310 = vadd.f32 %v134, %v309
    %v311 = vpop.f32.mrf.mxu0
    %312 = vmatprep.mubr.f32.mxu0 0.0
    %313 = vmatmul.mubr.f32.gmra.mxu0 %v177
    %v314 = vpop.f32.mrf.mxu0
    %v315 = vadd.f32 %v135, %v314
    %v316 = vpop.f32.mrf.mxu0
    %317 = vmatprep.mubr.f32.mxu0 0.0
    %318 = vmatmul.mubr.f32.gmra.mxu0 %v180
    %v319 = vpop.f32.mrf.mxu0
    %v320 = vadd.f32 %v136, %v319
    %v321 = vpop.f32.mrf.mxu0
    %322 = vmatprep.mubr.f32.mxu0 0.0
    %323 = vmatmul.mubr.f32.gmra.mxu0 %v183
    %v324 = vpop.f32.mrf.mxu0
    %v325 = vadd.f32 %v137, %v324
    %v326 = vpop.f32.mrf.mxu0
    %327 = vmatprep.mubr.f32.mxu0 0.0
    %328 = vmatmul.mubr.f32.gmra.mxu0 %v186
    %v329 = vpop.f32.mrf.mxu0
    %v330 = vadd.f32 %v138, %v329
    %v331 = vpop.f32.mrf.mxu0
    %332 = vdwg.mxu0
    %v333 = vld [vmem:[#allocation10] sm:$0xff]
    %v334 = vld [vmem:[#allocation10 + $0x8] sm:$0xff]
    %v335 = vld [vmem:[#allocation10 + $0x10] sm:$0xff]
    %v336 = vld [vmem:[#allocation10 + $0x18] sm:$0xff]
    %v337 = vld [vmem:[#allocation10 + $0x20] sm:$0xff]
    %v338 = vld [vmem:[#allocation10 + $0x28] sm:$0xff]
    %v339 = vld [vmem:[#allocation10 + $0x30] sm:$0xff]
    %v340 = vld [vmem:[#allocation10 + $0x38] sm:$0xff]
    %v341 = vld [vmem:[#allocation10 + $0x40] sm:$0xff]
    %v342 = vld [vmem:[#allocation10 + $0x48] sm:$0xff]
    %v343 = vld [vmem:[#allocation10 + $0x50] sm:$0xff]
    %v344 = vld [vmem:[#allocation10 + $0x58] sm:$0xff]
    %v345 = vld [vmem:[#allocation10 + $0x60] sm:$0xff]
    %v346 = vld [vmem:[#allocation10 + $0x68] sm:$0xff]
    %v347 = vld [vmem:[#allocation10 + $0x70] sm:$0xff]
    %v348 = vld [vmem:[#allocation10 + $0x78] sm:$0xff]
    %v349 = vld [vmem:[#allocation10 + $0x80] sm:$0xff]
    %v350 = vld [vmem:[#allocation10 + $0x88] sm:$0xff]
    %v351 = vld [vmem:[#allocation10 + $0x90] sm:$0xff]
    %v352 = vld [vmem:[#allocation10 + $0x98] sm:$0xff]
    %v353 = vld [vmem:[#allocation10 + $0xa0] sm:$0xff]
    %v354 = vld [vmem:[#allocation10 + $0xa8] sm:$0xff]
    %v355 = vld [vmem:[#allocation10 + $0xb0] sm:$0xff]
    %v356 = vld [vmem:[#allocation10 + $0xb8] sm:$0xff]
    %v357 = vld [vmem:[#allocation10 + $0xc0] sm:$0xff]
    %v358 = vld [vmem:[#allocation10 + $0xc8] sm:$0xff]
    %v359 = vld [vmem:[#allocation10 + $0xd0] sm:$0xff]
    %v360 = vld [vmem:[#allocation10 + $0xd8] sm:$0xff]
    %v361 = vld [vmem:[#allocation10 + $0xe0] sm:$0xff]
    %v362 = vld [vmem:[#allocation10 + $0xe8] sm:$0xff]
    %v363 = vld [vmem:[#allocation10 + $0xf0] sm:$0xff]
    %v364 = vld [vmem:[#allocation10 + $0xf8] sm:$0xff]
    %v365 = vld [vmem:[#allocation10 + $0x100] sm:$0xff]
    %v366 = vld [vmem:[#allocation10 + $0x108] sm:$0xff]
    %v367 = vld [vmem:[#allocation10 + $0x110] sm:$0xff]
    %v368 = vld [vmem:[#allocation10 + $0x118] sm:$0xff]
    %v369 = vld [vmem:[#allocation10 + $0x120] sm:$0xff]
    %v370 = vld [vmem:[#allocation10 + $0x128] sm:$0xff]
    %v371 = vld [vmem:[#allocation10 + $0x130] sm:$0xff]
    %v372 = vld [vmem:[#allocation10 + $0x138] sm:$0xff]
    %v373 = vld [vmem:[#allocation10 + $0x140] sm:$0xff]
    %v374 = vld [vmem:[#allocation10 + $0x148] sm:$0xff]
    %v375 = vld [vmem:[#allocation10 + $0x150] sm:$0xff]
    %v376 = vld [vmem:[#allocation10 + $0x158] sm:$0xff]
    %v377 = vld [vmem:[#allocation10 + $0x160] sm:$0xff]
    %v378 = vld [vmem:[#allocation10 + $0x168] sm:$0xff]
    %v379 = vld [vmem:[#allocation10 + $0x170] sm:$0xff]
    %v380 = vld [vmem:[#allocation10 + $0x178] sm:$0xff]
    %v381 = vld [vmem:[%s5] ss:$4 sm:$0x7]
    %v383 = vlaneseq
    %v384 = vshrl.u32 %v383, 7
    %v385 = vsub.s32 0, %v384
    %v386 = vrot.slane %v381, %v385
    %v387 = vlaneseq
    %v388 = vshrl.u32 %v387, 7
    %v389 = vsub.s32 1, %v388
    %v390 = vrot.slane %v381, %v389
    %v391 = vlaneseq
    %v392 = vshrl.u32 %v391, 7
    %v393 = vsub.s32 2, %v392
    %v394 = vrot.slane %v381, %v393
    %398 = vmatprep.subr.mxu0 %v379
    %399 = vmatpush1.msra.mxu0 %v378
    %400 = vmatprep.subr.mxu0 %v376
    %401 = vmatpush1.msra.mxu0 %v375
    %402 = vmatprep.subr.mxu0 %v373
    %403 = vmatpush1.msra.mxu0 %v372
    %404 = vmatprep.subr.mxu0 %v370
    %405 = vmatpush1.msra.mxu0 %v369
    %406 = vmatprep.subr.mxu0 %v367
    %407 = vmatpush1.msra.mxu0 %v366
    %408 = vmatprep.subr.mxu0 %v364
    %409 = vmatpush1.msra.mxu0 %v363
    %410 = vmatprep.subr.mxu0 %v361
    %411 = vmatpush1.msra.mxu0 %v360
    %412 = vmatprep.subr.mxu0 %v358
    %413 = vmatpush1.msra.mxu0 %v357
    %414 = vmatprep.subr.mxu0 %v355
    %415 = vmatpush1.msra.mxu0 %v354
    %416 = vmatprep.subr.mxu0 %v352
    %417 = vmatpush1.msra.mxu0 %v351
    %418 = vmatprep.subr.mxu0 %v349
    %419 = vmatpush1.msra.mxu0 %v348
    %420 = vmatprep.subr.mxu0 %v346
    %421 = vmatpush1.msra.mxu0 %v345
    %422 = vmatprep.subr.mxu0 %v343
    %423 = vmatpush1.msra.mxu0 %v342
    %424 = vmatprep.subr.mxu0 %v340
    %425 = vmatpush1.msra.mxu0 %v339
    %426 = vmatprep.subr.mxu0 %v337
    %427 = vmatpush1.msra.mxu0 %v336
    %428 = vmatprep.subr.mxu0 %v334
    %429 = vmatpush1.msra.mxu0 %v333
    %430 = vmatprep.subr.mxu0 0.0
    %431 = vmatpush2.msra.mxu0 0.0
    %432 = vmatprep.subr.mxu0 0.0
    %433 = vmatpush2.msra.mxu0 0.0
    %434 = vmatprep.subr.mxu0 0.0
    %435 = vmatpush2.msra.mxu0 0.0
    %436 = vmatprep.subr.mxu0 0.0
    %437 = vmatpush2.msra.mxu0 0.0
    %438 = vmatprep.subr.mxu0 0.0
    %439 = vmatpush2.msra.mxu0 0.0
    %440 = vmatprep.subr.mxu0 0.0
    %441 = vmatpush2.msra.mxu0 0.0
    %442 = vmatprep.subr.mxu0 0.0
    %443 = vmatpush2.msra.mxu0 0.0
    %444 = vmatprep.subr.mxu0 0.0
    %445 = vmatpush2.msra.mxu0 0.0
    %446 = vmatprep.subr.mxu0 0.0
    %447 = vmatpush2.msra.mxu0 0.0
    %448 = vmatprep.subr.mxu0 0.0
    %449 = vmatpush2.msra.mxu0 0.0
    %450 = vmatprep.subr.mxu0 0.0
    %451 = vmatpush2.msra.mxu0 0.0
    %452 = vmatprep.subr.mxu0 0.0
    %453 = vmatpush2.msra.mxu0 0.0
    %454 = vmatprep.subr.mxu0 0.0
    %455 = vmatpush2.msra.mxu0 0.0
    %456 = vmatprep.subr.mxu0 0.0
    %457 = vmatpush2.msra.mxu0 0.0
    %458 = vmatprep.subr.mxu0 0.0
    %459 = vmatpush2.msra.mxu0 0.0
    %460 = vmatprep.subr.mxu0 0.0
    %461 = vmatpush2.msra.mxu0 0.0
    %462 = vmatprep.mubr.f32.mxu0 0.0
    %463 = vmatmul.mubr.f32.gmra.mxu0 %v255
    %v464 = vpop.f32.mrf.mxu0
    %v465 = vadd.f32 %v386, %v464
    %v466 = vpop.f32.mrf.mxu0
    %v467 = vadd.f32 %v390, %v466
    %468 = vmatprep.mubr.f32.mxu0 0.0
    %469 = vmatmul.mubr.f32.gmra.mxu0 %v260
    %v470 = vpop.f32.mrf.mxu0
    %v471 = vadd.f32 %v386, %v470
    %v472 = vpop.f32.mrf.mxu0
    %v473 = vadd.f32 %v390, %v472
    %474 = vmatprep.mubr.f32.mxu0 0.0
    %475 = vmatmul.mubr.f32.gmra.mxu0 %v265
    %v476 = vpop.f32.mrf.mxu0
    %v477 = vadd.f32 %v386, %v476
    %v478 = vpop.f32.mrf.mxu0
    %v479 = vadd.f32 %v390, %v478
    %480 = vmatprep.mubr.f32.mxu0 0.0
    %481 = vmatmul.mubr.f32.gmra.mxu0 %v270
    %v482 = vpop.f32.mrf.mxu0
    %v483 = vadd.f32 %v386, %v482
    %v484 = vpop.f32.mrf.mxu0
    %v485 = vadd.f32 %v390, %v484
    %486 = vmatprep.mubr.f32.mxu0 0.0
    %487 = vmatmul.mubr.f32.gmra.mxu0 %v275
    %v488 = vpop.f32.mrf.mxu0
    %v489 = vadd.f32 %v386, %v488
    %v490 = vpop.f32.mrf.mxu0
    %v491 = vadd.f32 %v390, %v490
    %492 = vmatprep.mubr.f32.mxu0 0.0
    %493 = vmatmul.mubr.f32.gmra.mxu0 %v280
    %v494 = vpop.f32.mrf.mxu0
    %v495 = vadd.f32 %v386, %v494
    %v496 = vpop.f32.mrf.mxu0
    %v497 = vadd.f32 %v390, %v496
    %498 = vmatprep.mubr.f32.mxu0 0.0
    %499 = vmatmul.mubr.f32.gmra.mxu0 %v285
    %v500 = vpop.f32.mrf.mxu0
    %v501 = vadd.f32 %v386, %v500
    %v502 = vpop.f32.mrf.mxu0
    %v503 = vadd.f32 %v390, %v502
    %504 = vmatprep.mubr.f32.mxu0 0.0
    %505 = vmatmul.mubr.f32.gmra.mxu0 %v290
    %v506 = vpop.f32.mrf.mxu0
    %v507 = vadd.f32 %v386, %v506
    %v508 = vpop.f32.mrf.mxu0
    %v509 = vadd.f32 %v390, %v508
    %510 = vmatprep.mubr.f32.mxu0 0.0
    %511 = vmatmul.mubr.f32.gmra.mxu0 %v295
    %v512 = vpop.f32.mrf.mxu0
    %v513 = vadd.f32 %v386, %v512
    %v514 = vpop.f32.mrf.mxu0
    %v515 = vadd.f32 %v390, %v514
    %516 = vmatprep.mubr.f32.mxu0 0.0
    %517 = vmatmul.mubr.f32.gmra.mxu0 %v300
    %v518 = vpop.f32.mrf.mxu0
    %v519 = vadd.f32 %v386, %v518
    %v520 = vpop.f32.mrf.mxu0
    %v521 = vadd.f32 %v390, %v520
    %522 = vmatprep.mubr.f32.mxu0 0.0
    %523 = vmatmul.mubr.f32.gmra.mxu0 %v305
    %v524 = vpop.f32.mrf.mxu0
    %v525 = vadd.f32 %v386, %v524
    %v526 = vpop.f32.mrf.mxu0
    %v527 = vadd.f32 %v390, %v526
    %528 = vmatprep.mubr.f32.mxu0 0.0
    %529 = vmatmul.mubr.f32.gmra.mxu0 %v310
    %v530 = vpop.f32.mrf.mxu0
    %v531 = vadd.f32 %v386, %v530
    %v532 = vpop.f32.mrf.mxu0
    %v533 = vadd.f32 %v390, %v532
    %534 = vmatprep.mubr.f32.mxu0 0.0
    %535 = vmatmul.mubr.f32.gmra.mxu0 %v315
    %v536 = vpop.f32.mrf.mxu0
    %v537 = vadd.f32 %v386, %v536
    %v538 = vpop.f32.mrf.mxu0
    %v539 = vadd.f32 %v390, %v538
    %540 = vmatprep.mubr.f32.mxu0 0.0
    %541 = vmatmul.mubr.f32.gmra.mxu0 %v320
    %v542 = vpop.f32.mrf.mxu0
    %v543 = vadd.f32 %v386, %v542
    %v544 = vpop.f32.mrf.mxu0
    %v545 = vadd.f32 %v390, %v544
    %546 = vmatprep.mubr.f32.mxu0 0.0
    %547 = vmatmul.mubr.f32.gmra.mxu0 %v325
    %v548 = vpop.f32.mrf.mxu0
    %v549 = vadd.f32 %v386, %v548
    %v550 = vpop.f32.mrf.mxu0
    %v551 = vadd.f32 %v390, %v550
    %552 = vmatprep.mubr.f32.mxu0 0.0
    %553 = vmatmul.mubr.f32.gmra.mxu0 %v330
    %v554 = vpop.f32.mrf.mxu0
    %v555 = vadd.f32 %v386, %v554
    %v556 = vpop.f32.mrf.mxu0
    %v557 = vadd.f32 %v390, %v556
    %558 = vdwg.mxu0
    %559 = vmatprep.subr.mxu0 0.0
    %560 = vmatpush1.msra.mxu0 %v380
    %561 = vmatprep.subr.mxu0 0.0
    %562 = vmatpush1.msra.mxu0 %v377
    %563 = vmatprep.subr.mxu0 0.0
    %564 = vmatpush1.msra.mxu0 %v374
    %565 = vmatprep.subr.mxu0 0.0
    %566 = vmatpush1.msra.mxu0 %v371
    %567 = vmatprep.subr.mxu0 0.0
    %568 = vmatpush1.msra.mxu0 %v368
    %569 = vmatprep.subr.mxu0 0.0
    %570 = vmatpush1.msra.mxu0 %v365
    %571 = vmatprep.subr.mxu0 0.0
    %572 = vmatpush1.msra.mxu0 %v362
    %573 = vmatprep.subr.mxu0 0.0
    %574 = vmatpush1.msra.mxu0 %v359
    %575 = vmatprep.subr.mxu0 0.0
    %576 = vmatpush1.msra.mxu0 %v356
    %577 = vmatprep.subr.mxu0 0.0
    %578 = vmatpush1.msra.mxu0 %v353
    %579 = vmatprep.subr.mxu0 0.0
    %580 = vmatpush1.msra.mxu0 %v350
    %581 = vmatprep.subr.mxu0 0.0
    %582 = vmatpush1.msra.mxu0 %v347
    %583 = vmatprep.subr.mxu0 0.0
    %584 = vmatpush1.msra.mxu0 %v344
    %585 = vmatprep.subr.mxu0 0.0
    %586 = vmatpush1.msra.mxu0 %v341
    %587 = vmatprep.subr.mxu0 0.0
    %588 = vmatpush1.msra.mxu0 %v338
    %589 = vmatprep.subr.mxu0 0.0
    %590 = vmatpush1.msra.mxu0 %v335
    %591 = vmatprep.subr.mxu0 0.0
    %592 = vmatpush2.msra.mxu0 0.0
    %593 = vmatprep.subr.mxu0 0.0
    %594 = vmatpush2.msra.mxu0 0.0
    %595 = vmatprep.subr.mxu0 0.0
    %596 = vmatpush2.msra.mxu0 0.0
    %597 = vmatprep.subr.mxu0 0.0
    %598 = vmatpush2.msra.mxu0 0.0
    %599 = vmatprep.subr.mxu0 0.0
    %600 = vmatpush2.msra.mxu0 0.0
    %601 = vmatprep.subr.mxu0 0.0
    %602 = vmatpush2.msra.mxu0 0.0
    %603 = vmatprep.subr.mxu0 0.0
    %604 = vmatpush2.msra.mxu0 0.0
    %605 = vmatprep.subr.mxu0 0.0
    %606 = vmatpush2.msra.mxu0 0.0
    %607 = vmatprep.subr.mxu0 0.0
    %608 = vmatpush2.msra.mxu0 0.0
    %609 = vmatprep.subr.mxu0 0.0
    %610 = vmatpush2.msra.mxu0 0.0
    %611 = vmatprep.subr.mxu0 0.0
    %612 = vmatpush2.msra.mxu0 0.0
    %613 = vmatprep.subr.mxu0 0.0
    %614 = vmatpush2.msra.mxu0 0.0
    %615 = vmatprep.subr.mxu0 0.0
    %616 = vmatpush2.msra.mxu0 0.0
    %617 = vmatprep.subr.mxu0 0.0
    %618 = vmatpush2.msra.mxu0 0.0
    %619 = vmatprep.subr.mxu0 0.0
    %620 = vmatpush2.msra.mxu0 0.0
    %621 = vmatprep.subr.mxu0 0.0
    %622 = vmatpush2.msra.mxu0 0.0
    %623 = vmatprep.mubr.f32.mxu0 0.0
    %624 = vmatmul.mubr.f32.gmra.mxu0 %v255
    %v625 = vpop.f32.mrf.mxu0
    %v626 = vadd.f32 %v394, %v625
    %v627 = vpop.f32.mrf.mxu0
    %628 = vmatprep.mubr.f32.mxu0 0.0
    %629 = vmatmul.mubr.f32.gmra.mxu0 %v260
    %v630 = vpop.f32.mrf.mxu0
    %v631 = vadd.f32 %v394, %v630
    %v632 = vpop.f32.mrf.mxu0
    %633 = vmatprep.mubr.f32.mxu0 0.0
    %634 = vmatmul.mubr.f32.gmra.mxu0 %v265
    %v635 = vpop.f32.mrf.mxu0
    %v636 = vadd.f32 %v394, %v635
    %v637 = vpop.f32.mrf.mxu0
    %638 = vmatprep.mubr.f32.mxu0 0.0
    %639 = vmatmul.mubr.f32.gmra.mxu0 %v270
    %v640 = vpop.f32.mrf.mxu0
    %v641 = vadd.f32 %v394, %v640
    %v642 = vpop.f32.mrf.mxu0
    %643 = vmatprep.mubr.f32.mxu0 0.0
    %644 = vmatmul.mubr.f32.gmra.mxu0 %v275
    %v645 = vpop.f32.mrf.mxu0
    %v646 = vadd.f32 %v394, %v645
    %v647 = vpop.f32.mrf.mxu0
    %648 = vmatprep.mubr.f32.mxu0 0.0
    %649 = vmatmul.mubr.f32.gmra.mxu0 %v280
    %v650 = vpop.f32.mrf.mxu0
    %v651 = vadd.f32 %v394, %v650
    %v652 = vpop.f32.mrf.mxu0
    %653 = vmatprep.mubr.f32.mxu0 0.0
    %654 = vmatmul.mubr.f32.gmra.mxu0 %v285
    %v655 = vpop.f32.mrf.mxu0
    %v656 = vadd.f32 %v394, %v655
    %v657 = vpop.f32.mrf.mxu0
    %658 = vmatprep.mubr.f32.mxu0 0.0
    %659 = vmatmul.mubr.f32.gmra.mxu0 %v290
    %v660 = vpop.f32.mrf.mxu0
    %v661 = vadd.f32 %v394, %v660
    %v662 = vpop.f32.mrf.mxu0
    %663 = vmatprep.mubr.f32.mxu0 0.0
    %664 = vmatmul.mubr.f32.gmra.mxu0 %v295
    %v665 = vpop.f32.mrf.mxu0
    %v666 = vadd.f32 %v394, %v665
    %v667 = vpop.f32.mrf.mxu0
    %668 = vmatprep.mubr.f32.mxu0 0.0
    %669 = vmatmul.mubr.f32.gmra.mxu0 %v300
    %v670 = vpop.f32.mrf.mxu0
    %v671 = vadd.f32 %v394, %v670
    %v672 = vpop.f32.mrf.mxu0
    %673 = vmatprep.mubr.f32.mxu0 0.0
    %674 = vmatmul.mubr.f32.gmra.mxu0 %v305
    %v675 = vpop.f32.mrf.mxu0
    %v676 = vadd.f32 %v394, %v675
    %v677 = vpop.f32.mrf.mxu0
    %678 = vmatprep.mubr.f32.mxu0 0.0
    %679 = vmatmul.mubr.f32.gmra.mxu0 %v310
    %v680 = vpop.f32.mrf.mxu0
    %v681 = vadd.f32 %v394, %v680
    %v682 = vpop.f32.mrf.mxu0
    %683 = vmatprep.mubr.f32.mxu0 0.0
    %684 = vmatmul.mubr.f32.gmra.mxu0 %v315
    %v685 = vpop.f32.mrf.mxu0
    %v686 = vadd.f32 %v394, %v685
    %v687 = vpop.f32.mrf.mxu0
    %688 = vmatprep.mubr.f32.mxu0 0.0
    %689 = vmatmul.mubr.f32.gmra.mxu0 %v320
    %v690 = vpop.f32.mrf.mxu0
    %v691 = vadd.f32 %v394, %v690
    %v692 = vpop.f32.mrf.mxu0
    %693 = vmatprep.mubr.f32.mxu0 0.0
    %694 = vmatmul.mubr.f32.gmra.mxu0 %v325
    %v695 = vpop.f32.mrf.mxu0
    %v696 = vadd.f32 %v394, %v695
    %v697 = vpop.f32.mrf.mxu0
    %698 = vmatprep.mubr.f32.mxu0 0.0
    %699 = vmatmul.mubr.f32.gmra.mxu0 %v330
    %v700 = vpop.f32.mrf.mxu0
    %v701 = vadd.f32 %v394, %v700
    %v702 = vpop.f32.mrf.mxu0
    %703 = vdwg.mxu0
    %v704 = vpack.c.bf16 %v471, %v465
    %v705 = vpack.c.bf16 %v483, %v477
    %v706 = vpack.c.bf16 %v495, %v489
    %v707 = vpack.c.bf16 %v507, %v501
    %v708 = vpack.c.bf16 %v519, %v513
    %v709 = vpack.c.bf16 %v531, %v525
    %v710 = vpack.c.bf16 %v543, %v537
    %v711 = vpack.c.bf16 %v555, %v549
    %v712 = vpack.c.bf16 %v473, %v467
    %v713 = vpack.c.bf16 %v485, %v479
    %v714 = vpack.c.bf16 %v497, %v491
    %v715 = vpack.c.bf16 %v509, %v503
    %v716 = vpack.c.bf16 %v521, %v515
    %v717 = vpack.c.bf16 %v533, %v527
    %v718 = vpack.c.bf16 %v545, %v539
    %v719 = vpack.c.bf16 %v557, %v551
    %v728 = vunpack.c.l.b16 %v712
    %v729 = vunpack.c.h.b16 %v712
    %v730 = vunpack.c.l.b16 %v713
    %v731 = vunpack.c.h.b16 %v713
    %v732 = vunpack.c.l.b16 %v714
    %v733 = vunpack.c.h.b16 %v714
    %v734 = vunpack.c.l.b16 %v715
    %v735 = vunpack.c.h.b16 %v715
    %v736 = vunpack.c.l.b16 %v716
    %v737 = vunpack.c.h.b16 %v716
    %v738 = vunpack.c.l.b16 %v717
    %v739 = vunpack.c.h.b16 %v717
    %v740 = vunpack.c.l.b16 %v718
    %v741 = vunpack.c.h.b16 %v718
    %v742 = vunpack.c.l.b16 %v719
    %v743 = vunpack.c.h.b16 %v719
    %v744 = vpack.c.b16 %v728, %v728
    %v745 = vpack.c.b16 %v729, %v729
    %v746 = vpack.c.b16 %v730, %v730
    %v747 = vpack.c.b16 %v731, %v731
    %v748 = vpack.c.b16 %v732, %v732
    %v749 = vpack.c.b16 %v733, %v733
    %v750 = vpack.c.b16 %v734, %v734
    %v751 = vpack.c.b16 %v735, %v735
    %v752 = vpack.c.b16 %v736, %v736
    %v753 = vpack.c.b16 %v737, %v737
    %v754 = vpack.c.b16 %v738, %v738
    %v755 = vpack.c.b16 %v739, %v739
    %v756 = vpack.c.b16 %v740, %v740
    %v757 = vpack.c.b16 %v741, %v741
    %v758 = vpack.c.b16 %v742, %v742
    %v759 = vpack.c.b16 %v743, %v743
    %776 = vst [vmem:[#allocation2] sm:$0xf] %v744
    %777 = vst [vmem:[#allocation2 + $0x4] sm:$0xf] %v745
    %778 = vst [vmem:[#allocation2 + $0x8] sm:$0xf] %v746
    %779 = vst [vmem:[#allocation2 + $0xc] sm:$0xf] %v747
    %780 = vst [vmem:[#allocation2 + $0x10] sm:$0xf] %v748
    %781 = vst [vmem:[#allocation2 + $0x14] sm:$0xf] %v749
    %782 = vst [vmem:[#allocation2 + $0x18] sm:$0xf] %v750
    %783 = vst [vmem:[#allocation2 + $0x1c] sm:$0xf] %v751
    %784 = vst [vmem:[#allocation2 + $0x20] sm:$0xf] %v752
    %785 = vst [vmem:[#allocation2 + $0x24] sm:$0xf] %v753
    %786 = vst [vmem:[#allocation2 + $0x28] sm:$0xf] %v754
    %787 = vst [vmem:[#allocation2 + $0x2c] sm:$0xf] %v755
    %788 = vst [vmem:[#allocation2 + $0x30] sm:$0xf] %v756
    %789 = vst [vmem:[#allocation2 + $0x34] sm:$0xf] %v757
    %790 = vst [vmem:[#allocation2 + $0x38] sm:$0xf] %v758
    %791 = vst [vmem:[#allocation2 + $0x3c] sm:$0xf] %v759
    %v792 = vpack.c.bf16 %v631, %v626
    %v793 = vpack.c.bf16 %v641, %v636
    %v794 = vpack.c.bf16 %v651, %v646
    %v795 = vpack.c.bf16 %v661, %v656
    %v796 = vpack.c.bf16 %v671, %v666
    %v797 = vpack.c.bf16 %v681, %v676
    %v798 = vpack.c.bf16 %v691, %v686
    %v799 = vpack.c.bf16 %v701, %v696
    %v808 = vunpack.c.l.b16 %v792
    %v809 = vunpack.c.h.b16 %v792
    %v810 = vunpack.c.l.b16 %v793
    %v811 = vunpack.c.h.b16 %v793
    %v812 = vunpack.c.l.b16 %v794
    %v813 = vunpack.c.h.b16 %v794
    %v814 = vunpack.c.l.b16 %v795
    %v815 = vunpack.c.h.b16 %v795
    %v816 = vunpack.c.l.b16 %v796
    %v817 = vunpack.c.h.b16 %v796
    %v818 = vunpack.c.l.b16 %v797
    %v819 = vunpack.c.h.b16 %v797
    %v820 = vunpack.c.l.b16 %v798
    %v821 = vunpack.c.h.b16 %v798
    %v822 = vunpack.c.l.b16 %v799
    %v823 = vunpack.c.h.b16 %v799
    %v824 = vpack.c.b16 %v808, %v808
    %v825 = vpack.c.b16 %v809, %v809
    %v826 = vpack.c.b16 %v810, %v810
    %v827 = vpack.c.b16 %v811, %v811
    %v828 = vpack.c.b16 %v812, %v812
    %v829 = vpack.c.b16 %v813, %v813
    %v830 = vpack.c.b16 %v814, %v814
    %v831 = vpack.c.b16 %v815, %v815
    %v832 = vpack.c.b16 %v816, %v816
    %v833 = vpack.c.b16 %v817, %v817
    %v834 = vpack.c.b16 %v818, %v818
    %v835 = vpack.c.b16 %v819, %v819
    %v836 = vpack.c.b16 %v820, %v820
    %v837 = vpack.c.b16 %v821, %v821
    %v838 = vpack.c.b16 %v822, %v822
    %v839 = vpack.c.b16 %v823, %v823
    %856 = vst [vmem:[#allocation3] sm:$0xf] %v824
    %857 = vst [vmem:[#allocation3 + $0x4] sm:$0xf] %v825
    %858 = vst [vmem:[#allocation3 + $0x8] sm:$0xf] %v826
    %859 = vst [vmem:[#allocation3 + $0xc] sm:$0xf] %v827
    %860 = vst [vmem:[#allocation3 + $0x10] sm:$0xf] %v828
    %861 = vst [vmem:[#allocation3 + $0x14] sm:$0xf] %v829
    %862 = vst [vmem:[#allocation3 + $0x18] sm:$0xf] %v830
    %863 = vst [vmem:[#allocation3 + $0x1c] sm:$0xf] %v831
    %864 = vst [vmem:[#allocation3 + $0x20] sm:$0xf] %v832
    %865 = vst [vmem:[#allocation3 + $0x24] sm:$0xf] %v833
    %866 = vst [vmem:[#allocation3 + $0x28] sm:$0xf] %v834
    %867 = vst [vmem:[#allocation3 + $0x2c] sm:$0xf] %v835
    %868 = vst [vmem:[#allocation3 + $0x30] sm:$0xf] %v836
    %869 = vst [vmem:[#allocation3 + $0x34] sm:$0xf] %v837
    %870 = vst [vmem:[#allocation3 + $0x38] sm:$0xf] %v838
    %871 = vst [vmem:[#allocation3 + $0x3c] sm:$0xf] %v839
    %vm872 = vcmask 7168
    %873 = vst.msk [vmem:[#allocation4] sm:$0xff] %vm872, -1e+30
    %874 = vst.msk [vmem:[#allocation4 + $0x8] sm:$0xff] %vm872, -1e+30
    %875 = vst.msk [vmem:[#allocation4 + $0x10] sm:$0xff] %vm872, -1e+30
    %876 = vst.msk [vmem:[#allocation4 + $0x18] sm:$0xff] %vm872, -1e+30
    %877 = vst.msk [vmem:[#allocation4 + $0x20] sm:$0xff] %vm872, -1e+30
    %878 = vst.msk [vmem:[#allocation4 + $0x28] sm:$0xff] %vm872, -1e+30
    %879 = vst.msk [vmem:[#allocation4 + $0x30] sm:$0xff] %vm872, -1e+30
    %880 = vst.msk [vmem:[#allocation4 + $0x38] sm:$0xff] %vm872, -1e+30
    %881 = vst.msk [vmem:[#allocation4 + $0x40] sm:$0xff] %vm872, -1e+30
    %882 = vst.msk [vmem:[#allocation4 + $0x48] sm:$0xff] %vm872, -1e+30
    %883 = vst.msk [vmem:[#allocation4 + $0x50] sm:$0xff] %vm872, -1e+30
    %884 = vst.msk [vmem:[#allocation4 + $0x58] sm:$0xff] %vm872, -1e+30
    %885 = vst.msk [vmem:[#allocation4 + $0x60] sm:$0xff] %vm872, -1e+30
    %886 = vst.msk [vmem:[#allocation4 + $0x68] sm:$0xff] %vm872, -1e+30
    %887 = vst.msk [vmem:[#allocation4 + $0x70] sm:$0xff] %vm872, -1e+30
    %888 = vst.msk [vmem:[#allocation4 + $0x78] sm:$0xff] %vm872, -1e+30
    %889 = vst.msk [vmem:[#allocation5] sm:$0xff] %vm872, 0.0
    %890 = vst.msk [vmem:[#allocation5 + $0x8] sm:$0xff] %vm872, 0.0
    %891 = vst.msk [vmem:[#allocation5 + $0x10] sm:$0xff] %vm872, 0.0
    %892 = vst.msk [vmem:[#allocation5 + $0x18] sm:$0xff] %vm872, 0.0
    %893 = vst.msk [vmem:[#allocation5 + $0x20] sm:$0xff] %vm872, 0.0
    %894 = vst.msk [vmem:[#allocation5 + $0x28] sm:$0xff] %vm872, 0.0
    %895 = vst.msk [vmem:[#allocation5 + $0x30] sm:$0xff] %vm872, 0.0
    %896 = vst.msk [vmem:[#allocation5 + $0x38] sm:$0xff] %vm872, 0.0
    %897 = vst.msk [vmem:[#allocation5 + $0x40] sm:$0xff] %vm872, 0.0
    %898 = vst.msk [vmem:[#allocation5 + $0x48] sm:$0xff] %vm872, 0.0
    %899 = vst.msk [vmem:[#allocation5 + $0x50] sm:$0xff] %vm872, 0.0
    %900 = vst.msk [vmem:[#allocation5 + $0x58] sm:$0xff] %vm872, 0.0
    %901 = vst.msk [vmem:[#allocation5 + $0x60] sm:$0xff] %vm872, 0.0
    %902 = vst.msk [vmem:[#allocation5 + $0x68] sm:$0xff] %vm872, 0.0
    %903 = vst.msk [vmem:[#allocation5 + $0x70] sm:$0xff] %vm872, 0.0
    %904 = vst.msk [vmem:[#allocation5 + $0x78] sm:$0xff] %vm872, 0.0
    %905 = vst [vmem:[#allocation6] sm:$0xff] 0.0
    %906 = vst [vmem:[#allocation6 + $0x8] sm:$0xff] 0.0
    %907 = vst [vmem:[#allocation6 + $0x10] sm:$0xff] 0.0
    %908 = vst [vmem:[#allocation6 + $0x18] sm:$0xff] 0.0
    %909 = vst [vmem:[#allocation6 + $0x20] sm:$0xff] 0.0
    %910 = vst [vmem:[#allocation6 + $0x28] sm:$0xff] 0.0
    %911 = vst [vmem:[#allocation6 + $0x30] sm:$0xff] 0.0
    %912 = vst [vmem:[#allocation6 + $0x38] sm:$0xff] 0.0
    %913 = vst [vmem:[#allocation6 + $0x40] sm:$0xff] 0.0
    %914 = vst [vmem:[#allocation6 + $0x48] sm:$0xff] 0.0
    %915 = vst [vmem:[#allocation6 + $0x50] sm:$0xff] 0.0
    %916 = vst [vmem:[#allocation6 + $0x58] sm:$0xff] 0.0
    %917 = vst [vmem:[#allocation6 + $0x60] sm:$0xff] 0.0
    %918 = vst [vmem:[#allocation6 + $0x68] sm:$0xff] 0.0
    %919 = vst [vmem:[#allocation6 + $0x70] sm:$0xff] 0.0
    %920 = vst [vmem:[#allocation6 + $0x78] sm:$0xff] 0.0
    %v921 = vld [vmem:[#allocation2] sm:$0xf]
    %v922 = vld [vmem:[#allocation2 + $0x4] sm:$0xf]
    %v923 = vld [vmem:[#allocation2 + $0x8] sm:$0xf]
    %v924 = vld [vmem:[#allocation2 + $0xc] sm:$0xf]
    %v925 = vld [vmem:[#allocation2 + $0x10] sm:$0xf]
    %v926 = vld [vmem:[#allocation2 + $0x14] sm:$0xf]
    %v927 = vld [vmem:[#allocation2 + $0x18] sm:$0xf]
    %v928 = vld [vmem:[#allocation2 + $0x1c] sm:$0xf]
    %v929 = vld [vmem:[#allocation2 + $0x20] sm:$0xf]
    %v930 = vld [vmem:[#allocation2 + $0x24] sm:$0xf]
    %v931 = vld [vmem:[#allocation2 + $0x28] sm:$0xf]
    %v932 = vld [vmem:[#allocation2 + $0x2c] sm:$0xf]
    %v933 = vld [vmem:[#allocation2 + $0x30] sm:$0xf]
    %v934 = vld [vmem:[#allocation2 + $0x34] sm:$0xf]
    %v935 = vld [vmem:[#allocation2 + $0x38] sm:$0xf]
    %v936 = vld [vmem:[#allocation2 + $0x3c] sm:$0xf]
    %v937 = vld [vmem:[#allocation3] sm:$0xf]
    %v938 = vld [vmem:[#allocation3 + $0x4] sm:$0xf]
    %v939 = vld [vmem:[#allocation3 + $0x8] sm:$0xf]
    %v940 = vld [vmem:[#allocation3 + $0xc] sm:$0xf]
    %v941 = vld [vmem:[#allocation3 + $0x10] sm:$0xf]
    %v942 = vld [vmem:[#allocation3 + $0x14] sm:$0xf]
    %v943 = vld [vmem:[#allocation3 + $0x18] sm:$0xf]
    %v944 = vld [vmem:[#allocation3 + $0x1c] sm:$0xf]
    %v945 = vld [vmem:[#allocation3 + $0x20] sm:$0xf]
    %v946 = vld [vmem:[#allocation3 + $0x24] sm:$0xf]
    %v947 = vld [vmem:[#allocation3 + $0x28] sm:$0xf]
    %v948 = vld [vmem:[#allocation3 + $0x2c] sm:$0xf]
    %v949 = vld [vmem:[#allocation3 + $0x30] sm:$0xf]
    %v950 = vld [vmem:[#allocation3 + $0x34] sm:$0xf]
    %v951 = vld [vmem:[#allocation3 + $0x38] sm:$0xf]
    %v952 = vld [vmem:[#allocation3 + $0x3c] sm:$0xf]
    %v953 = vlaneseq
    %v954 = vand.u32 %v953, 127
    %v955 = vstv 0
    %v956 = vadd.s32 %v954, %v955
    %vm957 = vcmp.lt.s32.totalorder %v956, 8
    %v958 = vsel %vm957, 0.0, -1e+30
    %v975 = vunpack.c.l.b16 %v921
    %v976 = vunpack.c.l.b16 %v922
    %v977 = vunpack.c.l.b16 %v923
    %v978 = vunpack.c.l.b16 %v924
    %v979 = vunpack.c.l.b16 %v925
    %v980 = vunpack.c.l.b16 %v926
    %v981 = vunpack.c.l.b16 %v927
    %v982 = vunpack.c.l.b16 %v928
    %v983 = vunpack.c.l.b16 %v929
    %v984 = vunpack.c.l.b16 %v930
    %v985 = vunpack.c.l.b16 %v931
    %v986 = vunpack.c.l.b16 %v932
    %v987 = vunpack.c.l.b16 %v933
    %v988 = vunpack.c.l.b16 %v934
    %v989 = vunpack.c.l.b16 %v935
    %v990 = vunpack.c.l.b16 %v936
    %v991 = vpack.c.b16 %v976, %v975
    %v992 = vpack.c.b16 %v978, %v977
    %v993 = vpack.c.b16 %v980, %v979
    %v994 = vpack.c.b16 %v982, %v981
    %v995 = vpack.c.b16 %v984, %v983
    %v996 = vpack.c.b16 %v986, %v985
    %v997 = vpack.c.b16 %v988, %v987
    %v998 = vpack.c.b16 %v990, %v989
    %1007 = vmatprep.subr.bf16.mxu0 0
    %1008 = vmatpush1.bf16.xpose.msra.mxu0 %v998
    %1009 = vmatprep.subr.bf16.mxu0 0
    %1010 = vmatpush1.bf16.xpose.msra.mxu0 %v997
    %1011 = vmatprep.subr.bf16.mxu0 0
    %1012 = vmatpush1.bf16.xpose.msra.mxu0 %v996
    %1013 = vmatprep.subr.bf16.mxu0 0
    %1014 = vmatpush1.bf16.xpose.msra.mxu0 %v995
    %1015 = vmatprep.subr.bf16.mxu0 0
    %1016 = vmatpush1.bf16.xpose.msra.mxu0 %v994
    %1017 = vmatprep.subr.bf16.mxu0 0
    %1018 = vmatpush1.bf16.xpose.msra.mxu0 %v993
    %1019 = vmatprep.subr.bf16.mxu0 0
    %1020 = vmatpush1.bf16.xpose.msra.mxu0 %v992
    %1021 = vmatprep.subr.bf16.mxu0 0
    %1022 = vmatpush1.bf16.xpose.msra.mxu0 %v991
    %1023 = vmatprep.subr.bf16.mxu0 0
    %1024 = vmatpush2.bf16.xpose.msra.mxu0 0
    %1025 = vmatprep.subr.bf16.mxu0 0
    %1026 = vmatpush2.bf16.xpose.msra.mxu0 0
    %1027 = vmatprep.subr.bf16.mxu0 0
    %1028 = vmatpush2.bf16.xpose.msra.mxu0 0
    %1029 = vmatprep.subr.bf16.mxu0 0
    %1030 = vmatpush2.bf16.xpose.msra.mxu0 0
    %1031 = vmatprep.subr.bf16.mxu0 0
    %1032 = vmatpush2.bf16.xpose.msra.mxu0 0
    %1033 = vmatprep.subr.bf16.mxu0 0
    %1034 = vmatpush2.bf16.xpose.msra.mxu0 0
    %1035 = vmatprep.subr.bf16.mxu0 0
    %1036 = vmatpush2.bf16.xpose.msra.mxu0 0
    %1037 = vmatprep.subr.bf16.mxu0 0
    %1038 = vmatpush2.bf16.xpose.msra.mxu0 0
    %1039 = vmatprep.mubr.bf16.mxu0 0
    %1040 = vmatmul.mubr.bf16.gmra.mxu0 %v704
    %v1041 = vpop.f32.mrf.mxu0
    %v1042 = vadd.f32 %v958, %v1041
    %v1043 = vpop.f32.mrf.mxu0
    %v1044 = vpop.f32.mrf.mxu0
    %v1045 = vadd.f32 %v958, %v1044
    %v1046 = vpop.f32.mrf.mxu0
    %1047 = vmatprep.mubr.bf16.mxu0 0
    %1048 = vmatmul.mubr.bf16.gmra.mxu0 %v705
    %v1049 = vpop.f32.mrf.mxu0
    %v1050 = vadd.f32 %v958, %v1049
    %v1051 = vpop.f32.mrf.mxu0
    %v1052 = vpop.f32.mrf.mxu0
    %v1053 = vadd.f32 %v958, %v1052
    %v1054 = vpop.f32.mrf.mxu0
    %1055 = vmatprep.mubr.bf16.mxu0 0
    %1056 = vmatmul.mubr.bf16.gmra.mxu0 %v706
    %v1057 = vpop.f32.mrf.mxu0
    %v1058 = vadd.f32 %v958, %v1057
    %v1059 = vpop.f32.mrf.mxu0
    %v1060 = vpop.f32.mrf.mxu0
    %v1061 = vadd.f32 %v958, %v1060
    %v1062 = vpop.f32.mrf.mxu0
    %1063 = vmatprep.mubr.bf16.mxu0 0
    %1064 = vmatmul.mubr.bf16.gmra.mxu0 %v707
    %v1065 = vpop.f32.mrf.mxu0
    %v1066 = vadd.f32 %v958, %v1065
    %v1067 = vpop.f32.mrf.mxu0
    %v1068 = vpop.f32.mrf.mxu0
    %v1069 = vadd.f32 %v958, %v1068
    %v1070 = vpop.f32.mrf.mxu0
    %1071 = vmatprep.mubr.bf16.mxu0 0
    %1072 = vmatmul.mubr.bf16.gmra.mxu0 %v708
    %v1073 = vpop.f32.mrf.mxu0
    %v1074 = vadd.f32 %v958, %v1073
    %v1075 = vpop.f32.mrf.mxu0
    %v1076 = vpop.f32.mrf.mxu0
    %v1077 = vadd.f32 %v958, %v1076
    %v1078 = vpop.f32.mrf.mxu0
    %1079 = vmatprep.mubr.bf16.mxu0 0
    %1080 = vmatmul.mubr.bf16.gmra.mxu0 %v709
    %v1081 = vpop.f32.mrf.mxu0
    %v1082 = vadd.f32 %v958, %v1081
    %v1083 = vpop.f32.mrf.mxu0
    %v1084 = vpop.f32.mrf.mxu0
    %v1085 = vadd.f32 %v958, %v1084
    %v1086 = vpop.f32.mrf.mxu0
    %1087 = vmatprep.mubr.bf16.mxu0 0
    %1088 = vmatmul.mubr.bf16.gmra.mxu0 %v710
    %v1089 = vpop.f32.mrf.mxu0
    %v1090 = vadd.f32 %v958, %v1089
    %v1091 = vpop.f32.mrf.mxu0
    %v1092 = vpop.f32.mrf.mxu0
    %v1093 = vadd.f32 %v958, %v1092
    %v1094 = vpop.f32.mrf.mxu0
    %1095 = vmatprep.mubr.bf16.mxu0 0
    %1096 = vmatmul.mubr.bf16.gmra.mxu0 %v711
    %v1097 = vpop.f32.mrf.mxu0
    %v1098 = vadd.f32 %v958, %v1097
    %v1099 = vpop.f32.mrf.mxu0
    %v1100 = vpop.f32.mrf.mxu0
    %v1101 = vadd.f32 %v958, %v1100
    %v1102 = vpop.f32.mrf.mxu0
    %1103 = vdwg.mxu0
    %v1104 = vld [vmem:[#allocation4] sm:$0xff]
    %v1105 = vld [vmem:[#allocation4 + $0x8] sm:$0xff]
    %v1106 = vld [vmem:[#allocation4 + $0x10] sm:$0xff]
    %v1107 = vld [vmem:[#allocation4 + $0x18] sm:$0xff]
    %v1108 = vld [vmem:[#allocation4 + $0x20] sm:$0xff]
    %v1109 = vld [vmem:[#allocation4 + $0x28] sm:$0xff]
    %v1110 = vld [vmem:[#allocation4 + $0x30] sm:$0xff]
    %v1111 = vld [vmem:[#allocation4 + $0x38] sm:$0xff]
    %v1112 = vld [vmem:[#allocation4 + $0x40] sm:$0xff]
    %v1113 = vld [vmem:[#allocation4 + $0x48] sm:$0xff]
    %v1114 = vld [vmem:[#allocation4 + $0x50] sm:$0xff]
    %v1115 = vld [vmem:[#allocation4 + $0x58] sm:$0xff]
    %v1116 = vld [vmem:[#allocation4 + $0x60] sm:$0xff]
    %v1117 = vld [vmem:[#allocation4 + $0x68] sm:$0xff]
    %v1118 = vld [vmem:[#allocation4 + $0x70] sm:$0xff]
    %v1119 = vld [vmem:[#allocation4 + $0x78] sm:$0xff]
    %1120 = vmax.xlane.f32.xlu0 %v1042
    %v1121 = vpop.xlane.xlu0 %1120
    %1122 = vmax.xlane.f32.xlu0 %v1045
    %v1123 = vpop.xlane.xlu0 %1122
    %1124 = vmax.xlane.f32.xlu0 %v1050
    %v1125 = vpop.xlane.xlu0 %1124
    %1126 = vmax.xlane.f32.xlu0 %v1053
    %v1127 = vpop.xlane.xlu0 %1126
    %1128 = vmax.xlane.f32.xlu0 %v1058
    %v1129 = vpop.xlane.xlu0 %1128
    %1130 = vmax.xlane.f32.xlu0 %v1061
    %v1131 = vpop.xlane.xlu0 %1130
    %1132 = vmax.xlane.f32.xlu0 %v1066
    %v1133 = vpop.xlane.xlu0 %1132
    %1134 = vmax.xlane.f32.xlu0 %v1069
    %v1135 = vpop.xlane.xlu0 %1134
    %1136 = vmax.xlane.f32.xlu0 %v1074
    %v1137 = vpop.xlane.xlu0 %1136
    %1138 = vmax.xlane.f32.xlu0 %v1077
    %v1139 = vpop.xlane.xlu0 %1138
    %1140 = vmax.xlane.f32.xlu0 %v1082
    %v1141 = vpop.xlane.xlu0 %1140
    %1142 = vmax.xlane.f32.xlu0 %v1085
    %v1143 = vpop.xlane.xlu0 %1142
    %1144 = vmax.xlane.f32.xlu0 %v1090
    %v1145 = vpop.xlane.xlu0 %1144
    %1146 = vmax.xlane.f32.xlu0 %v1093
    %v1147 = vpop.xlane.xlu0 %1146
    %1148 = vmax.xlane.f32.xlu0 %v1098
    %v1149 = vpop.xlane.xlu0 %1148
    %1150 = vmax.xlane.f32.xlu0 %v1101
    %v1151 = vpop.xlane.xlu0 %1150
    %v1152 = vmax.f32 %v1104, %v1121
    %v1153 = vmax.f32 %v1105, %v1123
    %v1154 = vmax.f32 %v1106, %v1125
    %v1155 = vmax.f32 %v1107, %v1127
    %v1156 = vmax.f32 %v1108, %v1129
    %v1157 = vmax.f32 %v1109, %v1131
    %v1158 = vmax.f32 %v1110, %v1133
    %v1159 = vmax.f32 %v1111, %v1135
    %v1160 = vmax.f32 %v1112, %v1137
    %v1161 = vmax.f32 %v1113, %v1139
    %v1162 = vmax.f32 %v1114, %v1141
    %v1163 = vmax.f32 %v1115, %v1143
    %v1164 = vmax.f32 %v1116, %v1145
    %v1165 = vmax.f32 %v1117, %v1147
    %v1166 = vmax.f32 %v1118, %v1149
    %v1167 = vmax.f32 %v1119, %v1151
    %v1168 = vsub.f32 %v1104, %v1152
    %v1169 = vsub.f32 %v1105, %v1153
    %v1170 = vsub.f32 %v1106, %v1154
    %v1171 = vsub.f32 %v1107, %v1155
    %v1172 = vsub.f32 %v1108, %v1156
    %v1173 = vsub.f32 %v1109, %v1157
    %v1174 = vsub.f32 %v1110, %v1158
    %v1175 = vsub.f32 %v1111, %v1159
    %v1176 = vsub.f32 %v1112, %v1160
    %v1177 = vsub.f32 %v1113, %v1161
    %v1178 = vsub.f32 %v1114, %v1162
    %v1179 = vsub.f32 %v1115, %v1163
    %v1180 = vsub.f32 %v1116, %v1164
    %v1181 = vsub.f32 %v1117, %v1165
    %v1182 = vsub.f32 %v1118, %v1166
    %v1183 = vsub.f32 %v1119, %v1167
    %v1184 = vmul.f32 %v1168, 1.442695
    %v1185 = vpow.pop %v1184
    %v1186 = vmul.f32 %v1169, 1.442695
    %v1187 = vpow.pop %v1186
    %v1188 = vmul.f32 %v1170, 1.442695
    %v1189 = vpow.pop %v1188
    %v1190 = vmul.f32 %v1171, 1.442695
    %v1191 = vpow.pop %v1190
    %v1192 = vmul.f32 %v1172, 1.442695
    %v1193 = vpow.pop %v1192
    %v1194 = vmul.f32 %v1173, 1.442695
    %v1195 = vpow.pop %v1194
    %v1196 = vmul.f32 %v1174, 1.442695
    %v1197 = vpow.pop %v1196
    %v1198 = vmul.f32 %v1175, 1.442695
    %v1199 = vpow.pop %v1198
    %v1200 = vmul.f32 %v1176, 1.442695
    %v1201 = vpow.pop %v1200
    %v1202 = vmul.f32 %v1177, 1.442695
    %v1203 = vpow.pop %v1202
    %v1204 = vmul.f32 %v1178, 1.442695
    %v1205 = vpow.pop %v1204
    %v1206 = vmul.f32 %v1179, 1.442695
    %v1207 = vpow.pop %v1206
    %v1208 = vmul.f32 %v1180, 1.442695
    %v1209 = vpow.pop %v1208
    %v1210 = vmul.f32 %v1181, 1.442695
    %v1211 = vpow.pop %v1210
    %v1212 = vmul.f32 %v1182, 1.442695
    %v1213 = vpow.pop %v1212
    %v1214 = vmul.f32 %v1183, 1.442695
    %v1215 = vpow.pop %v1214
    %1217 = vset.pattern.permute.xlu0 0
    %1218 = vperm.xlu0 %1217, %v1152
    %v1219 = vpop.permute.xlu0 %1218
    %1222 = vset.pattern.permute.xlu0 0
    %1223 = vperm.xlu0 %1222, %v1153
    %v1224 = vpop.permute.xlu0 %1223
    %1227 = vset.pattern.permute.xlu0 0
    %1228 = vperm.xlu0 %1227, %v1154
    %v1229 = vpop.permute.xlu0 %1228
    %1232 = vset.pattern.permute.xlu0 0
    %1233 = vperm.xlu0 %1232, %v1155
    %v1234 = vpop.permute.xlu0 %1233
    %1237 = vset.pattern.permute.xlu0 0
    %1238 = vperm.xlu0 %1237, %v1156
    %v1239 = vpop.permute.xlu0 %1238
    %1242 = vset.pattern.permute.xlu0 0
    %1243 = vperm.xlu0 %1242, %v1157
    %v1244 = vpop.permute.xlu0 %1243
    %1247 = vset.pattern.permute.xlu0 0
    %1248 = vperm.xlu0 %1247, %v1158
    %v1249 = vpop.permute.xlu0 %1248
    %1252 = vset.pattern.permute.xlu0 0
    %1253 = vperm.xlu0 %1252, %v1159
    %v1254 = vpop.permute.xlu0 %1253
    %1257 = vset.pattern.permute.xlu0 0
    %1258 = vperm.xlu0 %1257, %v1160
    %v1259 = vpop.permute.xlu0 %1258
    %1262 = vset.pattern.permute.xlu0 0
    %1263 = vperm.xlu0 %1262, %v1161
    %v1264 = vpop.permute.xlu0 %1263
    %1267 = vset.pattern.permute.xlu0 0
    %1268 = vperm.xlu0 %1267, %v1162
    %v1269 = vpop.permute.xlu0 %1268
    %1272 = vset.pattern.permute.xlu0 0
    %1273 = vperm.xlu0 %1272, %v1163
    %v1274 = vpop.permute.xlu0 %1273
    %1277 = vset.pattern.permute.xlu0 0
    %1278 = vperm.xlu0 %1277, %v1164
    %v1279 = vpop.permute.xlu0 %1278
    %1282 = vset.pattern.permute.xlu0 0
    %1283 = vperm.xlu0 %1282, %v1165
    %v1284 = vpop.permute.xlu0 %1283
    %1287 = vset.pattern.permute.xlu0 0
    %1288 = vperm.xlu0 %1287, %v1166
    %v1289 = vpop.permute.xlu0 %1288
    %1292 = vset.pattern.permute.xlu0 0
    %1293 = vperm.xlu0 %1292, %v1167
    %v1294 = vpop.permute.xlu0 %1293
    %v1296 = vsub.f32 %v1042, %v1219
    %v1297 = vsub.f32 %v1045, %v1224
    %v1298 = vsub.f32 %v1050, %v1229
    %v1299 = vsub.f32 %v1053, %v1234
    %v1300 = vsub.f32 %v1058, %v1239
    %v1301 = vsub.f32 %v1061, %v1244
    %v1302 = vsub.f32 %v1066, %v1249
    %v1303 = vsub.f32 %v1069, %v1254
    %v1304 = vsub.f32 %v1074, %v1259
    %v1305 = vsub.f32 %v1077, %v1264
    %v1306 = vsub.f32 %v1082, %v1269
    %v1307 = vsub.f32 %v1085, %v1274
    %v1308 = vsub.f32 %v1090, %v1279
    %v1309 = vsub.f32 %v1093, %v1284
    %v1310 = vsub.f32 %v1098, %v1289
    %v1311 = vsub.f32 %v1101, %v1294
    %v1312 = vmul.f32 %v1296, 1.442695
    %v1313 = vpow.pop %v1312
    %v1314 = vmul.f32 %v1297, 1.442695
    %v1315 = vpow.pop %v1314
    %v1316 = vmul.f32 %v1298, 1.442695
    %v1317 = vpow.pop %v1316
    %v1318 = vmul.f32 %v1299, 1.442695
    %v1319 = vpow.pop %v1318
    %v1320 = vmul.f32 %v1300, 1.442695
    %v1321 = vpow.pop %v1320
    %v1322 = vmul.f32 %v1301, 1.442695
    %v1323 = vpow.pop %v1322
    %v1324 = vmul.f32 %v1302, 1.442695
    %v1325 = vpow.pop %v1324
    %v1326 = vmul.f32 %v1303, 1.442695
    %v1327 = vpow.pop %v1326
    %v1328 = vmul.f32 %v1304, 1.442695
    %v1329 = vpow.pop %v1328
    %v1330 = vmul.f32 %v1305, 1.442695
    %v1331 = vpow.pop %v1330
    %v1332 = vmul.f32 %v1306, 1.442695
    %v1333 = vpow.pop %v1332
    %v1334 = vmul.f32 %v1307, 1.442695
    %v1335 = vpow.pop %v1334
    %v1336 = vmul.f32 %v1308, 1.442695
    %v1337 = vpow.pop %v1336
    %v1338 = vmul.f32 %v1309, 1.442695
    %v1339 = vpow.pop %v1338
    %v1340 = vmul.f32 %v1310, 1.442695
    %v1341 = vpow.pop %v1340
    %v1342 = vmul.f32 %v1311, 1.442695
    %v1343 = vpow.pop %v1342
    %v1344 = vld [vmem:[#allocation5] sm:$0xff]
    %v1345 = vld [vmem:[#allocation5 + $0x8] sm:$0xff]
    %v1346 = vld [vmem:[#allocation5 + $0x10] sm:$0xff]
    %v1347 = vld [vmem:[#allocation5 + $0x18] sm:$0xff]
    %v1348 = vld [vmem:[#allocation5 + $0x20] sm:$0xff]
    %v1349 = vld [vmem:[#allocation5 + $0x28] sm:$0xff]
    %v1350 = vld [vmem:[#allocation5 + $0x30] sm:$0xff]
    %v1351 = vld [vmem:[#allocation5 + $0x38] sm:$0xff]
    %v1352 = vld [vmem:[#allocation5 + $0x40] sm:$0xff]
    %v1353 = vld [vmem:[#allocation5 + $0x48] sm:$0xff]
    %v1354 = vld [vmem:[#allocation5 + $0x50] sm:$0xff]
    %v1355 = vld [vmem:[#allocation5 + $0x58] sm:$0xff]
    %v1356 = vld [vmem:[#allocation5 + $0x60] sm:$0xff]
    %v1357 = vld [vmem:[#allocation5 + $0x68] sm:$0xff]
    %v1358 = vld [vmem:[#allocation5 + $0x70] sm:$0xff]
    %v1359 = vld [vmem:[#allocation5 + $0x78] sm:$0xff]
    %v1360 = vmul.f32 %v1185, %v1344
    %v1361 = vmul.f32 %v1187, %v1345
    %v1362 = vmul.f32 %v1189, %v1346
    %v1363 = vmul.f32 %v1191, %v1347
    %v1364 = vmul.f32 %v1193, %v1348
    %v1365 = vmul.f32 %v1195, %v1349
    %v1366 = vmul.f32 %v1197, %v1350
    %v1367 = vmul.f32 %v1199, %v1351
    %v1368 = vmul.f32 %v1201, %v1352
    %v1369 = vmul.f32 %v1203, %v1353
    %v1370 = vmul.f32 %v1205, %v1354
    %v1371 = vmul.f32 %v1207, %v1355
    %v1372 = vmul.f32 %v1209, %v1356
    %v1373 = vmul.f32 %v1211, %v1357
    %v1374 = vmul.f32 %v1213, %v1358
    %v1375 = vmul.f32 %v1215, %v1359
    %1376 = vadd.xlane.f32.xlu0 %v1313
    %v1377 = vpop.xlane.xlu0 %1376
    %1378 = vadd.xlane.f32.xlu0 %v1315
    %v1379 = vpop.xlane.xlu0 %1378
    %1380 = vadd.xlane.f32.xlu0 %v1317
    %v1381 = vpop.xlane.xlu0 %1380
    %1382 = vadd.xlane.f32.xlu0 %v1319
    %v1383 = vpop.xlane.xlu0 %1382
    %1384 = vadd.xlane.f32.xlu0 %v1321
    %v1385 = vpop.xlane.xlu0 %1384
    %1386 = vadd.xlane.f32.xlu0 %v1323
    %v1387 = vpop.xlane.xlu0 %1386
    %1388 = vadd.xlane.f32.xlu0 %v1325
    %v1389 = vpop.xlane.xlu0 %1388
    %1390 = vadd.xlane.f32.xlu0 %v1327
    %v1391 = vpop.xlane.xlu0 %1390
    %1392 = vadd.xlane.f32.xlu0 %v1329
    %v1393 = vpop.xlane.xlu0 %1392
    %1394 = vadd.xlane.f32.xlu0 %v1331
    %v1395 = vpop.xlane.xlu0 %1394
    %1396 = vadd.xlane.f32.xlu0 %v1333
    %v1397 = vpop.xlane.xlu0 %1396
    %1398 = vadd.xlane.f32.xlu0 %v1335
    %v1399 = vpop.xlane.xlu0 %1398
    %1400 = vadd.xlane.f32.xlu0 %v1337
    %v1401 = vpop.xlane.xlu0 %1400
    %1402 = vadd.xlane.f32.xlu0 %v1339
    %v1403 = vpop.xlane.xlu0 %1402
    %1404 = vadd.xlane.f32.xlu0 %v1341
    %v1405 = vpop.xlane.xlu0 %1404
    %1406 = vadd.xlane.f32.xlu0 %v1343
    %v1407 = vpop.xlane.xlu0 %1406
    %v1408 = vadd.f32 %v1360, %v1377
    %v1409 = vadd.f32 %v1361, %v1379
    %v1410 = vadd.f32 %v1362, %v1381
    %v1411 = vadd.f32 %v1363, %v1383
    %v1412 = vadd.f32 %v1364, %v1385
    %v1413 = vadd.f32 %v1365, %v1387
    %v1414 = vadd.f32 %v1366, %v1389
    %v1415 = vadd.f32 %v1367, %v1391
    %v1416 = vadd.f32 %v1368, %v1393
    %v1417 = vadd.f32 %v1369, %v1395
    %v1418 = vadd.f32 %v1370, %v1397
    %v1419 = vadd.f32 %v1371, %v1399
    %v1420 = vadd.f32 %v1372, %v1401
    %v1421 = vadd.f32 %v1373, %v1403
    %v1422 = vadd.f32 %v1374, %v1405
    %v1423 = vadd.f32 %v1375, %v1407
    %1424 = vst.msk [vmem:[#allocation5] sm:$0xff] %vm872, %v1408
    %1425 = vst.msk [vmem:[#allocation5 + $0x8] sm:$0xff] %vm872, %v1409
    %1426 = vst.msk [vmem:[#allocation5 + $0x10] sm:$0xff] %vm872, %v1410
    %1427 = vst.msk [vmem:[#allocation5 + $0x18] sm:$0xff] %vm872, %v1411
    %1428 = vst.msk [vmem:[#allocation5 + $0x20] sm:$0xff] %vm872, %v1412
    %1429 = vst.msk [vmem:[#allocation5 + $0x28] sm:$0xff] %vm872, %v1413
    %1430 = vst.msk [vmem:[#allocation5 + $0x30] sm:$0xff] %vm872, %v1414
    %1431 = vst.msk [vmem:[#allocation5 + $0x38] sm:$0xff] %vm872, %v1415
    %1432 = vst.msk [vmem:[#allocation5 + $0x40] sm:$0xff] %vm872, %v1416
    %1433 = vst.msk [vmem:[#allocation5 + $0x48] sm:$0xff] %vm872, %v1417
    %1434 = vst.msk [vmem:[#allocation5 + $0x50] sm:$0xff] %vm872, %v1418
    %1435 = vst.msk [vmem:[#allocation5 + $0x58] sm:$0xff] %vm872, %v1419
    %1436 = vst.msk [vmem:[#allocation5 + $0x60] sm:$0xff] %vm872, %v1420
    %1437 = vst.msk [vmem:[#allocation5 + $0x68] sm:$0xff] %vm872, %v1421
    %1438 = vst.msk [vmem:[#allocation5 + $0x70] sm:$0xff] %vm872, %v1422
    %1439 = vst.msk [vmem:[#allocation5 + $0x78] sm:$0xff] %vm872, %v1423
    %v1440 = vld [vmem:[#allocation6] sm:$0xff]
    %v1441 = vld [vmem:[#allocation6 + $0x8] sm:$0xff]
    %v1442 = vld [vmem:[#allocation6 + $0x10] sm:$0xff]
    %v1443 = vld [vmem:[#allocation6 + $0x18] sm:$0xff]
    %v1444 = vld [vmem:[#allocation6 + $0x20] sm:$0xff]
    %v1445 = vld [vmem:[#allocation6 + $0x28] sm:$0xff]
    %v1446 = vld [vmem:[#allocation6 + $0x30] sm:$0xff]
    %v1447 = vld [vmem:[#allocation6 + $0x38] sm:$0xff]
    %v1448 = vld [vmem:[#allocation6 + $0x40] sm:$0xff]
    %v1449 = vld [vmem:[#allocation6 + $0x48] sm:$0xff]
    %v1450 = vld [vmem:[#allocation6 + $0x50] sm:$0xff]
    %v1451 = vld [vmem:[#allocation6 + $0x58] sm:$0xff]
    %v1452 = vld [vmem:[#allocation6 + $0x60] sm:$0xff]
    %v1453 = vld [vmem:[#allocation6 + $0x68] sm:$0xff]
    %v1454 = vld [vmem:[#allocation6 + $0x70] sm:$0xff]
    %v1455 = vld [vmem:[#allocation6 + $0x78] sm:$0xff]
    %1457 = vset.pattern.permute.xlu0 0
    %1458 = vperm.xlu0 %1457, %v1185
    %v1459 = vpop.permute.xlu0 %1458
    %1462 = vset.pattern.permute.xlu0 0
    %1463 = vperm.xlu0 %1462, %v1187
    %v1464 = vpop.permute.xlu0 %1463
    %1467 = vset.pattern.permute.xlu0 0
    %1468 = vperm.xlu0 %1467, %v1189
    %v1469 = vpop.permute.xlu0 %1468
    %1472 = vset.pattern.permute.xlu0 0
    %1473 = vperm.xlu0 %1472, %v1191
    %v1474 = vpop.permute.xlu0 %1473
    %1477 = vset.pattern.permute.xlu0 0
    %1478 = vperm.xlu0 %1477, %v1193
    %v1479 = vpop.permute.xlu0 %1478
    %1482 = vset.pattern.permute.xlu0 0
    %1483 = vperm.xlu0 %1482, %v1195
    %v1484 = vpop.permute.xlu0 %1483
    %1487 = vset.pattern.permute.xlu0 0
    %1488 = vperm.xlu0 %1487, %v1197
    %v1489 = vpop.permute.xlu0 %1488
    %1492 = vset.pattern.permute.xlu0 0
    %1493 = vperm.xlu0 %1492, %v1199
    %v1494 = vpop.permute.xlu0 %1493
    %1497 = vset.pattern.permute.xlu0 0
    %1498 = vperm.xlu0 %1497, %v1201
    %v1499 = vpop.permute.xlu0 %1498
    %1502 = vset.pattern.permute.xlu0 0
    %1503 = vperm.xlu0 %1502, %v1203
    %v1504 = vpop.permute.xlu0 %1503
    %1507 = vset.pattern.permute.xlu0 0
    %1508 = vperm.xlu0 %1507, %v1205
    %v1509 = vpop.permute.xlu0 %1508
    %1512 = vset.pattern.permute.xlu0 0
    %1513 = vperm.xlu0 %1512, %v1207
    %v1514 = vpop.permute.xlu0 %1513
    %1517 = vset.pattern.permute.xlu0 0
    %1518 = vperm.xlu0 %1517, %v1209
    %v1519 = vpop.permute.xlu0 %1518
    %1522 = vset.pattern.permute.xlu0 0
    %1523 = vperm.xlu0 %1522, %v1211
    %v1524 = vpop.permute.xlu0 %1523
    %1527 = vset.pattern.permute.xlu0 0
    %1528 = vperm.xlu0 %1527, %v1213
    %v1529 = vpop.permute.xlu0 %1528
    %1532 = vset.pattern.permute.xlu0 0
    %1533 = vperm.xlu0 %1532, %v1215
    %v1534 = vpop.permute.xlu0 %1533
    %v1536 = vmul.f32 %v1459, %v1440
    %v1537 = vmul.f32 %v1464, %v1441
    %v1538 = vmul.f32 %v1469, %v1442
    %v1539 = vmul.f32 %v1474, %v1443
    %v1540 = vmul.f32 %v1479, %v1444
    %v1541 = vmul.f32 %v1484, %v1445
    %v1542 = vmul.f32 %v1489, %v1446
    %v1543 = vmul.f32 %v1494, %v1447
    %v1544 = vmul.f32 %v1499, %v1448
    %v1545 = vmul.f32 %v1504, %v1449
    %v1546 = vmul.f32 %v1509, %v1450
    %v1547 = vmul.f32 %v1514, %v1451
    %v1548 = vmul.f32 %v1519, %v1452
    %v1549 = vmul.f32 %v1524, %v1453
    %v1550 = vmul.f32 %v1529, %v1454
    %v1551 = vmul.f32 %v1534, %v1455
    %v1552 = vpack.c.bf16 %v1315, %v1313
    %v1553 = vpack.c.bf16 %v1319, %v1317
    %v1554 = vpack.c.bf16 %v1323, %v1321
    %v1555 = vpack.c.bf16 %v1327, %v1325
    %v1556 = vpack.c.bf16 %v1331, %v1329
    %v1557 = vpack.c.bf16 %v1335, %v1333
    %v1558 = vpack.c.bf16 %v1339, %v1337
    %v1559 = vpack.c.bf16 %v1343, %v1341
    %v1576 = vunpack.c.l.b16 %v937
    %v1577 = vunpack.c.l.b16 %v938
    %v1578 = vunpack.c.l.b16 %v939
    %v1579 = vunpack.c.l.b16 %v940
    %v1580 = vunpack.c.l.b16 %v941
    %v1581 = vunpack.c.l.b16 %v942
    %v1582 = vunpack.c.l.b16 %v943
    %v1583 = vunpack.c.l.b16 %v944
    %v1584 = vunpack.c.l.b16 %v945
    %v1585 = vunpack.c.l.b16 %v946
    %v1586 = vunpack.c.l.b16 %v947
    %v1587 = vunpack.c.l.b16 %v948
    %v1588 = vunpack.c.l.b16 %v949
    %v1589 = vunpack.c.l.b16 %v950
    %v1590 = vunpack.c.l.b16 %v951
    %v1591 = vunpack.c.l.b16 %v952
    %v1592 = vpack.c.b16 %v1577, %v1576
    %v1593 = vpack.c.b16 %v1579, %v1578
    %v1594 = vpack.c.b16 %v1581, %v1580
    %v1595 = vpack.c.b16 %v1583, %v1582
    %v1596 = vpack.c.b16 %v1585, %v1584
    %v1597 = vpack.c.b16 %v1587, %v1586
    %v1598 = vpack.c.b16 %v1589, %v1588
    %v1599 = vpack.c.b16 %v1591, %v1590
    %1608 = vmatprep.subr.bf16.mxu0 0
    %1609 = vmatpush1.bf16.msra.mxu0 %v1599
    %1610 = vmatprep.subr.bf16.mxu0 0
    %1611 = vmatpush1.bf16.msra.mxu0 %v1598
    %1612 = vmatprep.subr.bf16.mxu0 0
    %1613 = vmatpush1.bf16.msra.mxu0 %v1597
    %1614 = vmatprep.subr.bf16.mxu0 0
    %1615 = vmatpush1.bf16.msra.mxu0 %v1596
    %1616 = vmatprep.subr.bf16.mxu0 0
    %1617 = vmatpush1.bf16.msra.mxu0 %v1595
    %1618 = vmatprep.subr.bf16.mxu0 0
    %1619 = vmatpush1.bf16.msra.mxu0 %v1594
    %1620 = vmatprep.subr.bf16.mxu0 0
    %1621 = vmatpush1.bf16.msra.mxu0 %v1593
    %1622 = vmatprep.subr.bf16.mxu0 0
    %1623 = vmatpush1.bf16.msra.mxu0 %v1592
    %1624 = vmatprep.subr.bf16.mxu0 0
    %1625 = vmatpush2.bf16.msra.mxu0 0
    %1626 = vmatprep.subr.bf16.mxu0 0
    %1627 = vmatpush2.bf16.msra.mxu0 0
    %1628 = vmatprep.subr.bf16.mxu0 0
    %1629 = vmatpush2.bf16.msra.mxu0 0
    %1630 = vmatprep.subr.bf16.mxu0 0
    %1631 = vmatpush2.bf16.msra.mxu0 0
    %1632 = vmatprep.subr.bf16.mxu0 0
    %1633 = vmatpush2.bf16.msra.mxu0 0
    %1634 = vmatprep.subr.bf16.mxu0 0
    %1635 = vmatpush2.bf16.msra.mxu0 0
    %1636 = vmatprep.subr.bf16.mxu0 0
    %1637 = vmatpush2.bf16.msra.mxu0 0
    %1638 = vmatprep.subr.bf16.mxu0 0
    %1639 = vmatpush2.bf16.msra.mxu0 0
    %1640 = vmatprep.mubr.bf16.mxu0 0
    %1641 = vmatmul.mubr.bf16.gmra.mxu0 %v1552
    %v1642 = vpop.f32.mrf.mxu0
    %v1643 = vadd.f32 0.0, %v1642
    %v1644 = vpop.f32.mrf.mxu0
    %v1645 = vpop.f32.mrf.mxu0
    %v1646 = vadd.f32 0.0, %v1645
    %v1647 = vpop.f32.mrf.mxu0
    %1648 = vmatprep.mubr.bf16.mxu0 0
    %1649 = vmatmul.mubr.bf16.gmra.mxu0 %v1553
    %v1650 = vpop.f32.mrf.mxu0
    %v1651 = vadd.f32 0.0, %v1650
    %v1652 = vpop.f32.mrf.mxu0
    %v1653 = vpop.f32.mrf.mxu0
    %v1654 = vadd.f32 0.0, %v1653
    %v1655 = vpop.f32.mrf.mxu0
    %1656 = vmatprep.mubr.bf16.mxu0 0
    %1657 = vmatmul.mubr.bf16.gmra.mxu0 %v1554
    %v1658 = vpop.f32.mrf.mxu0
    %v1659 = vadd.f32 0.0, %v1658
    %v1660 = vpop.f32.mrf.mxu0
    %v1661 = vpop.f32.mrf.mxu0
    %v1662 = vadd.f32 0.0, %v1661
    %v1663 = vpop.f32.mrf.mxu0
    %1664 = vmatprep.mubr.bf16.mxu0 0
    %1665 = vmatmul.mubr.bf16.gmra.mxu0 %v1555
    %v1666 = vpop.f32.mrf.mxu0
    %v1667 = vadd.f32 0.0, %v1666
    %v1668 = vpop.f32.mrf.mxu0
    %v1669 = vpop.f32.mrf.mxu0
    %v1670 = vadd.f32 0.0, %v1669
    %v1671 = vpop.f32.mrf.mxu0
    %1672 = vmatprep.mubr.bf16.mxu0 0
    %1673 = vmatmul.mubr.bf16.gmra.mxu0 %v1556
    %v1674 = vpop.f32.mrf.mxu0
    %v1675 = vadd.f32 0.0, %v1674
    %v1676 = vpop.f32.mrf.mxu0
    %v1677 = vpop.f32.mrf.mxu0
    %v1678 = vadd.f32 0.0, %v1677
    %v1679 = vpop.f32.mrf.mxu0
    %1680 = vmatprep.mubr.bf16.mxu0 0
    %1681 = vmatmul.mubr.bf16.gmra.mxu0 %v1557
    %v1682 = vpop.f32.mrf.mxu0
    %v1683 = vadd.f32 0.0, %v1682
    %v1684 = vpop.f32.mrf.mxu0
    %v1685 = vpop.f32.mrf.mxu0
    %v1686 = vadd.f32 0.0, %v1685
    %v1687 = vpop.f32.mrf.mxu0
    %1688 = vmatprep.mubr.bf16.mxu0 0
    %1689 = vmatmul.mubr.bf16.gmra.mxu0 %v1558
    %v1690 = vpop.f32.mrf.mxu0
    %v1691 = vadd.f32 0.0, %v1690
    %v1692 = vpop.f32.mrf.mxu0
    %v1693 = vpop.f32.mrf.mxu0
    %v1694 = vadd.f32 0.0, %v1693
    %v1695 = vpop.f32.mrf.mxu0
    %1696 = vmatprep.mubr.bf16.mxu0 0
    %1697 = vmatmul.mubr.bf16.gmra.mxu0 %v1559
    %v1698 = vpop.f32.mrf.mxu0
    %v1699 = vadd.f32 0.0, %v1698
    %v1700 = vpop.f32.mrf.mxu0
    %v1701 = vpop.f32.mrf.mxu0
    %v1702 = vadd.f32 0.0, %v1701
    %v1703 = vpop.f32.mrf.mxu0
    %1704 = vdwg.mxu0
    %v1705 = vadd.f32 %v1536, %v1643
    %v1706 = vadd.f32 %v1537, %v1646
    %v1707 = vadd.f32 %v1538, %v1651
    %v1708 = vadd.f32 %v1539, %v1654
    %v1709 = vadd.f32 %v1540, %v1659
    %v1710 = vadd.f32 %v1541, %v1662
    %v1711 = vadd.f32 %v1542, %v1667
    %v1712 = vadd.f32 %v1543, %v1670
    %v1713 = vadd.f32 %v1544, %v1675
    %v1714 = vadd.f32 %v1545, %v1678
    %v1715 = vadd.f32 %v1546, %v1683
    %v1716 = vadd.f32 %v1547, %v1686
    %v1717 = vadd.f32 %v1548, %v1691
    %v1718 = vadd.f32 %v1549, %v1694
    %v1719 = vadd.f32 %v1550, %v1699
    %v1720 = vadd.f32 %v1551, %v1702
    %1721 = vst [vmem:[#allocation6] sm:$0xff] %v1705
    %1722 = vst [vmem:[#allocation6 + $0x8] sm:$0xff] %v1706
    %1723 = vst [vmem:[#allocation6 + $0x10] sm:$0xff] %v1707
    %1724 = vst [vmem:[#allocation6 + $0x18] sm:$0xff] %v1708
    %1725 = vst [vmem:[#allocation6 + $0x20] sm:$0xff] %v1709
    %1726 = vst [vmem:[#allocation6 + $0x28] sm:$0xff] %v1710
    %1727 = vst [vmem:[#allocation6 + $0x30] sm:$0xff] %v1711
    %1728 = vst [vmem:[#allocation6 + $0x38] sm:$0xff] %v1712
    %1729 = vst [vmem:[#allocation6 + $0x40] sm:$0xff] %v1713
    %1730 = vst [vmem:[#allocation6 + $0x48] sm:$0xff] %v1714
    %1731 = vst [vmem:[#allocation6 + $0x50] sm:$0xff] %v1715
    %1732 = vst [vmem:[#allocation6 + $0x58] sm:$0xff] %v1716
    %1733 = vst [vmem:[#allocation6 + $0x60] sm:$0xff] %v1717
    %1734 = vst [vmem:[#allocation6 + $0x68] sm:$0xff] %v1718
    %1735 = vst [vmem:[#allocation6 + $0x70] sm:$0xff] %v1719
    %1736 = vst [vmem:[#allocation6 + $0x78] sm:$0xff] %v1720
    %1737 = vst.msk [vmem:[#allocation4] sm:$0xff] %vm872, %v1152
    %1738 = vst.msk [vmem:[#allocation4 + $0x8] sm:$0xff] %vm872, %v1153
    %1739 = vst.msk [vmem:[#allocation4 + $0x10] sm:$0xff] %vm872, %v1154
    %1740 = vst.msk [vmem:[#allocation4 + $0x18] sm:$0xff] %vm872, %v1155
    %1741 = vst.msk [vmem:[#allocation4 + $0x20] sm:$0xff] %vm872, %v1156
    %1742 = vst.msk [vmem:[#allocation4 + $0x28] sm:$0xff] %vm872, %v1157
    %1743 = vst.msk [vmem:[#allocation4 + $0x30] sm:$0xff] %vm872, %v1158
    %1744 = vst.msk [vmem:[#allocation4 + $0x38] sm:$0xff] %vm872, %v1159
    %1745 = vst.msk [vmem:[#allocation4 + $0x40] sm:$0xff] %vm872, %v1160
    %1746 = vst.msk [vmem:[#allocation4 + $0x48] sm:$0xff] %vm872, %v1161
    %1747 = vst.msk [vmem:[#allocation4 + $0x50] sm:$0xff] %vm872, %v1162
    %1748 = vst.msk [vmem:[#allocation4 + $0x58] sm:$0xff] %vm872, %v1163
    %1749 = vst.msk [vmem:[#allocation4 + $0x60] sm:$0xff] %vm872, %v1164
    %1750 = vst.msk [vmem:[#allocation4 + $0x68] sm:$0xff] %vm872, %v1165
    %1751 = vst.msk [vmem:[#allocation4 + $0x70] sm:$0xff] %vm872, %v1166
    %1752 = vst.msk [vmem:[#allocation4 + $0x78] sm:$0xff] %vm872, %v1167
    %v1753 = vld [vmem:[#allocation6] sm:$0xff]
    %v1754 = vld [vmem:[#allocation6 + $0x8] sm:$0xff]
    %v1755 = vld [vmem:[#allocation6 + $0x10] sm:$0xff]
    %v1756 = vld [vmem:[#allocation6 + $0x18] sm:$0xff]
    %v1757 = vld [vmem:[#allocation6 + $0x20] sm:$0xff]
    %v1758 = vld [vmem:[#allocation6 + $0x28] sm:$0xff]
    %v1759 = vld [vmem:[#allocation6 + $0x30] sm:$0xff]
    %v1760 = vld [vmem:[#allocation6 + $0x38] sm:$0xff]
    %v1761 = vld [vmem:[#allocation6 + $0x40] sm:$0xff]
    %v1762 = vld [vmem:[#allocation6 + $0x48] sm:$0xff]
    %v1763 = vld [vmem:[#allocation6 + $0x50] sm:$0xff]
    %v1764 = vld [vmem:[#allocation6 + $0x58] sm:$0xff]
    %v1765 = vld [vmem:[#allocation6 + $0x60] sm:$0xff]
    %v1766 = vld [vmem:[#allocation6 + $0x68] sm:$0xff]
    %v1767 = vld [vmem:[#allocation6 + $0x70] sm:$0xff]
    %v1768 = vld [vmem:[#allocation6 + $0x78] sm:$0xff]
    %v1769 = vld [vmem:[#allocation5] sm:$0xff]
    %v1770 = vld [vmem:[#allocation5 + $0x8] sm:$0xff]
    %v1771 = vld [vmem:[#allocation5 + $0x10] sm:$0xff]
    %v1772 = vld [vmem:[#allocation5 + $0x18] sm:$0xff]
    %v1773 = vld [vmem:[#allocation5 + $0x20] sm:$0xff]
    %v1774 = vld [vmem:[#allocation5 + $0x28] sm:$0xff]
    %v1775 = vld [vmem:[#allocation5 + $0x30] sm:$0xff]
    %v1776 = vld [vmem:[#allocation5 + $0x38] sm:$0xff]
    %v1777 = vld [vmem:[#allocation5 + $0x40] sm:$0xff]
    %v1778 = vld [vmem:[#allocation5 + $0x48] sm:$0xff]
    %v1779 = vld [vmem:[#allocation5 + $0x50] sm:$0xff]
    %v1780 = vld [vmem:[#allocation5 + $0x58] sm:$0xff]
    %v1781 = vld [vmem:[#allocation5 + $0x60] sm:$0xff]
    %v1782 = vld [vmem:[#allocation5 + $0x68] sm:$0xff]
    %v1783 = vld [vmem:[#allocation5 + $0x70] sm:$0xff]
    %v1784 = vld [vmem:[#allocation5 + $0x78] sm:$0xff]
    %v1785 = vrcp.pop %v1769
    %v1786 = vrcp.pop %v1770
    %v1787 = vrcp.pop %v1771
    %v1788 = vrcp.pop %v1772
    %v1789 = vrcp.pop %v1773
    %v1790 = vrcp.pop %v1774
    %v1791 = vrcp.pop %v1775
    %v1792 = vrcp.pop %v1776
    %v1793 = vrcp.pop %v1777
    %v1794 = vrcp.pop %v1778
    %v1795 = vrcp.pop %v1779
    %v1796 = vrcp.pop %v1780
    %v1797 = vrcp.pop %v1781
    %v1798 = vrcp.pop %v1782
    %v1799 = vrcp.pop %v1783
    %v1800 = vrcp.pop %v1784
    %1802 = vset.pattern.permute.xlu0 0
    %1803 = vperm.xlu0 %1802, %v1785
    %v1804 = vpop.permute.xlu0 %1803
    %1807 = vset.pattern.permute.xlu0 0
    %1808 = vperm.xlu0 %1807, %v1786
    %v1809 = vpop.permute.xlu0 %1808
    %1812 = vset.pattern.permute.xlu0 0
    %1813 = vperm.xlu0 %1812, %v1787
    %v1814 = vpop.permute.xlu0 %1813
    %1817 = vset.pattern.permute.xlu0 0
    %1818 = vperm.xlu0 %1817, %v1788
    %v1819 = vpop.permute.xlu0 %1818
    %1822 = vset.pattern.permute.xlu0 0
    %1823 = vperm.xlu0 %1822, %v1789
    %v1824 = vpop.permute.xlu0 %1823
    %1827 = vset.pattern.permute.xlu0 0
    %1828 = vperm.xlu0 %1827, %v1790
    %v1829 = vpop.permute.xlu0 %1828
    %1832 = vset.pattern.permute.xlu0 0
    %1833 = vperm.xlu0 %1832, %v1791
    %v1834 = vpop.permute.xlu0 %1833
    %1837 = vset.pattern.permute.xlu0 0
    %1838 = vperm.xlu0 %1837, %v1792
    %v1839 = vpop.permute.xlu0 %1838
    %1842 = vset.pattern.permute.xlu0 0
    %1843 = vperm.xlu0 %1842, %v1793
    %v1844 = vpop.permute.xlu0 %1843
    %1847 = vset.pattern.permute.xlu0 0
    %1848 = vperm.xlu0 %1847, %v1794
    %v1849 = vpop.permute.xlu0 %1848
    %1852 = vset.pattern.permute.xlu0 0
    %1853 = vperm.xlu0 %1852, %v1795
    %v1854 = vpop.permute.xlu0 %1853
    %1857 = vset.pattern.permute.xlu0 0
    %1858 = vperm.xlu0 %1857, %v1796
    %v1859 = vpop.permute.xlu0 %1858
    %1862 = vset.pattern.permute.xlu0 0
    %1863 = vperm.xlu0 %1862, %v1797
    %v1864 = vpop.permute.xlu0 %1863
    %1867 = vset.pattern.permute.xlu0 0
    %1868 = vperm.xlu0 %1867, %v1798
    %v1869 = vpop.permute.xlu0 %1868
    %1872 = vset.pattern.permute.xlu0 0
    %1873 = vperm.xlu0 %1872, %v1799
    %v1874 = vpop.permute.xlu0 %1873
    %1877 = vset.pattern.permute.xlu0 0
    %1878 = vperm.xlu0 %1877, %v1800
    %v1879 = vpop.permute.xlu0 %1878
    %v1881 = vmul.f32 %v1753, %v1804
    %v1882 = vmul.f32 %v1754, %v1809
    %v1883 = vmul.f32 %v1755, %v1814
    %v1884 = vmul.f32 %v1756, %v1819
    %v1885 = vmul.f32 %v1757, %v1824
    %v1886 = vmul.f32 %v1758, %v1829
    %v1887 = vmul.f32 %v1759, %v1834
    %v1888 = vmul.f32 %v1760, %v1839
    %v1889 = vmul.f32 %v1761, %v1844
    %v1890 = vmul.f32 %v1762, %v1849
    %v1891 = vmul.f32 %v1763, %v1854
    %v1892 = vmul.f32 %v1764, %v1859
    %v1893 = vmul.f32 %v1765, %v1864
    %v1894 = vmul.f32 %v1766, %v1869
    %v1895 = vmul.f32 %v1767, %v1874
    %v1896 = vmul.f32 %v1768, %v1879
    %v1897 = vadd.f32 %v255, %v1881
    %v1898 = vadd.f32 %v260, %v1882
    %v1899 = vadd.f32 %v265, %v1883
    %v1900 = vadd.f32 %v270, %v1884
    %v1901 = vadd.f32 %v275, %v1885
    %v1902 = vadd.f32 %v280, %v1886
    %v1903 = vadd.f32 %v285, %v1887
    %v1904 = vadd.f32 %v290, %v1888
    %v1905 = vadd.f32 %v295, %v1889
    %v1906 = vadd.f32 %v300, %v1890
    %v1907 = vadd.f32 %v305, %v1891
    %v1908 = vadd.f32 %v310, %v1892
    %v1909 = vadd.f32 %v315, %v1893
    %v1910 = vadd.f32 %v320, %v1894
    %v1911 = vadd.f32 %v325, %v1895
    %v1912 = vadd.f32 %v330, %v1896
    %s1913 = scalar_lea.vmem [#allocation10], 384
    %v1914 = vld [vmem:[%s1913] sm:$0xff]
    %v1915 = vld [vmem:[%s1913 + $0x8] sm:$0xff]
    %v1916 = vld [vmem:[%s1913 + $0x10] sm:$0xff]
    %v1917 = vld [vmem:[%s1913 + $0x18] sm:$0xff]
    %v1918 = vld [vmem:[%s1913 + $0x20] sm:$0xff]
    %v1919 = vld [vmem:[%s1913 + $0x28] sm:$0xff]
    %v1920 = vld [vmem:[%s1913 + $0x30] sm:$0xff]
    %v1921 = vld [vmem:[%s1913 + $0x38] sm:$0xff]
    %v1922 = vld [vmem:[%s1913 + $0x40] sm:$0xff]
    %v1923 = vld [vmem:[%s1913 + $0x48] sm:$0xff]
    %v1924 = vld [vmem:[%s1913 + $0x50] sm:$0xff]
    %v1925 = vld [vmem:[%s1913 + $0x58] sm:$0xff]
    %v1926 = vld [vmem:[%s1913 + $0x60] sm:$0xff]
    %v1927 = vld [vmem:[%s1913 + $0x68] sm:$0xff]
    %v1928 = vld [vmem:[%s1913 + $0x70] sm:$0xff]
    %v1929 = vld [vmem:[%s1913 + $0x78] sm:$0xff]
    %v1930 = vld [vmem:[%s1913 + $0x80] sm:$0xff]
    %v1931 = vld [vmem:[%s1913 + $0x88] sm:$0xff]
    %v1932 = vld [vmem:[%s1913 + $0x90] sm:$0xff]
    %v1933 = vld [vmem:[%s1913 + $0x98] sm:$0xff]
    %v1934 = vld [vmem:[%s1913 + $0xa0] sm:$0xff]
    %v1935 = vld [vmem:[%s1913 + $0xa8] sm:$0xff]
    %v1936 = vld [vmem:[%s1913 + $0xb0] sm:$0xff]
    %v1937 = vld [vmem:[%s1913 + $0xb8] sm:$0xff]
    %v1938 = vld [vmem:[%s1913 + $0xc0] sm:$0xff]
    %v1939 = vld [vmem:[%s1913 + $0xc8] sm:$0xff]
    %v1940 = vld [vmem:[%s1913 + $0xd0] sm:$0xff]
    %v1941 = vld [vmem:[%s1913 + $0xd8] sm:$0xff]
    %v1942 = vld [vmem:[%s1913 + $0xe0] sm:$0xff]
    %v1943 = vld [vmem:[%s1913 + $0xe8] sm:$0xff]
    %v1944 = vld [vmem:[%s1913 + $0xf0] sm:$0xff]
    %v1945 = vld [vmem:[%s1913 + $0xf8] sm:$0xff]
    %v1946 = vld [vmem:[%s1913 + $0x100] sm:$0xff]
    %v1947 = vld [vmem:[%s1913 + $0x108] sm:$0xff]
    %v1948 = vld [vmem:[%s1913 + $0x110] sm:$0xff]
    %v1949 = vld [vmem:[%s1913 + $0x118] sm:$0xff]
    %v1950 = vld [vmem:[%s1913 + $0x120] sm:$0xff]
    %v1951 = vld [vmem:[%s1913 + $0x128] sm:$0xff]
    %v1952 = vld [vmem:[%s1913 + $0x130] sm:$0xff]
    %v1953 = vld [vmem:[%s1913 + $0x138] sm:$0xff]
    %v1954 = vld [vmem:[%s1913 + $0x140] sm:$0xff]
    %v1955 = vld [vmem:[%s1913 + $0x148] sm:$0xff]
    %v1956 = vld [vmem:[%s1913 + $0x150] sm:$0xff]
    %v1957 = vld [vmem:[%s1913 + $0x158] sm:$0xff]
    %v1958 = vld [vmem:[%s1913 + $0x160] sm:$0xff]
    %v1959 = vld [vmem:[%s1913 + $0x168] sm:$0xff]
    %v1960 = vld [vmem:[%s1913 + $0x170] sm:$0xff]
    %v1961 = vld [vmem:[%s1913 + $0x178] sm:$0xff]
    %s1962 = scalar_lea.vmem %s5, 1
    %v1963 = vld [vmem:[%s1962] ss:$4 sm:$0x7]
    %v1965 = vlaneseq
    %v1966 = vshrl.u32 %v1965, 7
    %v1967 = vsub.s32 0, %v1966
    %v1968 = vrot.slane %v1963, %v1967
    %v1969 = vlaneseq
    %v1970 = vshrl.u32 %v1969, 7
    %v1971 = vsub.s32 1, %v1970
    %v1972 = vrot.slane %v1963, %v1971
    %v1973 = vlaneseq
    %v1974 = vshrl.u32 %v1973, 7
    %v1975 = vsub.s32 2, %v1974
    %v1976 = vrot.slane %v1963, %v1975
    %1980 = vmatprep.subr.mxu0 %v1960
    %1981 = vmatpush1.msra.mxu0 %v1959
    %1982 = vmatprep.subr.mxu0 %v1957
    %1983 = vmatpush1.msra.mxu0 %v1956
    %1984 = vmatprep.subr.mxu0 %v1954
    %1985 = vmatpush1.msra.mxu0 %v1953
    %1986 = vmatprep.subr.mxu0 %v1951
    %1987 = vmatpush1.msra.mxu0 %v1950
    %1988 = vmatprep.subr.mxu0 %v1948
    %1989 = vmatpush1.msra.mxu0 %v1947
    %1990 = vmatprep.subr.mxu0 %v1945
    %1991 = vmatpush1.msra.mxu0 %v1944
    %1992 = vmatprep.subr.mxu0 %v1942
    %1993 = vmatpush1.msra.mxu0 %v1941
    %1994 = vmatprep.subr.mxu0 %v1939
    %1995 = vmatpush1.msra.mxu0 %v1938
    %1996 = vmatprep.subr.mxu0 %v1936
    %1997 = vmatpush1.msra.mxu0 %v1935
    %1998 = vmatprep.subr.mxu0 %v1933
    %1999 = vmatpush1.msra.mxu0 %v1932
    %2000 = vmatprep.subr.mxu0 %v1930
    %2001 = vmatpush1.msra.mxu0 %v1929
    %2002 = vmatprep.subr.mxu0 %v1927
    %2003 = vmatpush1.msra.mxu0 %v1926
    %2004 = vmatprep.subr.mxu0 %v1924
    %2005 = vmatpush1.msra.mxu0 %v1923
    %2006 = vmatprep.subr.mxu0 %v1921
    %2007 = vmatpush1.msra.mxu0 %v1920
    %2008 = vmatprep.subr.mxu0 %v1918
    %2009 = vmatpush1.msra.mxu0 %v1917
    %2010 = vmatprep.subr.mxu0 %v1915
    %2011 = vmatpush1.msra.mxu0 %v1914
    %2012 = vmatprep.subr.mxu0 0.0
    %2013 = vmatpush2.msra.mxu0 0.0
    %2014 = vmatprep.subr.mxu0 0.0
    %2015 = vmatpush2.msra.mxu0 0.0
    %2016 = vmatprep.subr.mxu0 0.0
    %2017 = vmatpush2.msra.mxu0 0.0
    %2018 = vmatprep.subr.mxu0 0.0
    %2019 = vmatpush2.msra.mxu0 0.0
    %2020 = vmatprep.subr.mxu0 0.0
    %2021 = vmatpush2.msra.mxu0 0.0
    %2022 = vmatprep.subr.mxu0 0.0
    %2023 = vmatpush2.msra.mxu0 0.0
    %2024 = vmatprep.subr.mxu0 0.0
    %2025 = vmatpush2.msra.mxu0 0.0
    %2026 = vmatprep.subr.mxu0 0.0
    %2027 = vmatpush2.msra.mxu0 0.0
    %2028 = vmatprep.subr.mxu0 0.0
    %2029 = vmatpush2.msra.mxu0 0.0
    %2030 = vmatprep.subr.mxu0 0.0
    %2031 = vmatpush2.msra.mxu0 0.0
    %2032 = vmatprep.subr.mxu0 0.0
    %2033 = vmatpush2.msra.mxu0 0.0
    %2034 = vmatprep.subr.mxu0 0.0
    %2035 = vmatpush2.msra.mxu0 0.0
    %2036 = vmatprep.subr.mxu0 0.0
    %2037 = vmatpush2.msra.mxu0 0.0
    %2038 = vmatprep.subr.mxu0 0.0
    %2039 = vmatpush2.msra.mxu0 0.0
    %2040 = vmatprep.subr.mxu0 0.0
    %2041 = vmatpush2.msra.mxu0 0.0
    %2042 = vmatprep.subr.mxu0 0.0
    %2043 = vmatpush2.msra.mxu0 0.0
    %2044 = vmatprep.mubr.f32.mxu0 0.0
    %2045 = vmatmul.mubr.f32.gmra.mxu0 %v1897
    %v2046 = vpop.f32.mrf.mxu0
    %v2047 = vadd.f32 %v1968, %v2046
    %v2048 = vpop.f32.mrf.mxu0
    %v2049 = vadd.f32 %v1972, %v2048
    %2050 = vmatprep.mubr.f32.mxu0 0.0
    %2051 = vmatmul.mubr.f32.gmra.mxu0 %v1898
    %v2052 = vpop.f32.mrf.mxu0
    %v2053 = vadd.f32 %v1968, %v2052
    %v2054 = vpop.f32.mrf.mxu0
    %v2055 = vadd.f32 %v1972, %v2054
    %2056 = vmatprep.mubr.f32.mxu0 0.0
    %2057 = vmatmul.mubr.f32.gmra.mxu0 %v1899
    %v2058 = vpop.f32.mrf.mxu0
    %v2059 = vadd.f32 %v1968, %v2058
    %v2060 = vpop.f32.mrf.mxu0
    %v2061 = vadd.f32 %v1972, %v2060
    %2062 = vmatprep.mubr.f32.mxu0 0.0
    %2063 = vmatmul.mubr.f32.gmra.mxu0 %v1900
    %v2064 = vpop.f32.mrf.mxu0
    %v2065 = vadd.f32 %v1968, %v2064
    %v2066 = vpop.f32.mrf.mxu0
    %v2067 = vadd.f32 %v1972, %v2066
    %2068 = vmatprep.mubr.f32.mxu0 0.0
    %2069 = vmatmul.mubr.f32.gmra.mxu0 %v1901
    %v2070 = vpop.f32.mrf.mxu0
    %v2071 = vadd.f32 %v1968, %v2070
    %v2072 = vpop.f32.mrf.mxu0
    %v2073 = vadd.f32 %v1972, %v2072
    %2074 = vmatprep.mubr.f32.mxu0 0.0
    %2075 = vmatmul.mubr.f32.gmra.mxu0 %v1902
    %v2076 = vpop.f32.mrf.mxu0
    %v2077 = vadd.f32 %v1968, %v2076
    %v2078 = vpop.f32.mrf.mxu0
    %v2079 = vadd.f32 %v1972, %v2078
    %2080 = vmatprep.mubr.f32.mxu0 0.0
    %2081 = vmatmul.mubr.f32.gmra.mxu0 %v1903
    %v2082 = vpop.f32.mrf.mxu0
    %v2083 = vadd.f32 %v1968, %v2082
    %v2084 = vpop.f32.mrf.mxu0
    %v2085 = vadd.f32 %v1972, %v2084
    %2086 = vmatprep.mubr.f32.mxu0 0.0
    %2087 = vmatmul.mubr.f32.gmra.mxu0 %v1904
    %v2088 = vpop.f32.mrf.mxu0
    %v2089 = vadd.f32 %v1968, %v2088
    %v2090 = vpop.f32.mrf.mxu0
    %v2091 = vadd.f32 %v1972, %v2090
    %2092 = vmatprep.mubr.f32.mxu0 0.0
    %2093 = vmatmul.mubr.f32.gmra.mxu0 %v1905
    %v2094 = vpop.f32.mrf.mxu0
    %v2095 = vadd.f32 %v1968, %v2094
    %v2096 = vpop.f32.mrf.mxu0
    %v2097 = vadd.f32 %v1972, %v2096
    %2098 = vmatprep.mubr.f32.mxu0 0.0
    %2099 = vmatmul.mubr.f32.gmra.mxu0 %v1906
    %v2100 = vpop.f32.mrf.mxu0
    %v2101 = vadd.f32 %v1968, %v2100
    %v2102 = vpop.f32.mrf.mxu0
    %v2103 = vadd.f32 %v1972, %v2102
    %2104 = vmatprep.mubr.f32.mxu0 0.0
    %2105 = vmatmul.mubr.f32.gmra.mxu0 %v1907
    %v2106 = vpop.f32.mrf.mxu0
    %v2107 = vadd.f32 %v1968, %v2106
    %v2108 = vpop.f32.mrf.mxu0
    %v2109 = vadd.f32 %v1972, %v2108
    %2110 = vmatprep.mubr.f32.mxu0 0.0
    %2111 = vmatmul.mubr.f32.gmra.mxu0 %v1908
    %v2112 = vpop.f32.mrf.mxu0
    %v2113 = vadd.f32 %v1968, %v2112
    %v2114 = vpop.f32.mrf.mxu0
    %v2115 = vadd.f32 %v1972, %v2114
    %2116 = vmatprep.mubr.f32.mxu0 0.0
    %2117 = vmatmul.mubr.f32.gmra.mxu0 %v1909
    %v2118 = vpop.f32.mrf.mxu0
    %v2119 = vadd.f32 %v1968, %v2118
    %v2120 = vpop.f32.mrf.mxu0
    %v2121 = vadd.f32 %v1972, %v2120
    %2122 = vmatprep.mubr.f32.mxu0 0.0
    %2123 = vmatmul.mubr.f32.gmra.mxu0 %v1910
    %v2124 = vpop.f32.mrf.mxu0
    %v2125 = vadd.f32 %v1968, %v2124
    %v2126 = vpop.f32.mrf.mxu0
    %v2127 = vadd.f32 %v1972, %v2126
    %2128 = vmatprep.mubr.f32.mxu0 0.0
    %2129 = vmatmul.mubr.f32.gmra.mxu0 %v1911
    %v2130 = vpop.f32.mrf.mxu0
    %v2131 = vadd.f32 %v1968, %v2130
    %v2132 = vpop.f32.mrf.mxu0
    %v2133 = vadd.f32 %v1972, %v2132
    %2134 = vmatprep.mubr.f32.mxu0 0.0
    %2135 = vmatmul.mubr.f32.gmra.mxu0 %v1912
    %v2136 = vpop.f32.mrf.mxu0
    %v2137 = vadd.f32 %v1968, %v2136
    %v2138 = vpop.f32.mrf.mxu0
    %v2139 = vadd.f32 %v1972, %v2138
    %2140 = vdwg.mxu0
    %2141 = vmatprep.subr.mxu0 0.0
    %2142 = vmatpush1.msra.mxu0 %v1961
    %2143 = vmatprep.subr.mxu0 0.0
    %2144 = vmatpush1.msra.mxu0 %v1958
    %2145 = vmatprep.subr.mxu0 0.0
    %2146 = vmatpush1.msra.mxu0 %v1955
    %2147 = vmatprep.subr.mxu0 0.0
    %2148 = vmatpush1.msra.mxu0 %v1952
    %2149 = vmatprep.subr.mxu0 0.0
    %2150 = vmatpush1.msra.mxu0 %v1949
    %2151 = vmatprep.subr.mxu0 0.0
    %2152 = vmatpush1.msra.mxu0 %v1946
    %2153 = vmatprep.subr.mxu0 0.0
    %2154 = vmatpush1.msra.mxu0 %v1943
    %2155 = vmatprep.subr.mxu0 0.0
    %2156 = vmatpush1.msra.mxu0 %v1940
    %2157 = vmatprep.subr.mxu0 0.0
    %2158 = vmatpush1.msra.mxu0 %v1937
    %2159 = vmatprep.subr.mxu0 0.0
    %2160 = vmatpush1.msra.mxu0 %v1934
    %2161 = vmatprep.subr.mxu0 0.0
    %2162 = vmatpush1.msra.mxu0 %v1931
    %2163 = vmatprep.subr.mxu0 0.0
    %2164 = vmatpush1.msra.mxu0 %v1928
    %2165 = vmatprep.subr.mxu0 0.0
    %2166 = vmatpush1.msra.mxu0 %v1925
    %2167 = vmatprep.subr.mxu0 0.0
    %2168 = vmatpush1.msra.mxu0 %v1922
    %2169 = vmatprep.subr.mxu0 0.0
    %2170 = vmatpush1.msra.mxu0 %v1919
    %2171 = vmatprep.subr.mxu0 0.0
    %2172 = vmatpush1.msra.mxu0 %v1916
    %2173 = vmatprep.subr.mxu0 0.0
    %2174 = vmatpush2.msra.mxu0 0.0
    %2175 = vmatprep.subr.mxu0 0.0
    %2176 = vmatpush2.msra.mxu0 0.0
    %2177 = vmatprep.subr.mxu0 0.0
    %2178 = vmatpush2.msra.mxu0 0.0
    %2179 = vmatprep.subr.mxu0 0.0
    %2180 = vmatpush2.msra.mxu0 0.0
    %2181 = vmatprep.subr.mxu0 0.0
    %2182 = vmatpush2.msra.mxu0 0.0
    %2183 = vmatprep.subr.mxu0 0.0
    %2184 = vmatpush2.msra.mxu0 0.0
    %2185 = vmatprep.subr.mxu0 0.0
    %2186 = vmatpush2.msra.mxu0 0.0
    %2187 = vmatprep.subr.mxu0 0.0
    %2188 = vmatpush2.msra.mxu0 0.0
    %2189 = vmatprep.subr.mxu0 0.0
    %2190 = vmatpush2.msra.mxu0 0.0
    %2191 = vmatprep.subr.mxu0 0.0
    %2192 = vmatpush2.msra.mxu0 0.0
    %2193 = vmatprep.subr.mxu0 0.0
    %2194 = vmatpush2.msra.mxu0 0.0
    %2195 = vmatprep.subr.mxu0 0.0
    %2196 = vmatpush2.msra.mxu0 0.0
    %2197 = vmatprep.subr.mxu0 0.0
    %2198 = vmatpush2.msra.mxu0 0.0
    %2199 = vmatprep.subr.mxu0 0.0
    %2200 = vmatpush2.msra.mxu0 0.0
    %2201 = vmatprep.subr.mxu0 0.0
    %2202 = vmatpush2.msra.mxu0 0.0
    %2203 = vmatprep.subr.mxu0 0.0
    %2204 = vmatpush2.msra.mxu0 0.0
    %2205 = vmatprep.mubr.f32.mxu0 0.0
    %2206 = vmatmul.mubr.f32.gmra.mxu0 %v1897
    %v2207 = vpop.f32.mrf.mxu0
    %v2208 = vadd.f32 %v1976, %v2207
    %v2209 = vpop.f32.mrf.mxu0
    %2210 = vmatprep.mubr.f32.mxu0 0.0
    %2211 = vmatmul.mubr.f32.gmra.mxu0 %v1898
    %v2212 = vpop.f32.mrf.mxu0
    %v2213 = vadd.f32 %v1976, %v2212
    %v2214 = vpop.f32.mrf.mxu0
    %2215 = vmatprep.mubr.f32.mxu0 0.0
    %2216 = vmatmul.mubr.f32.gmra.mxu0 %v1899
    %v2217 = vpop.f32.mrf.mxu0
    %v2218 = vadd.f32 %v1976, %v2217
    %v2219 = vpop.f32.mrf.mxu0
    %2220 = vmatprep.mubr.f32.mxu0 0.0
    %2221 = vmatmul.mubr.f32.gmra.mxu0 %v1900
    %v2222 = vpop.f32.mrf.mxu0
    %v2223 = vadd.f32 %v1976, %v2222
    %v2224 = vpop.f32.mrf.mxu0
    %2225 = vmatprep.mubr.f32.mxu0 0.0
    %2226 = vmatmul.mubr.f32.gmra.mxu0 %v1901
    %v2227 = vpop.f32.mrf.mxu0
    %v2228 = vadd.f32 %v1976, %v2227
    %v2229 = vpop.f32.mrf.mxu0
    %2230 = vmatprep.mubr.f32.mxu0 0.0
    %2231 = vmatmul.mubr.f32.gmra.mxu0 %v1902
    %v2232 = vpop.f32.mrf.mxu0
    %v2233 = vadd.f32 %v1976, %v2232
    %v2234 = vpop.f32.mrf.mxu0
    %2235 = vmatprep.mubr.f32.mxu0 0.0
    %2236 = vmatmul.mubr.f32.gmra.mxu0 %v1903
    %v2237 = vpop.f32.mrf.mxu0
    %v2238 = vadd.f32 %v1976, %v2237
    %v2239 = vpop.f32.mrf.mxu0
    %2240 = vmatprep.mubr.f32.mxu0 0.0
    %2241 = vmatmul.mubr.f32.gmra.mxu0 %v1904
    %v2242 = vpop.f32.mrf.mxu0
    %v2243 = vadd.f32 %v1976, %v2242
    %v2244 = vpop.f32.mrf.mxu0
    %2245 = vmatprep.mubr.f32.mxu0 0.0
    %2246 = vmatmul.mubr.f32.gmra.mxu0 %v1905
    %v2247 = vpop.f32.mrf.mxu0
    %v2248 = vadd.f32 %v1976, %v2247
    %v2249 = vpop.f32.mrf.mxu0
    %2250 = vmatprep.mubr.f32.mxu0 0.0
    %2251 = vmatmul.mubr.f32.gmra.mxu0 %v1906
    %v2252 = vpop.f32.mrf.mxu0
    %v2253 = vadd.f32 %v1976, %v2252
    %v2254 = vpop.f32.mrf.mxu0
    %2255 = vmatprep.mubr.f32.mxu0 0.0
    %2256 = vmatmul.mubr.f32.gmra.mxu0 %v1907
    %v2257 = vpop.f32.mrf.mxu0
    %v2258 = vadd.f32 %v1976, %v2257
    %v2259 = vpop.f32.mrf.mxu0
    %2260 = vmatprep.mubr.f32.mxu0 0.0
    %2261 = vmatmul.mubr.f32.gmra.mxu0 %v1908
    %v2262 = vpop.f32.mrf.mxu0
    %v2263 = vadd.f32 %v1976, %v2262
    %v2264 = vpop.f32.mrf.mxu0
    %2265 = vmatprep.mubr.f32.mxu0 0.0
    %2266 = vmatmul.mubr.f32.gmra.mxu0 %v1909
    %v2267 = vpop.f32.mrf.mxu0
    %v2268 = vadd.f32 %v1976, %v2267
    %v2269 = vpop.f32.mrf.mxu0
    %2270 = vmatprep.mubr.f32.mxu0 0.0
    %2271 = vmatmul.mubr.f32.gmra.mxu0 %v1910
    %v2272 = vpop.f32.mrf.mxu0
    %v2273 = vadd.f32 %v1976, %v2272
    %v2274 = vpop.f32.mrf.mxu0
    %2275 = vmatprep.mubr.f32.mxu0 0.0
    %2276 = vmatmul.mubr.f32.gmra.mxu0 %v1911
    %v2277 = vpop.f32.mrf.mxu0
    %v2278 = vadd.f32 %v1976, %v2277
    %v2279 = vpop.f32.mrf.mxu0
    %2280 = vmatprep.mubr.f32.mxu0 0.0
    %2281 = vmatmul.mubr.f32.gmra.mxu0 %v1912
    %v2282 = vpop.f32.mrf.mxu0
    %v2283 = vadd.f32 %v1976, %v2282
    %v2284 = vpop.f32.mrf.mxu0
    %2285 = vdwg.mxu0
    %v2286 = vpack.c.bf16 %v2053, %v2047
    %v2287 = vpack.c.bf16 %v2065, %v2059
    %v2288 = vpack.c.bf16 %v2077, %v2071
    %v2289 = vpack.c.bf16 %v2089, %v2083
    %v2290 = vpack.c.bf16 %v2101, %v2095
    %v2291 = vpack.c.bf16 %v2113, %v2107
    %v2292 = vpack.c.bf16 %v2125, %v2119
    %v2293 = vpack.c.bf16 %v2137, %v2131
    %v2294 = vpack.c.bf16 %v2055, %v2049
    %v2295 = vpack.c.bf16 %v2067, %v2061
    %v2296 = vpack.c.bf16 %v2079, %v2073
    %v2297 = vpack.c.bf16 %v2091, %v2085
    %v2298 = vpack.c.bf16 %v2103, %v2097
    %v2299 = vpack.c.bf16 %v2115, %v2109
    %v2300 = vpack.c.bf16 %v2127, %v2121
    %v2301 = vpack.c.bf16 %v2139, %v2133
    %v2310 = vunpack.c.l.b16 %v2294
    %v2311 = vunpack.c.h.b16 %v2294
    %v2312 = vunpack.c.l.b16 %v2295
    %v2313 = vunpack.c.h.b16 %v2295
    %v2314 = vunpack.c.l.b16 %v2296
    %v2315 = vunpack.c.h.b16 %v2296
    %v2316 = vunpack.c.l.b16 %v2297
    %v2317 = vunpack.c.h.b16 %v2297
    %v2318 = vunpack.c.l.b16 %v2298
    %v2319 = vunpack.c.h.b16 %v2298
    %v2320 = vunpack.c.l.b16 %v2299
    %v2321 = vunpack.c.h.b16 %v2299
    %v2322 = vunpack.c.l.b16 %v2300
    %v2323 = vunpack.c.h.b16 %v2300
    %v2324 = vunpack.c.l.b16 %v2301
    %v2325 = vunpack.c.h.b16 %v2301
    %v2326 = vpack.c.b16 %v2310, %v2310
    %v2327 = vpack.c.b16 %v2311, %v2311
    %v2328 = vpack.c.b16 %v2312, %v2312
    %v2329 = vpack.c.b16 %v2313, %v2313
    %v2330 = vpack.c.b16 %v2314, %v2314
    %v2331 = vpack.c.b16 %v2315, %v2315
    %v2332 = vpack.c.b16 %v2316, %v2316
    %v2333 = vpack.c.b16 %v2317, %v2317
    %v2334 = vpack.c.b16 %v2318, %v2318
    %v2335 = vpack.c.b16 %v2319, %v2319
    %v2336 = vpack.c.b16 %v2320, %v2320
    %v2337 = vpack.c.b16 %v2321, %v2321
    %v2338 = vpack.c.b16 %v2322, %v2322
    %v2339 = vpack.c.b16 %v2323, %v2323
    %v2340 = vpack.c.b16 %v2324, %v2324
    %v2341 = vpack.c.b16 %v2325, %v2325
    %2358 = vst [vmem:[#allocation2] sm:$0xf] %v2326
    %2359 = vst [vmem:[#allocation2 + $0x4] sm:$0xf] %v2327
    %2360 = vst [vmem:[#allocation2 + $0x8] sm:$0xf] %v2328
    %2361 = vst [vmem:[#allocation2 + $0xc] sm:$0xf] %v2329
    %2362 = vst [vmem:[#allocation2 + $0x10] sm:$0xf] %v2330
    %2363 = vst [vmem:[#allocation2 + $0x14] sm:$0xf] %v2331
    %2364 = vst [vmem:[#allocation2 + $0x18] sm:$0xf] %v2332
    %2365 = vst [vmem:[#allocation2 + $0x1c] sm:$0xf] %v2333
    %2366 = vst [vmem:[#allocation2 + $0x20] sm:$0xf] %v2334
    %2367 = vst [vmem:[#allocation2 + $0x24] sm:$0xf] %v2335
    %2368 = vst [vmem:[#allocation2 + $0x28] sm:$0xf] %v2336
    %2369 = vst [vmem:[#allocation2 + $0x2c] sm:$0xf] %v2337
    %2370 = vst [vmem:[#allocation2 + $0x30] sm:$0xf] %v2338
    %2371 = vst [vmem:[#allocation2 + $0x34] sm:$0xf] %v2339
    %2372 = vst [vmem:[#allocation2 + $0x38] sm:$0xf] %v2340
    %2373 = vst [vmem:[#allocation2 + $0x3c] sm:$0xf] %v2341
    %v2374 = vpack.c.bf16 %v2213, %v2208
    %v2375 = vpack.c.bf16 %v2223, %v2218
    %v2376 = vpack.c.bf16 %v2233, %v2228
    %v2377 = vpack.c.bf16 %v2243, %v2238
    %v2378 = vpack.c.bf16 %v2253, %v2248
    %v2379 = vpack.c.bf16 %v2263, %v2258
    %v2380 = vpack.c.bf16 %v2273, %v2268
    %v2381 = vpack.c.bf16 %v2283, %v2278
    %v2390 = vunpack.c.l.b16 %v2374
    %v2391 = vunpack.c.h.b16 %v2374
    %v2392 = vunpack.c.l.b16 %v2375
    %v2393 = vunpack.c.h.b16 %v2375
    %v2394 = vunpack.c.l.b16 %v2376
    %v2395 = vunpack.c.h.b16 %v2376
    %v2396 = vunpack.c.l.b16 %v2377
    %v2397 = vunpack.c.h.b16 %v2377
    %v2398 = vunpack.c.l.b16 %v2378
    %v2399 = vunpack.c.h.b16 %v2378
    %v2400 = vunpack.c.l.b16 %v2379
    %v2401 = vunpack.c.h.b16 %v2379
    %v2402 = vunpack.c.l.b16 %v2380
    %v2403 = vunpack.c.h.b16 %v2380
    %v2404 = vunpack.c.l.b16 %v2381
    %v2405 = vunpack.c.h.b16 %v2381
    %v2406 = vpack.c.b16 %v2390, %v2390
    %v2407 = vpack.c.b16 %v2391, %v2391
    %v2408 = vpack.c.b16 %v2392, %v2392
    %v2409 = vpack.c.b16 %v2393, %v2393
    %v2410 = vpack.c.b16 %v2394, %v2394
    %v2411 = vpack.c.b16 %v2395, %v2395
    %v2412 = vpack.c.b16 %v2396, %v2396
    %v2413 = vpack.c.b16 %v2397, %v2397
    %v2414 = vpack.c.b16 %v2398, %v2398
    %v2415 = vpack.c.b16 %v2399, %v2399
    %v2416 = vpack.c.b16 %v2400, %v2400
    %v2417 = vpack.c.b16 %v2401, %v2401
    %v2418 = vpack.c.b16 %v2402, %v2402
    %v2419 = vpack.c.b16 %v2403, %v2403
    %v2420 = vpack.c.b16 %v2404, %v2404
    %v2421 = vpack.c.b16 %v2405, %v2405
    %2438 = vst [vmem:[#allocation3] sm:$0xf] %v2406
    %2439 = vst [vmem:[#allocation3 + $0x4] sm:$0xf] %v2407
    %2440 = vst [vmem:[#allocation3 + $0x8] sm:$0xf] %v2408
    %2441 = vst [vmem:[#allocation3 + $0xc] sm:$0xf] %v2409
    %2442 = vst [vmem:[#allocation3 + $0x10] sm:$0xf] %v2410
    %2443 = vst [vmem:[#allocation3 + $0x14] sm:$0xf] %v2411
    %2444 = vst [vmem:[#allocation3 + $0x18] sm:$0xf] %v2412
    %2445 = vst [vmem:[#allocation3 + $0x1c] sm:$0xf] %v2413
    %2446 = vst [vmem:[#allocation3 + $0x20] sm:$0xf] %v2414
    %2447 = vst [vmem:[#allocation3 + $0x24] sm:$0xf] %v2415
    %2448 = vst [vmem:[#allocation3 + $0x28] sm:$0xf] %v2416
    %2449 = vst [vmem:[#allocation3 + $0x2c] sm:$0xf] %v2417
    %2450 = vst [vmem:[#allocation3 + $0x30] sm:$0xf] %v2418
    %2451 = vst [vmem:[#allocation3 + $0x34] sm:$0xf] %v2419
    %2452 = vst [vmem:[#allocation3 + $0x38] sm:$0xf] %v2420
    %2453 = vst [vmem:[#allocation3 + $0x3c] sm:$0xf] %v2421
    %2454 = vst.msk [vmem:[#allocation4] sm:$0xff] %vm872, -1e+30
    %2455 = vst.msk [vmem:[#allocation4 + $0x8] sm:$0xff] %vm872, -1e+30
    %2456 = vst.msk [vmem:[#allocation4 + $0x10] sm:$0xff] %vm872, -1e+30
    %2457 = vst.msk [vmem:[#allocation4 + $0x18] sm:$0xff] %vm872, -1e+30
    %2458 = vst.msk [vmem:[#allocation4 + $0x20] sm:$0xff] %vm872, -1e+30
    %2459 = vst.msk [vmem:[#allocation4 + $0x28] sm:$0xff] %vm872, -1e+30
    %2460 = vst.msk [vmem:[#allocation4 + $0x30] sm:$0xff] %vm872, -1e+30
    %2461 = vst.msk [vmem:[#allocation4 + $0x38] sm:$0xff] %vm872, -1e+30
    %2462 = vst.msk [vmem:[#allocation4 + $0x40] sm:$0xff] %vm872, -1e+30
    %2463 = vst.msk [vmem:[#allocation4 + $0x48] sm:$0xff] %vm872, -1e+30
    %2464 = vst.msk [vmem:[#allocation4 + $0x50] sm:$0xff] %vm872, -1e+30
    %2465 = vst.msk [vmem:[#allocation4 + $0x58] sm:$0xff] %vm872, -1e+30
    %2466 = vst.msk [vmem:[#allocation4 + $0x60] sm:$0xff] %vm872, -1e+30
    %2467 = vst.msk [vmem:[#allocation4 + $0x68] sm:$0xff] %vm872, -1e+30
    %2468 = vst.msk [vmem:[#allocation4 + $0x70] sm:$0xff] %vm872, -1e+30
    %2469 = vst.msk [vmem:[#allocation4 + $0x78] sm:$0xff] %vm872, -1e+30
    %2470 = vst.msk [vmem:[#allocation5] sm:$0xff] %vm872, 0.0
    %2471 = vst.msk [vmem:[#allocation5 + $0x8] sm:$0xff] %vm872, 0.0
    %2472 = vst.msk [vmem:[#allocation5 + $0x10] sm:$0xff] %vm872, 0.0
    %2473 = vst.msk [vmem:[#allocation5 + $0x18] sm:$0xff] %vm872, 0.0
    %2474 = vst.msk [vmem:[#allocation5 + $0x20] sm:$0xff] %vm872, 0.0
    %2475 = vst.msk [vmem:[#allocation5 + $0x28] sm:$0xff] %vm872, 0.0
    %2476 = vst.msk [vmem:[#allocation5 + $0x30] sm:$0xff] %vm872, 0.0
    %2477 = vst.msk [vmem:[#allocation5 + $0x38] sm:$0xff] %vm872, 0.0
    %2478 = vst.msk [vmem:[#allocation5 + $0x40] sm:$0xff] %vm872, 0.0
    %2479 = vst.msk [vmem:[#allocation5 + $0x48] sm:$0xff] %vm872, 0.0
    %2480 = vst.msk [vmem:[#allocation5 + $0x50] sm:$0xff] %vm872, 0.0
    %2481 = vst.msk [vmem:[#allocation5 + $0x58] sm:$0xff] %vm872, 0.0
    %2482 = vst.msk [vmem:[#allocation5 + $0x60] sm:$0xff] %vm872, 0.0
    %2483 = vst.msk [vmem:[#allocation5 + $0x68] sm:$0xff] %vm872, 0.0
    %2484 = vst.msk [vmem:[#allocation5 + $0x70] sm:$0xff] %vm872, 0.0
    %2485 = vst.msk [vmem:[#allocation5 + $0x78] sm:$0xff] %vm872, 0.0
    %2486 = vst [vmem:[#allocation6] sm:$0xff] 0.0
    %2487 = vst [vmem:[#allocation6 + $0x8] sm:$0xff] 0.0
    %2488 = vst [vmem:[#allocation6 + $0x10] sm:$0xff] 0.0
    %2489 = vst [vmem:[#allocation6 + $0x18] sm:$0xff] 0.0
    %2490 = vst [vmem:[#allocation6 + $0x20] sm:$0xff] 0.0
    %2491 = vst [vmem:[#allocation6 + $0x28] sm:$0xff] 0.0
    %2492 = vst [vmem:[#allocation6 + $0x30] sm:$0xff] 0.0
    %2493 = vst [vmem:[#allocation6 + $0x38] sm:$0xff] 0.0
    %2494 = vst [vmem:[#allocation6 + $0x40] sm:$0xff] 0.0
    %2495 = vst [vmem:[#allocation6 + $0x48] sm:$0xff] 0.0
    %2496 = vst [vmem:[#allocation6 + $0x50] sm:$0xff] 0.0
    %2497 = vst [vmem:[#allocation6 + $0x58] sm:$0xff] 0.0
    %2498 = vst [vmem:[#allocation6 + $0x60] sm:$0xff] 0.0
    %2499 = vst [vmem:[#allocation6 + $0x68] sm:$0xff] 0.0
    %2500 = vst [vmem:[#allocation6 + $0x70] sm:$0xff] 0.0
    %2501 = vst [vmem:[#allocation6 + $0x78] sm:$0xff] 0.0
    %v2502 = vld [vmem:[#allocation2] sm:$0xf]
    %v2503 = vld [vmem:[#allocation2 + $0x4] sm:$0xf]
    %v2504 = vld [vmem:[#allocation2 + $0x8] sm:$0xf]
    %v2505 = vld [vmem:[#allocation2 + $0xc] sm:$0xf]
    %v2506 = vld [vmem:[#allocation2 + $0x10] sm:$0xf]
    %v2507 = vld [vmem:[#allocation2 + $0x14] sm:$0xf]
    %v2508 = vld [vmem:[#allocation2 + $0x18] sm:$0xf]
    %v2509 = vld [vmem:[#allocation2 + $0x1c] sm:$0xf]
    %v2510 = vld [vmem:[#allocation2 + $0x20] sm:$0xf]
    %v2511 = vld [vmem:[#allocation2 + $0x24] sm:$0xf]
    %v2512 = vld [vmem:[#allocation2 + $0x28] sm:$0xf]
    %v2513 = vld [vmem:[#allocation2 + $0x2c] sm:$0xf]
    %v2514 = vld [vmem:[#allocation2 + $0x30] sm:$0xf]
    %v2515 = vld [vmem:[#allocation2 + $0x34] sm:$0xf]
    %v2516 = vld [vmem:[#allocation2 + $0x38] sm:$0xf]
    %v2517 = vld [vmem:[#allocation2 + $0x3c] sm:$0xf]
    %v2518 = vld [vmem:[#allocation3] sm:$0xf]
    %v2519 = vld [vmem:[#allocation3 + $0x4] sm:$0xf]
    %v2520 = vld [vmem:[#allocation3 + $0x8] sm:$0xf]
    %v2521 = vld [vmem:[#allocation3 + $0xc] sm:$0xf]
    %v2522 = vld [vmem:[#allocation3 + $0x10] sm:$0xf]
    %v2523 = vld [vmem:[#allocation3 + $0x14] sm:$0xf]
    %v2524 = vld [vmem:[#allocation3 + $0x18] sm:$0xf]
    %v2525 = vld [vmem:[#allocation3 + $0x1c] sm:$0xf]
    %v2526 = vld [vmem:[#allocation3 + $0x20] sm:$0xf]
    %v2527 = vld [vmem:[#allocation3 + $0x24] sm:$0xf]
    %v2528 = vld [vmem:[#allocation3 + $0x28] sm:$0xf]
    %v2529 = vld [vmem:[#allocation3 + $0x2c] sm:$0xf]
    %v2530 = vld [vmem:[#allocation3 + $0x30] sm:$0xf]
    %v2531 = vld [vmem:[#allocation3 + $0x34] sm:$0xf]
    %v2532 = vld [vmem:[#allocation3 + $0x38] sm:$0xf]
    %v2533 = vld [vmem:[#allocation3 + $0x3c] sm:$0xf]
    %v2550 = vunpack.c.l.b16 %v2502
    %v2551 = vunpack.c.l.b16 %v2503
    %v2552 = vunpack.c.l.b16 %v2504
    %v2553 = vunpack.c.l.b16 %v2505
    %v2554 = vunpack.c.l.b16 %v2506
    %v2555 = vunpack.c.l.b16 %v2507
    %v2556 = vunpack.c.l.b16 %v2508
    %v2557 = vunpack.c.l.b16 %v2509
    %v2558 = vunpack.c.l.b16 %v2510
    %v2559 = vunpack.c.l.b16 %v2511
    %v2560 = vunpack.c.l.b16 %v2512
    %v2561 = vunpack.c.l.b16 %v2513
    %v2562 = vunpack.c.l.b16 %v2514
    %v2563 = vunpack.c.l.b16 %v2515
    %v2564 = vunpack.c.l.b16 %v2516
    %v2565 = vunpack.c.l.b16 %v2517
    %v2566 = vpack.c.b16 %v2551, %v2550
    %v2567 = vpack.c.b16 %v2553, %v2552
    %v2568 = vpack.c.b16 %v2555, %v2554
    %v2569 = vpack.c.b16 %v2557, %v2556
    %v2570 = vpack.c.b16 %v2559, %v2558
    %v2571 = vpack.c.b16 %v2561, %v2560
    %v2572 = vpack.c.b16 %v2563, %v2562
    %v2573 = vpack.c.b16 %v2565, %v2564
    %2582 = vmatprep.subr.bf16.mxu0 0
    %2583 = vmatpush1.bf16.xpose.msra.mxu0 %v2573
    %2584 = vmatprep.subr.bf16.mxu0 0
    %2585 = vmatpush1.bf16.xpose.msra.mxu0 %v2572
    %2586 = vmatprep.subr.bf16.mxu0 0
    %2587 = vmatpush1.bf16.xpose.msra.mxu0 %v2571
    %2588 = vmatprep.subr.bf16.mxu0 0
    %2589 = vmatpush1.bf16.xpose.msra.mxu0 %v2570
    %2590 = vmatprep.subr.bf16.mxu0 0
    %2591 = vmatpush1.bf16.xpose.msra.mxu0 %v2569
    %2592 = vmatprep.subr.bf16.mxu0 0
    %2593 = vmatpush1.bf16.xpose.msra.mxu0 %v2568
    %2594 = vmatprep.subr.bf16.mxu0 0
    %2595 = vmatpush1.bf16.xpose.msra.mxu0 %v2567
    %2596 = vmatprep.subr.bf16.mxu0 0
    %2597 = vmatpush1.bf16.xpose.msra.mxu0 %v2566
    %2598 = vmatprep.subr.bf16.mxu0 0
    %2599 = vmatpush2.bf16.xpose.msra.mxu0 0
    %2600 = vmatprep.subr.bf16.mxu0 0
    %2601 = vmatpush2.bf16.xpose.msra.mxu0 0
    %2602 = vmatprep.subr.bf16.mxu0 0
    %2603 = vmatpush2.bf16.xpose.msra.mxu0 0
    %2604 = vmatprep.subr.bf16.mxu0 0
    %2605 = vmatpush2.bf16.xpose.msra.mxu0 0
    %2606 = vmatprep.subr.bf16.mxu0 0
    %2607 = vmatpush2.bf16.xpose.msra.mxu0 0
    %2608 = vmatprep.subr.bf16.mxu0 0
    %2609 = vmatpush2.bf16.xpose.msra.mxu0 0
    %2610 = vmatprep.subr.bf16.mxu0 0
    %2611 = vmatpush2.bf16.xpose.msra.mxu0 0
    %2612 = vmatprep.subr.bf16.mxu0 0
    %2613 = vmatpush2.bf16.xpose.msra.mxu0 0
    %2614 = vmatprep.mubr.bf16.mxu0 0
    %2615 = vmatmul.mubr.bf16.gmra.mxu0 %v2286
    %v2616 = vpop.f32.mrf.mxu0
    %v2617 = vadd.f32 %v958, %v2616
    %v2618 = vpop.f32.mrf.mxu0
    %v2619 = vpop.f32.mrf.mxu0
    %v2620 = vadd.f32 %v958, %v2619
    %v2621 = vpop.f32.mrf.mxu0
    %2622 = vmatprep.mubr.bf16.mxu0 0
    %2623 = vmatmul.mubr.bf16.gmra.mxu0 %v2287
    %v2624 = vpop.f32.mrf.mxu0
    %v2625 = vadd.f32 %v958, %v2624
    %v2626 = vpop.f32.mrf.mxu0
    %v2627 = vpop.f32.mrf.mxu0
    %v2628 = vadd.f32 %v958, %v2627
    %v2629 = vpop.f32.mrf.mxu0
    %2630 = vmatprep.mubr.bf16.mxu0 0
    %2631 = vmatmul.mubr.bf16.gmra.mxu0 %v2288
    %v2632 = vpop.f32.mrf.mxu0
    %v2633 = vadd.f32 %v958, %v2632
    %v2634 = vpop.f32.mrf.mxu0
    %v2635 = vpop.f32.mrf.mxu0
    %v2636 = vadd.f32 %v958, %v2635
    %v2637 = vpop.f32.mrf.mxu0
    %2638 = vmatprep.mubr.bf16.mxu0 0
    %2639 = vmatmul.mubr.bf16.gmra.mxu0 %v2289
    %v2640 = vpop.f32.mrf.mxu0
    %v2641 = vadd.f32 %v958, %v2640
    %v2642 = vpop.f32.mrf.mxu0
    %v2643 = vpop.f32.mrf.mxu0
    %v2644 = vadd.f32 %v958, %v2643
    %v2645 = vpop.f32.mrf.mxu0
    %2646 = vmatprep.mubr.bf16.mxu0 0
    %2647 = vmatmul.mubr.bf16.gmra.mxu0 %v2290
    %v2648 = vpop.f32.mrf.mxu0
    %v2649 = vadd.f32 %v958, %v2648
    %v2650 = vpop.f32.mrf.mxu0
    %v2651 = vpop.f32.mrf.mxu0
    %v2652 = vadd.f32 %v958, %v2651
    %v2653 = vpop.f32.mrf.mxu0
    %2654 = vmatprep.mubr.bf16.mxu0 0
    %2655 = vmatmul.mubr.bf16.gmra.mxu0 %v2291
    %v2656 = vpop.f32.mrf.mxu0
    %v2657 = vadd.f32 %v958, %v2656
    %v2658 = vpop.f32.mrf.mxu0
    %v2659 = vpop.f32.mrf.mxu0
    %v2660 = vadd.f32 %v958, %v2659
    %v2661 = vpop.f32.mrf.mxu0
    %2662 = vmatprep.mubr.bf16.mxu0 0
    %2663 = vmatmul.mubr.bf16.gmra.mxu0 %v2292
    %v2664 = vpop.f32.mrf.mxu0
    %v2665 = vadd.f32 %v958, %v2664
    %v2666 = vpop.f32.mrf.mxu0
    %v2667 = vpop.f32.mrf.mxu0
    %v2668 = vadd.f32 %v958, %v2667
    %v2669 = vpop.f32.mrf.mxu0
    %2670 = vmatprep.mubr.bf16.mxu0 0
    %2671 = vmatmul.mubr.bf16.gmra.mxu0 %v2293
    %v2672 = vpop.f32.mrf.mxu0
    %v2673 = vadd.f32 %v958, %v2672
    %v2674 = vpop.f32.mrf.mxu0
    %v2675 = vpop.f32.mrf.mxu0
    %v2676 = vadd.f32 %v958, %v2675
    %v2677 = vpop.f32.mrf.mxu0
    %2678 = vdwg.mxu0
    %v2679 = vld [vmem:[#allocation4] sm:$0xff]
    %v2680 = vld [vmem:[#allocation4 + $0x8] sm:$0xff]
    %v2681 = vld [vmem:[#allocation4 + $0x10] sm:$0xff]
    %v2682 = vld [vmem:[#allocation4 + $0x18] sm:$0xff]
    %v2683 = vld [vmem:[#allocation4 + $0x20] sm:$0xff]
    %v2684 = vld [vmem:[#allocation4 + $0x28] sm:$0xff]
    %v2685 = vld [vmem:[#allocation4 + $0x30] sm:$0xff]
    %v2686 = vld [vmem:[#allocation4 + $0x38] sm:$0xff]
    %v2687 = vld [vmem:[#allocation4 + $0x40] sm:$0xff]
    %v2688 = vld [vmem:[#allocation4 + $0x48] sm:$0xff]
    %v2689 = vld [vmem:[#allocation4 + $0x50] sm:$0xff]
    %v2690 = vld [vmem:[#allocation4 + $0x58] sm:$0xff]
    %v2691 = vld [vmem:[#allocation4 + $0x60] sm:$0xff]
    %v2692 = vld [vmem:[#allocation4 + $0x68] sm:$0xff]
    %v2693 = vld [vmem:[#allocation4 + $0x70] sm:$0xff]
    %v2694 = vld [vmem:[#allocation4 + $0x78] sm:$0xff]
    %2695 = vmax.xlane.f32.xlu0 %v2617
    %v2696 = vpop.xlane.xlu0 %2695
    %2697 = vmax.xlane.f32.xlu0 %v2620
    %v2698 = vpop.xlane.xlu0 %2697
    %2699 = vmax.xlane.f32.xlu0 %v2625
    %v2700 = vpop.xlane.xlu0 %2699
    %2701 = vmax.xlane.f32.xlu0 %v2628
    %v2702 = vpop.xlane.xlu0 %2701
    %2703 = vmax.xlane.f32.xlu0 %v2633
    %v2704 = vpop.xlane.xlu0 %2703
    %2705 = vmax.xlane.f32.xlu0 %v2636
    %v2706 = vpop.xlane.xlu0 %2705
    %2707 = vmax.xlane.f32.xlu0 %v2641
    %v2708 = vpop.xlane.xlu0 %2707
    %2709 = vmax.xlane.f32.xlu0 %v2644
    %v2710 = vpop.xlane.xlu0 %2709
    %2711 = vmax.xlane.f32.xlu0 %v2649
    %v2712 = vpop.xlane.xlu0 %2711
    %2713 = vmax.xlane.f32.xlu0 %v2652
    %v2714 = vpop.xlane.xlu0 %2713
    %2715 = vmax.xlane.f32.xlu0 %v2657
    %v2716 = vpop.xlane.xlu0 %2715
    %2717 = vmax.xlane.f32.xlu0 %v2660
    %v2718 = vpop.xlane.xlu0 %2717
    %2719 = vmax.xlane.f32.xlu0 %v2665
    %v2720 = vpop.xlane.xlu0 %2719
    %2721 = vmax.xlane.f32.xlu0 %v2668
    %v2722 = vpop.xlane.xlu0 %2721
    %2723 = vmax.xlane.f32.xlu0 %v2673
    %v2724 = vpop.xlane.xlu0 %2723
    %2725 = vmax.xlane.f32.xlu0 %v2676
    %v2726 = vpop.xlane.xlu0 %2725
    %v2727 = vmax.f32 %v2679, %v2696
    %v2728 = vmax.f32 %v2680, %v2698
    %v2729 = vmax.f32 %v2681, %v2700
    %v2730 = vmax.f32 %v2682, %v2702
    %v2731 = vmax.f32 %v2683, %v2704
    %v2732 = vmax.f32 %v2684, %v2706
    %v2733 = vmax.f32 %v2685, %v2708
    %v2734 = vmax.f32 %v2686, %v2710
    %v2735 = vmax.f32 %v2687, %v2712
    %v2736 = vmax.f32 %v2688, %v2714
    %v2737 = vmax.f32 %v2689, %v2716
    %v2738 = vmax.f32 %v2690, %v2718
    %v2739 = vmax.f32 %v2691, %v2720
    %v2740 = vmax.f32 %v2692, %v2722
    %v2741 = vmax.f32 %v2693, %v2724
    %v2742 = vmax.f32 %v2694, %v2726
    %v2743 = vsub.f32 %v2679, %v2727
    %v2744 = vsub.f32 %v2680, %v2728
    %v2745 = vsub.f32 %v2681, %v2729
    %v2746 = vsub.f32 %v2682, %v2730
    %v2747 = vsub.f32 %v2683, %v2731
    %v2748 = vsub.f32 %v2684, %v2732
    %v2749 = vsub.f32 %v2685, %v2733
    %v2750 = vsub.f32 %v2686, %v2734
    %v2751 = vsub.f32 %v2687, %v2735
    %v2752 = vsub.f32 %v2688, %v2736
    %v2753 = vsub.f32 %v2689, %v2737
    %v2754 = vsub.f32 %v2690, %v2738
    %v2755 = vsub.f32 %v2691, %v2739
    %v2756 = vsub.f32 %v2692, %v2740
    %v2757 = vsub.f32 %v2693, %v2741
    %v2758 = vsub.f32 %v2694, %v2742
    %v2759 = vmul.f32 %v2743, 1.442695
    %v2760 = vpow.pop %v2759
    %v2761 = vmul.f32 %v2744, 1.442695
    %v2762 = vpow.pop %v2761
    %v2763 = vmul.f32 %v2745, 1.442695
    %v2764 = vpow.pop %v2763
    %v2765 = vmul.f32 %v2746, 1.442695
    %v2766 = vpow.pop %v2765
    %v2767 = vmul.f32 %v2747, 1.442695
    %v2768 = vpow.pop %v2767
    %v2769 = vmul.f32 %v2748, 1.442695
    %v2770 = vpow.pop %v2769
    %v2771 = vmul.f32 %v2749, 1.442695
    %v2772 = vpow.pop %v2771
    %v2773 = vmul.f32 %v2750, 1.442695
    %v2774 = vpow.pop %v2773
    %v2775 = vmul.f32 %v2751, 1.442695
    %v2776 = vpow.pop %v2775
    %v2777 = vmul.f32 %v2752, 1.442695
    %v2778 = vpow.pop %v2777
    %v2779 = vmul.f32 %v2753, 1.442695
    %v2780 = vpow.pop %v2779
    %v2781 = vmul.f32 %v2754, 1.442695
    %v2782 = vpow.pop %v2781
    %v2783 = vmul.f32 %v2755, 1.442695
    %v2784 = vpow.pop %v2783
    %v2785 = vmul.f32 %v2756, 1.442695
    %v2786 = vpow.pop %v2785
    %v2787 = vmul.f32 %v2757, 1.442695
    %v2788 = vpow.pop %v2787
    %v2789 = vmul.f32 %v2758, 1.442695
    %v2790 = vpow.pop %v2789
    %2792 = vset.pattern.permute.xlu0 0
    %2793 = vperm.xlu0 %2792, %v2727
    %v2794 = vpop.permute.xlu0 %2793
    %2797 = vset.pattern.permute.xlu0 0
    %2798 = vperm.xlu0 %2797, %v2728
    %v2799 = vpop.permute.xlu0 %2798
    %2802 = vset.pattern.permute.xlu0 0
    %2803 = vperm.xlu0 %2802, %v2729
    %v2804 = vpop.permute.xlu0 %2803
    %2807 = vset.pattern.permute.xlu0 0
    %2808 = vperm.xlu0 %2807, %v2730
    %v2809 = vpop.permute.xlu0 %2808
    %2812 = vset.pattern.permute.xlu0 0
    %2813 = vperm.xlu0 %2812, %v2731
    %v2814 = vpop.permute.xlu0 %2813
    %2817 = vset.pattern.permute.xlu0 0
    %2818 = vperm.xlu0 %2817, %v2732
    %v2819 = vpop.permute.xlu0 %2818
    %2822 = vset.pattern.permute.xlu0 0
    %2823 = vperm.xlu0 %2822, %v2733
    %v2824 = vpop.permute.xlu0 %2823
    %2827 = vset.pattern.permute.xlu0 0
    %2828 = vperm.xlu0 %2827, %v2734
    %v2829 = vpop.permute.xlu0 %2828
    %2832 = vset.pattern.permute.xlu0 0
    %2833 = vperm.xlu0 %2832, %v2735
    %v2834 = vpop.permute.xlu0 %2833
    %2837 = vset.pattern.permute.xlu0 0
    %2838 = vperm.xlu0 %2837, %v2736
    %v2839 = vpop.permute.xlu0 %2838
    %2842 = vset.pattern.permute.xlu0 0
    %2843 = vperm.xlu0 %2842, %v2737
    %v2844 = vpop.permute.xlu0 %2843
    %2847 = vset.pattern.permute.xlu0 0
    %2848 = vperm.xlu0 %2847, %v2738
    %v2849 = vpop.permute.xlu0 %2848
    %2852 = vset.pattern.permute.xlu0 0
    %2853 = vperm.xlu0 %2852, %v2739
    %v2854 = vpop.permute.xlu0 %2853
    %2857 = vset.pattern.permute.xlu0 0
    %2858 = vperm.xlu0 %2857, %v2740
    %v2859 = vpop.permute.xlu0 %2858
    %2862 = vset.pattern.permute.xlu0 0
    %2863 = vperm.xlu0 %2862, %v2741
    %v2864 = vpop.permute.xlu0 %2863
    %2867 = vset.pattern.permute.xlu0 0
    %2868 = vperm.xlu0 %2867, %v2742
    %v2869 = vpop.permute.xlu0 %2868
    %v2871 = vsub.f32 %v2617, %v2794
    %v2872 = vsub.f32 %v2620, %v2799
    %v2873 = vsub.f32 %v2625, %v2804
    %v2874 = vsub.f32 %v2628, %v2809
    %v2875 = vsub.f32 %v2633, %v2814
    %v2876 = vsub.f32 %v2636, %v2819
    %v2877 = vsub.f32 %v2641, %v2824
    %v2878 = vsub.f32 %v2644, %v2829
    %v2879 = vsub.f32 %v2649, %v2834
    %v2880 = vsub.f32 %v2652, %v2839
    %v2881 = vsub.f32 %v2657, %v2844
    %v2882 = vsub.f32 %v2660, %v2849
    %v2883 = vsub.f32 %v2665, %v2854
    %v2884 = vsub.f32 %v2668, %v2859
    %v2885 = vsub.f32 %v2673, %v2864
    %v2886 = vsub.f32 %v2676, %v2869
    %v2887 = vmul.f32 %v2871, 1.442695
    %v2888 = vpow.pop %v2887
    %v2889 = vmul.f32 %v2872, 1.442695
    %v2890 = vpow.pop %v2889
    %v2891 = vmul.f32 %v2873, 1.442695
    %v2892 = vpow.pop %v2891
    %v2893 = vmul.f32 %v2874, 1.442695
    %v2894 = vpow.pop %v2893
    %v2895 = vmul.f32 %v2875, 1.442695
    %v2896 = vpow.pop %v2895
    %v2897 = vmul.f32 %v2876, 1.442695
    %v2898 = vpow.pop %v2897
    %v2899 = vmul.f32 %v2877, 1.442695
    %v2900 = vpow.pop %v2899
    %v2901 = vmul.f32 %v2878, 1.442695
    %v2902 = vpow.pop %v2901
    %v2903 = vmul.f32 %v2879, 1.442695
    %v2904 = vpow.pop %v2903
    %v2905 = vmul.f32 %v2880, 1.442695
    %v2906 = vpow.pop %v2905
    %v2907 = vmul.f32 %v2881, 1.442695
    %v2908 = vpow.pop %v2907
    %v2909 = vmul.f32 %v2882, 1.442695
    %v2910 = vpow.pop %v2909
    %v2911 = vmul.f32 %v2883, 1.442695
    %v2912 = vpow.pop %v2911
    %v2913 = vmul.f32 %v2884, 1.442695
    %v2914 = vpow.pop %v2913
    %v2915 = vmul.f32 %v2885, 1.442695
    %v2916 = vpow.pop %v2915
    %v2917 = vmul.f32 %v2886, 1.442695
    %v2918 = vpow.pop %v2917
    %v2919 = vld [vmem:[#allocation5] sm:$0xff]
    %v2920 = vld [vmem:[#allocation5 + $0x8] sm:$0xff]
    %v2921 = vld [vmem:[#allocation5 + $0x10] sm:$0xff]
    %v2922 = vld [vmem:[#allocation5 + $0x18] sm:$0xff]
    %v2923 = vld [vmem:[#allocation5 + $0x20] sm:$0xff]
    %v2924 = vld [vmem:[#allocation5 + $0x28] sm:$0xff]
    %v2925 = vld [vmem:[#allocation5 + $0x30] sm:$0xff]
    %v2926 = vld [vmem:[#allocation5 + $0x38] sm:$0xff]
    %v2927 = vld [vmem:[#allocation5 + $0x40] sm:$0xff]
    %v2928 = vld [vmem:[#allocation5 + $0x48] sm:$0xff]
    %v2929 = vld [vmem:[#allocation5 + $0x50] sm:$0xff]
    %v2930 = vld [vmem:[#allocation5 + $0x58] sm:$0xff]
    %v2931 = vld [vmem:[#allocation5 + $0x60] sm:$0xff]
    %v2932 = vld [vmem:[#allocation5 + $0x68] sm:$0xff]
    %v2933 = vld [vmem:[#allocation5 + $0x70] sm:$0xff]
    %v2934 = vld [vmem:[#allocation5 + $0x78] sm:$0xff]
    %v2935 = vmul.f32 %v2760, %v2919
    %v2936 = vmul.f32 %v2762, %v2920
    %v2937 = vmul.f32 %v2764, %v2921
    %v2938 = vmul.f32 %v2766, %v2922
    %v2939 = vmul.f32 %v2768, %v2923
    %v2940 = vmul.f32 %v2770, %v2924
    %v2941 = vmul.f32 %v2772, %v2925
    %v2942 = vmul.f32 %v2774, %v2926
    %v2943 = vmul.f32 %v2776, %v2927
    %v2944 = vmul.f32 %v2778, %v2928
    %v2945 = vmul.f32 %v2780, %v2929
    %v2946 = vmul.f32 %v2782, %v2930
    %v2947 = vmul.f32 %v2784, %v2931
    %v2948 = vmul.f32 %v2786, %v2932
    %v2949 = vmul.f32 %v2788, %v2933
    %v2950 = vmul.f32 %v2790, %v2934
    %2951 = vadd.xlane.f32.xlu0 %v2888
    %v2952 = vpop.xlane.xlu0 %2951
    %2953 = vadd.xlane.f32.xlu0 %v2890
    %v2954 = vpop.xlane.xlu0 %2953
    %2955 = vadd.xlane.f32.xlu0 %v2892
    %v2956 = vpop.xlane.xlu0 %2955
    %2957 = vadd.xlane.f32.xlu0 %v2894
    %v2958 = vpop.xlane.xlu0 %2957
    %2959 = vadd.xlane.f32.xlu0 %v2896
    %v2960 = vpop.xlane.xlu0 %2959
    %2961 = vadd.xlane.f32.xlu0 %v2898
    %v2962 = vpop.xlane.xlu0 %2961
    %2963 = vadd.xlane.f32.xlu0 %v2900
    %v2964 = vpop.xlane.xlu0 %2963
    %2965 = vadd.xlane.f32.xlu0 %v2902
    %v2966 = vpop.xlane.xlu0 %2965
    %2967 = vadd.xlane.f32.xlu0 %v2904
    %v2968 = vpop.xlane.xlu0 %2967
    %2969 = vadd.xlane.f32.xlu0 %v2906
    %v2970 = vpop.xlane.xlu0 %2969
    %2971 = vadd.xlane.f32.xlu0 %v2908
    %v2972 = vpop.xlane.xlu0 %2971
    %2973 = vadd.xlane.f32.xlu0 %v2910
    %v2974 = vpop.xlane.xlu0 %2973
    %2975 = vadd.xlane.f32.xlu0 %v2912
    %v2976 = vpop.xlane.xlu0 %2975
    %2977 = vadd.xlane.f32.xlu0 %v2914
    %v2978 = vpop.xlane.xlu0 %2977
    %2979 = vadd.xlane.f32.xlu0 %v2916
    %v2980 = vpop.xlane.xlu0 %2979
    %2981 = vadd.xlane.f32.xlu0 %v2918
    %v2982 = vpop.xlane.xlu0 %2981
    %v2983 = vadd.f32 %v2935, %v2952
    %v2984 = vadd.f32 %v2936, %v2954
    %v2985 = vadd.f32 %v2937, %v2956
    %v2986 = vadd.f32 %v2938, %v2958
    %v2987 = vadd.f32 %v2939, %v2960
    %v2988 = vadd.f32 %v2940, %v2962
    %v2989 = vadd.f32 %v2941, %v2964
    %v2990 = vadd.f32 %v2942, %v2966
    %v2991 = vadd.f32 %v2943, %v2968
    %v2992 = vadd.f32 %v2944, %v2970
    %v2993 = vadd.f32 %v2945, %v2972
    %v2994 = vadd.f32 %v2946, %v2974
    %v2995 = vadd.f32 %v2947, %v2976
    %v2996 = vadd.f32 %v2948, %v2978
    %v2997 = vadd.f32 %v2949, %v2980
    %v2998 = vadd.f32 %v2950, %v2982
    %2999 = vst.msk [vmem:[#allocation5] sm:$0xff] %vm872, %v2983
    %3000 = vst.msk [vmem:[#allocation5 + $0x8] sm:$0xff] %vm872, %v2984
    %3001 = vst.msk [vmem:[#allocation5 + $0x10] sm:$0xff] %vm872, %v2985
    %3002 = vst.msk [vmem:[#allocation5 + $0x18] sm:$0xff] %vm872, %v2986
    %3003 = vst.msk [vmem:[#allocation5 + $0x20] sm:$0xff] %vm872, %v2987
    %3004 = vst.msk [vmem:[#allocation5 + $0x28] sm:$0xff] %vm872, %v2988
    %3005 = vst.msk [vmem:[#allocation5 + $0x30] sm:$0xff] %vm872, %v2989
    %3006 = vst.msk [vmem:[#allocation5 + $0x38] sm:$0xff] %vm872, %v2990
    %3007 = vst.msk [vmem:[#allocation5 + $0x40] sm:$0xff] %vm872, %v2991
    %3008 = vst.msk [vmem:[#allocation5 + $0x48] sm:$0xff] %vm872, %v2992
    %3009 = vst.msk [vmem:[#allocation5 + $0x50] sm:$0xff] %vm872, %v2993
    %3010 = vst.msk [vmem:[#allocation5 + $0x58] sm:$0xff] %vm872, %v2994
    %3011 = vst.msk [vmem:[#allocation5 + $0x60] sm:$0xff] %vm872, %v2995
    %3012 = vst.msk [vmem:[#allocation5 + $0x68] sm:$0xff] %vm872, %v2996
    %3013 = vst.msk [vmem:[#allocation5 + $0x70] sm:$0xff] %vm872, %v2997
    %3014 = vst.msk [vmem:[#allocation5 + $0x78] sm:$0xff] %vm872, %v2998
    %v3015 = vld [vmem:[#allocation6] sm:$0xff]
    %v3016 = vld [vmem:[#allocation6 + $0x8] sm:$0xff]
    %v3017 = vld [vmem:[#allocation6 + $0x10] sm:$0xff]
    %v3018 = vld [vmem:[#allocation6 + $0x18] sm:$0xff]
    %v3019 = vld [vmem:[#allocation6 + $0x20] sm:$0xff]
    %v3020 = vld [vmem:[#allocation6 + $0x28] sm:$0xff]
    %v3021 = vld [vmem:[#allocation6 + $0x30] sm:$0xff]
    %v3022 = vld [vmem:[#allocation6 + $0x38] sm:$0xff]
    %v3023 = vld [vmem:[#allocation6 + $0x40] sm:$0xff]
    %v3024 = vld [vmem:[#allocation6 + $0x48] sm:$0xff]
    %v3025 = vld [vmem:[#allocation6 + $0x50] sm:$0xff]
    %v3026 = vld [vmem:[#allocation6 + $0x58] sm:$0xff]
    %v3027 = vld [vmem:[#allocation6 + $0x60] sm:$0xff]
    %v3028 = vld [vmem:[#allocation6 + $0x68] sm:$0xff]
    %v3029 = vld [vmem:[#allocation6 + $0x70] sm:$0xff]
    %v3030 = vld [vmem:[#allocation6 + $0x78] sm:$0xff]
    %3032 = vset.pattern.permute.xlu0 0
    %3033 = vperm.xlu0 %3032, %v2760
    %v3034 = vpop.permute.xlu0 %3033
    %3037 = vset.pattern.permute.xlu0 0
    %3038 = vperm.xlu0 %3037, %v2762
    %v3039 = vpop.permute.xlu0 %3038
    %3042 = vset.pattern.permute.xlu0 0
    %3043 = vperm.xlu0 %3042, %v2764
    %v3044 = vpop.permute.xlu0 %3043
    %3047 = vset.pattern.permute.xlu0 0
    %3048 = vperm.xlu0 %3047, %v2766
    %v3049 = vpop.permute.xlu0 %3048
    %3052 = vset.pattern.permute.xlu0 0
    %3053 = vperm.xlu0 %3052, %v2768
    %v3054 = vpop.permute.xlu0 %3053
    %3057 = vset.pattern.permute.xlu0 0
    %3058 = vperm.xlu0 %3057, %v2770
    %v3059 = vpop.permute.xlu0 %3058
    %3062 = vset.pattern.permute.xlu0 0
    %3063 = vperm.xlu0 %3062, %v2772
    %v3064 = vpop.permute.xlu0 %3063
    %3067 = vset.pattern.permute.xlu0 0
    %3068 = vperm.xlu0 %3067, %v2774
    %v3069 = vpop.permute.xlu0 %3068
    %3072 = vset.pattern.permute.xlu0 0
    %3073 = vperm.xlu0 %3072, %v2776
    %v3074 = vpop.permute.xlu0 %3073
    %3077 = vset.pattern.permute.xlu0 0
    %3078 = vperm.xlu0 %3077, %v2778
    %v3079 = vpop.permute.xlu0 %3078
    %3082 = vset.pattern.permute.xlu0 0
    %3083 = vperm.xlu0 %3082, %v2780
    %v3084 = vpop.permute.xlu0 %3083
    %3087 = vset.pattern.permute.xlu0 0
    %3088 = vperm.xlu0 %3087, %v2782
    %v3089 = vpop.permute.xlu0 %3088
    %3092 = vset.pattern.permute.xlu0 0
    %3093 = vperm.xlu0 %3092, %v2784
    %v3094 = vpop.permute.xlu0 %3093
    %3097 = vset.pattern.permute.xlu0 0
    %3098 = vperm.xlu0 %3097, %v2786
    %v3099 = vpop.permute.xlu0 %3098
    %3102 = vset.pattern.permute.xlu0 0
    %3103 = vperm.xlu0 %3102, %v2788
    %v3104 = vpop.permute.xlu0 %3103
    %3107 = vset.pattern.permute.xlu0 0
    %3108 = vperm.xlu0 %3107, %v2790
    %v3109 = vpop.permute.xlu0 %3108
    %v3111 = vmul.f32 %v3034, %v3015
    %v3112 = vmul.f32 %v3039, %v3016
    %v3113 = vmul.f32 %v3044, %v3017
    %v3114 = vmul.f32 %v3049, %v3018
    %v3115 = vmul.f32 %v3054, %v3019
    %v3116 = vmul.f32 %v3059, %v3020
    %v3117 = vmul.f32 %v3064, %v3021
    %v3118 = vmul.f32 %v3069, %v3022
    %v3119 = vmul.f32 %v3074, %v3023
    %v3120 = vmul.f32 %v3079, %v3024
    %v3121 = vmul.f32 %v3084, %v3025
    %v3122 = vmul.f32 %v3089, %v3026
    %v3123 = vmul.f32 %v3094, %v3027
    %v3124 = vmul.f32 %v3099, %v3028
    %v3125 = vmul.f32 %v3104, %v3029
    %v3126 = vmul.f32 %v3109, %v3030
    %v3127 = vpack.c.bf16 %v2890, %v2888
    %v3128 = vpack.c.bf16 %v2894, %v2892
    %v3129 = vpack.c.bf16 %v2898, %v2896
    %v3130 = vpack.c.bf16 %v2902, %v2900
    %v3131 = vpack.c.bf16 %v2906, %v2904
    %v3132 = vpack.c.bf16 %v2910, %v2908
    %v3133 = vpack.c.bf16 %v2914, %v2912
    %v3134 = vpack.c.bf16 %v2918, %v2916
    %v3151 = vunpack.c.l.b16 %v2518
    %v3152 = vunpack.c.l.b16 %v2519
    %v3153 = vunpack.c.l.b16 %v2520
    %v3154 = vunpack.c.l.b16 %v2521
    %v3155 = vunpack.c.l.b16 %v2522
    %v3156 = vunpack.c.l.b16 %v2523
    %v3157 = vunpack.c.l.b16 %v2524
    %v3158 = vunpack.c.l.b16 %v2525
    %v3159 = vunpack.c.l.b16 %v2526
    %v3160 = vunpack.c.l.b16 %v2527
    %v3161 = vunpack.c.l.b16 %v2528
    %v3162 = vunpack.c.l.b16 %v2529
    %v3163 = vunpack.c.l.b16 %v2530
    %v3164 = vunpack.c.l.b16 %v2531
    %v3165 = vunpack.c.l.b16 %v2532
    %v3166 = vunpack.c.l.b16 %v2533
    %v3167 = vpack.c.b16 %v3152, %v3151
    %v3168 = vpack.c.b16 %v3154, %v3153
    %v3169 = vpack.c.b16 %v3156, %v3155
    %v3170 = vpack.c.b16 %v3158, %v3157
    %v3171 = vpack.c.b16 %v3160, %v3159
    %v3172 = vpack.c.b16 %v3162, %v3161
    %v3173 = vpack.c.b16 %v3164, %v3163
    %v3174 = vpack.c.b16 %v3166, %v3165
    %3183 = vmatprep.subr.bf16.mxu0 0
    %3184 = vmatpush1.bf16.msra.mxu0 %v3174
    %3185 = vmatprep.subr.bf16.mxu0 0
    %3186 = vmatpush1.bf16.msra.mxu0 %v3173
    %3187 = vmatprep.subr.bf16.mxu0 0
    %3188 = vmatpush1.bf16.msra.mxu0 %v3172
    %3189 = vmatprep.subr.bf16.mxu0 0
    %3190 = vmatpush1.bf16.msra.mxu0 %v3171
    %3191 = vmatprep.subr.bf16.mxu0 0
    %3192 = vmatpush1.bf16.msra.mxu0 %v3170
    %3193 = vmatprep.subr.bf16.mxu0 0
    %3194 = vmatpush1.bf16.msra.mxu0 %v3169
    %3195 = vmatprep.subr.bf16.mxu0 0
    %3196 = vmatpush1.bf16.msra.mxu0 %v3168
    %3197 = vmatprep.subr.bf16.mxu0 0
    %3198 = vmatpush1.bf16.msra.mxu0 %v3167
    %3199 = vmatprep.subr.bf16.mxu0 0
    %3200 = vmatpush2.bf16.msra.mxu0 0
    %3201 = vmatprep.subr.bf16.mxu0 0
    %3202 = vmatpush2.bf16.msra.mxu0 0
    %3203 = vmatprep.subr.bf16.mxu0 0
    %3204 = vmatpush2.bf16.msra.mxu0 0
    %3205 = vmatprep.subr.bf16.mxu0 0
    %3206 = vmatpush2.bf16.msra.mxu0 0
    %3207 = vmatprep.subr.bf16.mxu0 0
    %3208 = vmatpush2.bf16.msra.mxu0 0
    %3209 = vmatprep.subr.bf16.mxu0 0
    %3210 = vmatpush2.bf16.msra.mxu0 0
    %3211 = vmatprep.subr.bf16.mxu0 0
    %3212 = vmatpush2.bf16.msra.mxu0 0
    %3213 = vmatprep.subr.bf16.mxu0 0
    %3214 = vmatpush2.bf16.msra.mxu0 0
    %3215 = vmatprep.mubr.bf16.mxu0 0
    %3216 = vmatmul.mubr.bf16.gmra.mxu0 %v3127
    %v3217 = vpop.f32.mrf.mxu0
    %v3218 = vadd.f32 0.0, %v3217
    %v3219 = vpop.f32.mrf.mxu0
    %v3220 = vpop.f32.mrf.mxu0
    %v3221 = vadd.f32 0.0, %v3220
    %v3222 = vpop.f32.mrf.mxu0
    %3223 = vmatprep.mubr.bf16.mxu0 0
    %3224 = vmatmul.mubr.bf16.gmra.mxu0 %v3128
    %v3225 = vpop.f32.mrf.mxu0
    %v3226 = vadd.f32 0.0, %v3225
    %v3227 = vpop.f32.mrf.mxu0
    %v3228 = vpop.f32.mrf.mxu0
    %v3229 = vadd.f32 0.0, %v3228
    %v3230 = vpop.f32.mrf.mxu0
    %3231 = vmatprep.mubr.bf16.mxu0 0
    %3232 = vmatmul.mubr.bf16.gmra.mxu0 %v3129
    %v3233 = vpop.f32.mrf.mxu0
    %v3234 = vadd.f32 0.0, %v3233
    %v3235 = vpop.f32.mrf.mxu0
    %v3236 = vpop.f32.mrf.mxu0
    %v3237 = vadd.f32 0.0, %v3236
    %v3238 = vpop.f32.mrf.mxu0
    %3239 = vmatprep.mubr.bf16.mxu0 0
    %3240 = vmatmul.mubr.bf16.gmra.mxu0 %v3130
    %v3241 = vpop.f32.mrf.mxu0
    %v3242 = vadd.f32 0.0, %v3241
    %v3243 = vpop.f32.mrf.mxu0
    %v3244 = vpop.f32.mrf.mxu0
    %v3245 = vadd.f32 0.0, %v3244
    %v3246 = vpop.f32.mrf.mxu0
    %3247 = vmatprep.mubr.bf16.mxu0 0
    %3248 = vmatmul.mubr.bf16.gmra.mxu0 %v3131
    %v3249 = vpop.f32.mrf.mxu0
    %v3250 = vadd.f32 0.0, %v3249
    %v3251 = vpop.f32.mrf.mxu0
    %v3252 = vpop.f32.mrf.mxu0
    %v3253 = vadd.f32 0.0, %v3252
    %v3254 = vpop.f32.mrf.mxu0
    %3255 = vmatprep.mubr.bf16.mxu0 0
    %3256 = vmatmul.mubr.bf16.gmra.mxu0 %v3132
    %v3257 = vpop.f32.mrf.mxu0
    %v3258 = vadd.f32 0.0, %v3257
    %v3259 = vpop.f32.mrf.mxu0
    %v3260 = vpop.f32.mrf.mxu0
    %v3261 = vadd.f32 0.0, %v3260
    %v3262 = vpop.f32.mrf.mxu0
    %3263 = vmatprep.mubr.bf16.mxu0 0
    %3264 = vmatmul.mubr.bf16.gmra.mxu0 %v3133
    %v3265 = vpop.f32.mrf.mxu0
    %v3266 = vadd.f32 0.0, %v3265
    %v3267 = vpop.f32.mrf.mxu0
    %v3268 = vpop.f32.mrf.mxu0
    %v3269 = vadd.f32 0.0, %v3268
    %v3270 = vpop.f32.mrf.mxu0
    %3271 = vmatprep.mubr.bf16.mxu0 0
    %3272 = vmatmul.mubr.bf16.gmra.mxu0 %v3134
    %v3273 = vpop.f32.mrf.mxu0
    %v3274 = vadd.f32 0.0, %v3273
    %v3275 = vpop.f32.mrf.mxu0
    %v3276 = vpop.f32.mrf.mxu0
    %v3277 = vadd.f32 0.0, %v3276
    %v3278 = vpop.f32.mrf.mxu0
    %3279 = vdwg.mxu0
    %v3280 = vadd.f32 %v3111, %v3218
    %v3281 = vadd.f32 %v3112, %v3221
    %v3282 = vadd.f32 %v3113, %v3226
    %v3283 = vadd.f32 %v3114, %v3229
    %v3284 = vadd.f32 %v3115, %v3234
    %v3285 = vadd.f32 %v3116, %v3237
    %v3286 = vadd.f32 %v3117, %v3242
    %v3287 = vadd.f32 %v3118, %v3245
    %v3288 = vadd.f32 %v3119, %v3250
    %v3289 = vadd.f32 %v3120, %v3253
    %v3290 = vadd.f32 %v3121, %v3258
    %v3291 = vadd.f32 %v3122, %v3261
    %v3292 = vadd.f32 %v3123, %v3266
    %v3293 = vadd.f32 %v3124, %v3269
    %v3294 = vadd.f32 %v3125, %v3274
    %v3295 = vadd.f32 %v3126, %v3277
    %3296 = vst [vmem:[#allocation6] sm:$0xff] %v3280
    %3297 = vst [vmem:[#allocation6 + $0x8] sm:$0xff] %v3281
    %3298 = vst [vmem:[#allocation6 + $0x10] sm:$0xff] %v3282
    %3299 = vst [vmem:[#allocation6 + $0x18] sm:$0xff] %v3283
    %3300 = vst [vmem:[#allocation6 + $0x20] sm:$0xff] %v3284
    %3301 = vst [vmem:[#allocation6 + $0x28] sm:$0xff] %v3285
    %3302 = vst [vmem:[#allocation6 + $0x30] sm:$0xff] %v3286
    %3303 = vst [vmem:[#allocation6 + $0x38] sm:$0xff] %v3287
    %3304 = vst [vmem:[#allocation6 + $0x40] sm:$0xff] %v3288
    %3305 = vst [vmem:[#allocation6 + $0x48] sm:$0xff] %v3289
    %3306 = vst [vmem:[#allocation6 + $0x50] sm:$0xff] %v3290
    %3307 = vst [vmem:[#allocation6 + $0x58] sm:$0xff] %v3291
    %3308 = vst [vmem:[#allocation6 + $0x60] sm:$0xff] %v3292
    %3309 = vst [vmem:[#allocation6 + $0x68] sm:$0xff] %v3293
    %3310 = vst [vmem:[#allocation6 + $0x70] sm:$0xff] %v3294
    %3311 = vst [vmem:[#allocation6 + $0x78] sm:$0xff] %v3295
    %3312 = vst.msk [vmem:[#allocation4] sm:$0xff] %vm872, %v2727
    %3313 = vst.msk [vmem:[#allocation4 + $0x8] sm:$0xff] %vm872, %v2728
    %3314 = vst.msk [vmem:[#allocation4 + $0x10] sm:$0xff] %vm872, %v2729
    %3315 = vst.msk [vmem:[#allocation4 + $0x18] sm:$0xff] %vm872, %v2730
    %3316 = vst.msk [vmem:[#allocation4 + $0x20] sm:$0xff] %vm872, %v2731
    %3317 = vst.msk [vmem:[#allocation4 + $0x28] sm:$0xff] %vm872, %v2732
    %3318 = vst.msk [vmem:[#allocation4 + $0x30] sm:$0xff] %vm872, %v2733
    %3319 = vst.msk [vmem:[#allocation4 + $0x38] sm:$0xff] %vm872, %v2734
    %3320 = vst.msk [vmem:[#allocation4 + $0x40] sm:$0xff] %vm872, %v2735
    %3321 = vst.msk [vmem:[#allocation4 + $0x48] sm:$0xff] %vm872, %v2736
    %3322 = vst.msk [vmem:[#allocation4 + $0x50] sm:$0xff] %vm872, %v2737
    %3323 = vst.msk [vmem:[#allocation4 + $0x58] sm:$0xff] %vm872, %v2738
    %3324 = vst.msk [vmem:[#allocation4 + $0x60] sm:$0xff] %vm872, %v2739
    %3325 = vst.msk [vmem:[#allocation4 + $0x68] sm:$0xff] %vm872, %v2740
    %3326 = vst.msk [vmem:[#allocation4 + $0x70] sm:$0xff] %vm872, %v2741
    %3327 = vst.msk [vmem:[#allocation4 + $0x78] sm:$0xff] %vm872, %v2742
    %v3328 = vld [vmem:[#allocation6] sm:$0xff]
    %v3329 = vld [vmem:[#allocation6 + $0x8] sm:$0xff]
    %v3330 = vld [vmem:[#allocation6 + $0x10] sm:$0xff]
    %v3331 = vld [vmem:[#allocation6 + $0x18] sm:$0xff]
    %v3332 = vld [vmem:[#allocation6 + $0x20] sm:$0xff]
    %v3333 = vld [vmem:[#allocation6 + $0x28] sm:$0xff]
    %v3334 = vld [vmem:[#allocation6 + $0x30] sm:$0xff]
    %v3335 = vld [vmem:[#allocation6 + $0x38] sm:$0xff]
    %v3336 = vld [vmem:[#allocation6 + $0x40] sm:$0xff]
    %v3337 = vld [vmem:[#allocation6 + $0x48] sm:$0xff]
    %v3338 = vld [vmem:[#allocation6 + $0x50] sm:$0xff]
    %v3339 = vld [vmem:[#allocation6 + $0x58] sm:$0xff]
    %v3340 = vld [vmem:[#allocation6 + $0x60] sm:$0xff]
    %v3341 = vld [vmem:[#allocation6 + $0x68] sm:$0xff]
    %v3342 = vld [vmem:[#allocation6 + $0x70] sm:$0xff]
    %v3343 = vld [vmem:[#allocation6 + $0x78] sm:$0xff]
    %v3344 = vld [vmem:[#allocation5] sm:$0xff]
    %v3345 = vld [vmem:[#allocation5 + $0x8] sm:$0xff]
    %v3346 = vld [vmem:[#allocation5 + $0x10] sm:$0xff]
    %v3347 = vld [vmem:[#allocation5 + $0x18] sm:$0xff]
    %v3348 = vld [vmem:[#allocation5 + $0x20] sm:$0xff]
    %v3349 = vld [vmem:[#allocation5 + $0x28] sm:$0xff]
    %v3350 = vld [vmem:[#allocation5 + $0x30] sm:$0xff]
    %v3351 = vld [vmem:[#allocation5 + $0x38] sm:$0xff]
    %v3352 = vld [vmem:[#allocation5 + $0x40] sm:$0xff]
    %v3353 = vld [vmem:[#allocation5 + $0x48] sm:$0xff]
    %v3354 = vld [vmem:[#allocation5 + $0x50] sm:$0xff]
    %v3355 = vld [vmem:[#allocation5 + $0x58] sm:$0xff]
    %v3356 = vld [vmem:[#allocation5 + $0x60] sm:$0xff]
    %v3357 = vld [vmem:[#allocation5 + $0x68] sm:$0xff]
    %v3358 = vld [vmem:[#allocation5 + $0x70] sm:$0xff]
    %v3359 = vld [vmem:[#allocation5 + $0x78] sm:$0xff]
    %v3360 = vrcp.pop %v3344
    %v3361 = vrcp.pop %v3345
    %v3362 = vrcp.pop %v3346
    %v3363 = vrcp.pop %v3347
    %v3364 = vrcp.pop %v3348
    %v3365 = vrcp.pop %v3349
    %v3366 = vrcp.pop %v3350
    %v3367 = vrcp.pop %v3351
    %v3368 = vrcp.pop %v3352
    %v3369 = vrcp.pop %v3353
    %v3370 = vrcp.pop %v3354
    %v3371 = vrcp.pop %v3355
    %v3372 = vrcp.pop %v3356
    %v3373 = vrcp.pop %v3357
    %v3374 = vrcp.pop %v3358
    %v3375 = vrcp.pop %v3359
    %3377 = vset.pattern.permute.xlu0 0
    %3378 = vperm.xlu0 %3377, %v3360
    %v3379 = vpop.permute.xlu0 %3378
    %3382 = vset.pattern.permute.xlu0 0
    %3383 = vperm.xlu0 %3382, %v3361
    %v3384 = vpop.permute.xlu0 %3383
    %3387 = vset.pattern.permute.xlu0 0
    %3388 = vperm.xlu0 %3387, %v3362
    %v3389 = vpop.permute.xlu0 %3388
    %3392 = vset.pattern.permute.xlu0 0
    %3393 = vperm.xlu0 %3392, %v3363
    %v3394 = vpop.permute.xlu0 %3393
    %3397 = vset.pattern.permute.xlu0 0
    %3398 = vperm.xlu0 %3397, %v3364
    %v3399 = vpop.permute.xlu0 %3398
    %3402 = vset.pattern.permute.xlu0 0
    %3403 = vperm.xlu0 %3402, %v3365
    %v3404 = vpop.permute.xlu0 %3403
    %3407 = vset.pattern.permute.xlu0 0
    %3408 = vperm.xlu0 %3407, %v3366
    %v3409 = vpop.permute.xlu0 %3408
    %3412 = vset.pattern.permute.xlu0 0
    %3413 = vperm.xlu0 %3412, %v3367
    %v3414 = vpop.permute.xlu0 %3413
    %3417 = vset.pattern.permute.xlu0 0
    %3418 = vperm.xlu0 %3417, %v3368
    %v3419 = vpop.permute.xlu0 %3418
    %3422 = vset.pattern.permute.xlu0 0
    %3423 = vperm.xlu0 %3422, %v3369
    %v3424 = vpop.permute.xlu0 %3423
    %3427 = vset.pattern.permute.xlu0 0
    %3428 = vperm.xlu0 %3427, %v3370
    %v3429 = vpop.permute.xlu0 %3428
    %3432 = vset.pattern.permute.xlu0 0
    %3433 = vperm.xlu0 %3432, %v3371
    %v3434 = vpop.permute.xlu0 %3433
    %3437 = vset.pattern.permute.xlu0 0
    %3438 = vperm.xlu0 %3437, %v3372
    %v3439 = vpop.permute.xlu0 %3438
    %3442 = vset.pattern.permute.xlu0 0
    %3443 = vperm.xlu0 %3442, %v3373
    %v3444 = vpop.permute.xlu0 %3443
    %3447 = vset.pattern.permute.xlu0 0
    %3448 = vperm.xlu0 %3447, %v3374
    %v3449 = vpop.permute.xlu0 %3448
    %3452 = vset.pattern.permute.xlu0 0
    %3453 = vperm.xlu0 %3452, %v3375
    %v3454 = vpop.permute.xlu0 %3453
    %v3456 = vmul.f32 %v3328, %v3379
    %v3457 = vmul.f32 %v3329, %v3384
    %v3458 = vmul.f32 %v3330, %v3389
    %v3459 = vmul.f32 %v3331, %v3394
    %v3460 = vmul.f32 %v3332, %v3399
    %v3461 = vmul.f32 %v3333, %v3404
    %v3462 = vmul.f32 %v3334, %v3409
    %v3463 = vmul.f32 %v3335, %v3414
    %v3464 = vmul.f32 %v3336, %v3419
    %v3465 = vmul.f32 %v3337, %v3424
    %v3466 = vmul.f32 %v3338, %v3429
    %v3467 = vmul.f32 %v3339, %v3434
    %v3468 = vmul.f32 %v3340, %v3439
    %v3469 = vmul.f32 %v3341, %v3444
    %v3470 = vmul.f32 %v3342, %v3449
    %v3471 = vmul.f32 %v3343, %v3454
    %v3472 = vadd.f32 %v1897, %v3456
    %v3473 = vadd.f32 %v1898, %v3457
    %v3474 = vadd.f32 %v1899, %v3458
    %v3475 = vadd.f32 %v1900, %v3459
    %v3476 = vadd.f32 %v1901, %v3460
    %v3477 = vadd.f32 %v1902, %v3461
    %v3478 = vadd.f32 %v1903, %v3462
    %v3479 = vadd.f32 %v1904, %v3463
    %v3480 = vadd.f32 %v1905, %v3464
    %v3481 = vadd.f32 %v1906, %v3465
    %v3482 = vadd.f32 %v1907, %v3466
    %v3483 = vadd.f32 %v1908, %v3467
    %v3484 = vadd.f32 %v1909, %v3468
    %v3485 = vadd.f32 %v1910, %v3469
    %v3486 = vadd.f32 %v1911, %v3470
    %v3487 = vadd.f32 %v1912, %v3471
    %s3488 = scalar_lea.vmem [#allocation10], 768
    %v3489 = vld [vmem:[%s3488] sm:$0xff]
    %v3490 = vld [vmem:[%s3488 + $0x8] sm:$0xff]
    %v3491 = vld [vmem:[%s3488 + $0x10] sm:$0xff]
    %v3492 = vld [vmem:[%s3488 + $0x18] sm:$0xff]
    %v3493 = vld [vmem:[%s3488 + $0x20] sm:$0xff]
    %v3494 = vld [vmem:[%s3488 + $0x28] sm:$0xff]
    %v3495 = vld [vmem:[%s3488 + $0x30] sm:$0xff]
    %v3496 = vld [vmem:[%s3488 + $0x38] sm:$0xff]
    %v3497 = vld [vmem:[%s3488 + $0x40] sm:$0xff]
    %v3498 = vld [vmem:[%s3488 + $0x48] sm:$0xff]
    %v3499 = vld [vmem:[%s3488 + $0x50] sm:$0xff]
    %v3500 = vld [vmem:[%s3488 + $0x58] sm:$0xff]
    %v3501 = vld [vmem:[%s3488 + $0x60] sm:$0xff]
    %v3502 = vld [vmem:[%s3488 + $0x68] sm:$0xff]
    %v3503 = vld [vmem:[%s3488 + $0x70] sm:$0xff]
    %v3504 = vld [vmem:[%s3488 + $0x78] sm:$0xff]
    %v3505 = vld [vmem:[%s3488 + $0x80] sm:$0xff]
    %v3506 = vld [vmem:[%s3488 + $0x88] sm:$0xff]
    %v3507 = vld [vmem:[%s3488 + $0x90] sm:$0xff]
    %v3508 = vld [vmem:[%s3488 + $0x98] sm:$0xff]
    %v3509 = vld [vmem:[%s3488 + $0xa0] sm:$0xff]
    %v3510 = vld [vmem:[%s3488 + $0xa8] sm:$0xff]
    %v3511 = vld [vmem:[%s3488 + $0xb0] sm:$0xff]
    %v3512 = vld [vmem:[%s3488 + $0xb8] sm:$0xff]
    %v3513 = vld [vmem:[%s3488 + $0xc0] sm:$0xff]
    %v3514 = vld [vmem:[%s3488 + $0xc8] sm:$0xff]
    %v3515 = vld [vmem:[%s3488 + $0xd0] sm:$0xff]
    %v3516 = vld [vmem:[%s3488 + $0xd8] sm:$0xff]
    %v3517 = vld [vmem:[%s3488 + $0xe0] sm:$0xff]
    %v3518 = vld [vmem:[%s3488 + $0xe8] sm:$0xff]
    %v3519 = vld [vmem:[%s3488 + $0xf0] sm:$0xff]
    %v3520 = vld [vmem:[%s3488 + $0xf8] sm:$0xff]
    %v3521 = vld [vmem:[%s3488 + $0x100] sm:$0xff]
    %v3522 = vld [vmem:[%s3488 + $0x108] sm:$0xff]
    %v3523 = vld [vmem:[%s3488 + $0x110] sm:$0xff]
    %v3524 = vld [vmem:[%s3488 + $0x118] sm:$0xff]
    %v3525 = vld [vmem:[%s3488 + $0x120] sm:$0xff]
    %v3526 = vld [vmem:[%s3488 + $0x128] sm:$0xff]
    %v3527 = vld [vmem:[%s3488 + $0x130] sm:$0xff]
    %v3528 = vld [vmem:[%s3488 + $0x138] sm:$0xff]
    %v3529 = vld [vmem:[%s3488 + $0x140] sm:$0xff]
    %v3530 = vld [vmem:[%s3488 + $0x148] sm:$0xff]
    %v3531 = vld [vmem:[%s3488 + $0x150] sm:$0xff]
    %v3532 = vld [vmem:[%s3488 + $0x158] sm:$0xff]
    %v3533 = vld [vmem:[%s3488 + $0x160] sm:$0xff]
    %v3534 = vld [vmem:[%s3488 + $0x168] sm:$0xff]
    %v3535 = vld [vmem:[%s3488 + $0x170] sm:$0xff]
    %v3536 = vld [vmem:[%s3488 + $0x178] sm:$0xff]
    %s3537 = scalar_lea.vmem %s5, 2
    %v3538 = vld [vmem:[%s3537] ss:$4 sm:$0x7]
    %v3540 = vlaneseq
    %v3541 = vshrl.u32 %v3540, 7
    %v3542 = vsub.s32 0, %v3541
    %v3543 = vrot.slane %v3538, %v3542
    %v3544 = vlaneseq
    %v3545 = vshrl.u32 %v3544, 7
    %v3546 = vsub.s32 1, %v3545
    %v3547 = vrot.slane %v3538, %v3546
    %v3548 = vlaneseq
    %v3549 = vshrl.u32 %v3548, 7
    %v3550 = vsub.s32 2, %v3549
    %v3551 = vrot.slane %v3538, %v3550
    %3555 = vmatprep.subr.mxu0 %v3535
    %3556 = vmatpush1.msra.mxu0 %v3534
    %3557 = vmatprep.subr.mxu0 %v3532
    %3558 = vmatpush1.msra.mxu0 %v3531
    %3559 = vmatprep.subr.mxu0 %v3529
    %3560 = vmatpush1.msra.mxu0 %v3528
    %3561 = vmatprep.subr.mxu0 %v3526
    %3562 = vmatpush1.msra.mxu0 %v3525
    %3563 = vmatprep.subr.mxu0 %v3523
    %3564 = vmatpush1.msra.mxu0 %v3522
    %3565 = vmatprep.subr.mxu0 %v3520
    %3566 = vmatpush1.msra.mxu0 %v3519
    %3567 = vmatprep.subr.mxu0 %v3517
    %3568 = vmatpush1.msra.mxu0 %v3516
    %3569 = vmatprep.subr.mxu0 %v3514
    %3570 = vmatpush1.msra.mxu0 %v3513
    %3571 = vmatprep.subr.mxu0 %v3511
    %3572 = vmatpush1.msra.mxu0 %v3510
    %3573 = vmatprep.subr.mxu0 %v3508
    %3574 = vmatpush1.msra.mxu0 %v3507
    %3575 = vmatprep.subr.mxu0 %v3505
    %3576 = vmatpush1.msra.mxu0 %v3504
    %3577 = vmatprep.subr.mxu0 %v3502
    %3578 = vmatpush1.msra.mxu0 %v3501
    %3579 = vmatprep.subr.mxu0 %v3499
    %3580 = vmatpush1.msra.mxu0 %v3498
    %3581 = vmatprep.subr.mxu0 %v3496
    %3582 = vmatpush1.msra.mxu0 %v3495
    %3583 = vmatprep.subr.mxu0 %v3493
    %3584 = vmatpush1.msra.mxu0 %v3492
    %3585 = vmatprep.subr.mxu0 %v3490
    %3586 = vmatpush1.msra.mxu0 %v3489
    %3587 = vmatprep.subr.mxu0 0.0
    %3588 = vmatpush2.msra.mxu0 0.0
    %3589 = vmatprep.subr.mxu0 0.0
    %3590 = vmatpush2.msra.mxu0 0.0
    %3591 = vmatprep.subr.mxu0 0.0
    %3592 = vmatpush2.msra.mxu0 0.0
    %3593 = vmatprep.subr.mxu0 0.0
    %3594 = vmatpush2.msra.mxu0 0.0
    %3595 = vmatprep.subr.mxu0 0.0
    %3596 = vmatpush2.msra.mxu0 0.0
    %3597 = vmatprep.subr.mxu0 0.0
    %3598 = vmatpush2.msra.mxu0 0.0
    %3599 = vmatprep.subr.mxu0 0.0
    %3600 = vmatpush2.msra.mxu0 0.0
    %3601 = vmatprep.subr.mxu0 0.0
    %3602 = vmatpush2.msra.mxu0 0.0
    %3603 = vmatprep.subr.mxu0 0.0
    %3604 = vmatpush2.msra.mxu0 0.0
    %3605 = vmatprep.subr.mxu0 0.0
    %3606 = vmatpush2.msra.mxu0 0.0
    %3607 = vmatprep.subr.mxu0 0.0
    %3608 = vmatpush2.msra.mxu0 0.0
    %3609 = vmatprep.subr.mxu0 0.0
    %3610 = vmatpush2.msra.mxu0 0.0
    %3611 = vmatprep.subr.mxu0 0.0
    %3612 = vmatpush2.msra.mxu0 0.0
    %3613 = vmatprep.subr.mxu0 0.0
    %3614 = vmatpush2.msra.mxu0 0.0
    %3615 = vmatprep.subr.mxu0 0.0
    %3616 = vmatpush2.msra.mxu0 0.0
    %3617 = vmatprep.subr.mxu0 0.0
    %3618 = vmatpush2.msra.mxu0 0.0
    %3619 = vmatprep.mubr.f32.mxu0 0.0
    %3620 = vmatmul.mubr.f32.gmra.mxu0 %v3472
    %v3621 = vpop.f32.mrf.mxu0
    %v3622 = vadd.f32 %v3543, %v3621
    %v3623 = vpop.f32.mrf.mxu0
    %v3624 = vadd.f32 %v3547, %v3623
    %3625 = vmatprep.mubr.f32.mxu0 0.0
    %3626 = vmatmul.mubr.f32.gmra.mxu0 %v3473
    %v3627 = vpop.f32.mrf.mxu0
    %v3628 = vadd.f32 %v3543, %v3627
    %v3629 = vpop.f32.mrf.mxu0
    %v3630 = vadd.f32 %v3547, %v3629
    %3631 = vmatprep.mubr.f32.mxu0 0.0
    %3632 = vmatmul.mubr.f32.gmra.mxu0 %v3474
    %v3633 = vpop.f32.mrf.mxu0
    %v3634 = vadd.f32 %v3543, %v3633
    %v3635 = vpop.f32.mrf.mxu0
    %v3636 = vadd.f32 %v3547, %v3635
    %3637 = vmatprep.mubr.f32.mxu0 0.0
    %3638 = vmatmul.mubr.f32.gmra.mxu0 %v3475
    %v3639 = vpop.f32.mrf.mxu0
    %v3640 = vadd.f32 %v3543, %v3639
    %v3641 = vpop.f32.mrf.mxu0
    %v3642 = vadd.f32 %v3547, %v3641
    %3643 = vmatprep.mubr.f32.mxu0 0.0
    %3644 = vmatmul.mubr.f32.gmra.mxu0 %v3476
    %v3645 = vpop.f32.mrf.mxu0
    %v3646 = vadd.f32 %v3543, %v3645
    %v3647 = vpop.f32.mrf.mxu0
    %v3648 = vadd.f32 %v3547, %v3647
    %3649 = vmatprep.mubr.f32.mxu0 0.0
    %3650 = vmatmul.mubr.f32.gmra.mxu0 %v3477
    %v3651 = vpop.f32.mrf.mxu0
    %v3652 = vadd.f32 %v3543, %v3651
    %v3653 = vpop.f32.mrf.mxu0
    %v3654 = vadd.f32 %v3547, %v3653
    %3655 = vmatprep.mubr.f32.mxu0 0.0
    %3656 = vmatmul.mubr.f32.gmra.mxu0 %v3478
    %v3657 = vpop.f32.mrf.mxu0
    %v3658 = vadd.f32 %v3543, %v3657
    %v3659 = vpop.f32.mrf.mxu0
    %v3660 = vadd.f32 %v3547, %v3659
    %3661 = vmatprep.mubr.f32.mxu0 0.0
    %3662 = vmatmul.mubr.f32.gmra.mxu0 %v3479
    %v3663 = vpop.f32.mrf.mxu0
    %v3664 = vadd.f32 %v3543, %v3663
    %v3665 = vpop.f32.mrf.mxu0
    %v3666 = vadd.f32 %v3547, %v3665
    %3667 = vmatprep.mubr.f32.mxu0 0.0
    %3668 = vmatmul.mubr.f32.gmra.mxu0 %v3480
    %v3669 = vpop.f32.mrf.mxu0
    %v3670 = vadd.f32 %v3543, %v3669
    %v3671 = vpop.f32.mrf.mxu0
    %v3672 = vadd.f32 %v3547, %v3671
    %3673 = vmatprep.mubr.f32.mxu0 0.0
    %3674 = vmatmul.mubr.f32.gmra.mxu0 %v3481
    %v3675 = vpop.f32.mrf.mxu0
    %v3676 = vadd.f32 %v3543, %v3675
    %v3677 = vpop.f32.mrf.mxu0
    %v3678 = vadd.f32 %v3547, %v3677
    %3679 = vmatprep.mubr.f32.mxu0 0.0
    %3680 = vmatmul.mubr.f32.gmra.mxu0 %v3482
    %v3681 = vpop.f32.mrf.mxu0
    %v3682 = vadd.f32 %v3543, %v3681
    %v3683 = vpop.f32.mrf.mxu0
    %v3684 = vadd.f32 %v3547, %v3683
    %3685 = vmatprep.mubr.f32.mxu0 0.0
    %3686 = vmatmul.mubr.f32.gmra.mxu0 %v3483
    %v3687 = vpop.f32.mrf.mxu0
    %v3688 = vadd.f32 %v3543, %v3687
    %v3689 = vpop.f32.mrf.mxu0
    %v3690 = vadd.f32 %v3547, %v3689
    %3691 = vmatprep.mubr.f32.mxu0 0.0
    %3692 = vmatmul.mubr.f32.gmra.mxu0 %v3484
    %v3693 = vpop.f32.mrf.mxu0
    %v3694 = vadd.f32 %v3543, %v3693
    %v3695 = vpop.f32.mrf.mxu0
    %v3696 = vadd.f32 %v3547, %v3695
    %3697 = vmatprep.mubr.f32.mxu0 0.0
    %3698 = vmatmul.mubr.f32.gmra.mxu0 %v3485
    %v3699 = vpop.f32.mrf.mxu0
    %v3700 = vadd.f32 %v3543, %v3699
    %v3701 = vpop.f32.mrf.mxu0
    %v3702 = vadd.f32 %v3547, %v3701
    %3703 = vmatprep.mubr.f32.mxu0 0.0
    %3704 = vmatmul.mubr.f32.gmra.mxu0 %v3486
    %v3705 = vpop.f32.mrf.mxu0
    %v3706 = vadd.f32 %v3543, %v3705
    %v3707 = vpop.f32.mrf.mxu0
    %v3708 = vadd.f32 %v3547, %v3707
    %3709 = vmatprep.mubr.f32.mxu0 0.0
    %3710 = vmatmul.mubr.f32.gmra.mxu0 %v3487
    %v3711 = vpop.f32.mrf.mxu0
    %v3712 = vadd.f32 %v3543, %v3711
    %v3713 = vpop.f32.mrf.mxu0
    %v3714 = vadd.f32 %v3547, %v3713
    %3715 = vdwg.mxu0
    %3716 = vmatprep.subr.mxu0 0.0
    %3717 = vmatpush1.msra.mxu0 %v3536
    %3718 = vmatprep.subr.mxu0 0.0
    %3719 = vmatpush1.msra.mxu0 %v3533
    %3720 = vmatprep.subr.mxu0 0.0
    %3721 = vmatpush1.msra.mxu0 %v3530
    %3722 = vmatprep.subr.mxu0 0.0
    %3723 = vmatpush1.msra.mxu0 %v3527
    %3724 = vmatprep.subr.mxu0 0.0
    %3725 = vmatpush1.msra.mxu0 %v3524
    %3726 = vmatprep.subr.mxu0 0.0
    %3727 = vmatpush1.msra.mxu0 %v3521
    %3728 = vmatprep.subr.mxu0 0.0
    %3729 = vmatpush1.msra.mxu0 %v3518
    %3730 = vmatprep.subr.mxu0 0.0
    %3731 = vmatpush1.msra.mxu0 %v3515
    %3732 = vmatprep.subr.mxu0 0.0
    %3733 = vmatpush1.msra.mxu0 %v3512
    %3734 = vmatprep.subr.mxu0 0.0
    %3735 = vmatpush1.msra.mxu0 %v3509
    %3736 = vmatprep.subr.mxu0 0.0
    %3737 = vmatpush1.msra.mxu0 %v3506
    %3738 = vmatprep.subr.mxu0 0.0
    %3739 = vmatpush1.msra.mxu0 %v3503
    %3740 = vmatprep.subr.mxu0 0.0
    %3741 = vmatpush1.msra.mxu0 %v3500
    %3742 = vmatprep.subr.mxu0 0.0
    %3743 = vmatpush1.msra.mxu0 %v3497
    %3744 = vmatprep.subr.mxu0 0.0
    %3745 = vmatpush1.msra.mxu0 %v3494
    %3746 = vmatprep.subr.mxu0 0.0
    %3747 = vmatpush1.msra.mxu0 %v3491
    %3748 = vmatprep.subr.mxu0 0.0
    %3749 = vmatpush2.msra.mxu0 0.0
    %3750 = vmatprep.subr.mxu0 0.0
    %3751 = vmatpush2.msra.mxu0 0.0
    %3752 = vmatprep.subr.mxu0 0.0
    %3753 = vmatpush2.msra.mxu0 0.0
    %3754 = vmatprep.subr.mxu0 0.0
    %3755 = vmatpush2.msra.mxu0 0.0
    %3756 = vmatprep.subr.mxu0 0.0
    %3757 = vmatpush2.msra.mxu0 0.0
    %3758 = vmatprep.subr.mxu0 0.0
    %3759 = vmatpush2.msra.mxu0 0.0
    %3760 = vmatprep.subr.mxu0 0.0
    %3761 = vmatpush2.msra.mxu0 0.0
    %3762 = vmatprep.subr.mxu0 0.0
    %3763 = vmatpush2.msra.mxu0 0.0
    %3764 = vmatprep.subr.mxu0 0.0
    %3765 = vmatpush2.msra.mxu0 0.0
    %3766 = vmatprep.subr.mxu0 0.0
    %3767 = vmatpush2.msra.mxu0 0.0
    %3768 = vmatprep.subr.mxu0 0.0
    %3769 = vmatpush2.msra.mxu0 0.0
    %3770 = vmatprep.subr.mxu0 0.0
    %3771 = vmatpush2.msra.mxu0 0.0
    %3772 = vmatprep.subr.mxu0 0.0
    %3773 = vmatpush2.msra.mxu0 0.0
    %3774 = vmatprep.subr.mxu0 0.0
    %3775 = vmatpush2.msra.mxu0 0.0
    %3776 = vmatprep.subr.mxu0 0.0
    %3777 = vmatpush2.msra.mxu0 0.0
    %3778 = vmatprep.subr.mxu0 0.0
    %3779 = vmatpush2.msra.mxu0 0.0
    %3780 = vmatprep.mubr.f32.mxu0 0.0
    %3781 = vmatmul.mubr.f32.gmra.mxu0 %v3472
    %v3782 = vpop.f32.mrf.mxu0
    %v3783 = vadd.f32 %v3551, %v3782
    %v3784 = vpop.f32.mrf.mxu0
    %3785 = vmatprep.mubr.f32.mxu0 0.0
    %3786 = vmatmul.mubr.f32.gmra.mxu0 %v3473
    %v3787 = vpop.f32.mrf.mxu0
    %v3788 = vadd.f32 %v3551, %v3787
    %v3789 = vpop.f32.mrf.mxu0
    %3790 = vmatprep.mubr.f32.mxu0 0.0
    %3791 = vmatmul.mubr.f32.gmra.mxu0 %v3474
    %v3792 = vpop.f32.mrf.mxu0
    %v3793 = vadd.f32 %v3551, %v3792
    %v3794 = vpop.f32.mrf.mxu0
    %3795 = vmatprep.mubr.f32.mxu0 0.0
    %3796 = vmatmul.mubr.f32.gmra.mxu0 %v3475
    %v3797 = vpop.f32.mrf.mxu0
    %v3798 = vadd.f32 %v3551, %v3797
    %v3799 = vpop.f32.mrf.mxu0
    %3800 = vmatprep.mubr.f32.mxu0 0.0
    %3801 = vmatmul.mubr.f32.gmra.mxu0 %v3476
    %v3802 = vpop.f32.mrf.mxu0
    %v3803 = vadd.f32 %v3551, %v3802
    %v3804 = vpop.f32.mrf.mxu0
    %3805 = vmatprep.mubr.f32.mxu0 0.0
    %3806 = vmatmul.mubr.f32.gmra.mxu0 %v3477
    %v3807 = vpop.f32.mrf.mxu0
    %v3808 = vadd.f32 %v3551, %v3807
    %v3809 = vpop.f32.mrf.mxu0
    %3810 = vmatprep.mubr.f32.mxu0 0.0
    %3811 = vmatmul.mubr.f32.gmra.mxu0 %v3478
    %v3812 = vpop.f32.mrf.mxu0
    %v3813 = vadd.f32 %v3551, %v3812
    %v3814 = vpop.f32.mrf.mxu0
    %3815 = vmatprep.mubr.f32.mxu0 0.0
    %3816 = vmatmul.mubr.f32.gmra.mxu0 %v3479
    %v3817 = vpop.f32.mrf.mxu0
    %v3818 = vadd.f32 %v3551, %v3817
    %v3819 = vpop.f32.mrf.mxu0
    %3820 = vmatprep.mubr.f32.mxu0 0.0
    %3821 = vmatmul.mubr.f32.gmra.mxu0 %v3480
    %v3822 = vpop.f32.mrf.mxu0
    %v3823 = vadd.f32 %v3551, %v3822
    %v3824 = vpop.f32.mrf.mxu0
    %3825 = vmatprep.mubr.f32.mxu0 0.0
    %3826 = vmatmul.mubr.f32.gmra.mxu0 %v3481
    %v3827 = vpop.f32.mrf.mxu0
    %v3828 = vadd.f32 %v3551, %v3827
    %v3829 = vpop.f32.mrf.mxu0
    %3830 = vmatprep.mubr.f32.mxu0 0.0
    %3831 = vmatmul.mubr.f32.gmra.mxu0 %v3482
    %v3832 = vpop.f32.mrf.mxu0
    %v3833 = vadd.f32 %v3551, %v3832
    %v3834 = vpop.f32.mrf.mxu0
    %3835 = vmatprep.mubr.f32.mxu0 0.0
    %3836 = vmatmul.mubr.f32.gmra.mxu0 %v3483
    %v3837 = vpop.f32.mrf.mxu0
    %v3838 = vadd.f32 %v3551, %v3837
    %v3839 = vpop.f32.mrf.mxu0
    %3840 = vmatprep.mubr.f32.mxu0 0.0
    %3841 = vmatmul.mubr.f32.gmra.mxu0 %v3484
    %v3842 = vpop.f32.mrf.mxu0
    %v3843 = vadd.f32 %v3551, %v3842
    %v3844 = vpop.f32.mrf.mxu0
    %3845 = vmatprep.mubr.f32.mxu0 0.0
    %3846 = vmatmul.mubr.f32.gmra.mxu0 %v3485
    %v3847 = vpop.f32.mrf.mxu0
    %v3848 = vadd.f32 %v3551, %v3847
    %v3849 = vpop.f32.mrf.mxu0
    %3850 = vmatprep.mubr.f32.mxu0 0.0
    %3851 = vmatmul.mubr.f32.gmra.mxu0 %v3486
    %v3852 = vpop.f32.mrf.mxu0
    %v3853 = vadd.f32 %v3551, %v3852
    %v3854 = vpop.f32.mrf.mxu0
    %3855 = vmatprep.mubr.f32.mxu0 0.0
    %3856 = vmatmul.mubr.f32.gmra.mxu0 %v3487
    %v3857 = vpop.f32.mrf.mxu0
    %v3858 = vadd.f32 %v3551, %v3857
    %v3859 = vpop.f32.mrf.mxu0
    %3860 = vdwg.mxu0
    %v3861 = vpack.c.bf16 %v3628, %v3622
    %v3862 = vpack.c.bf16 %v3640, %v3634
    %v3863 = vpack.c.bf16 %v3652, %v3646
    %v3864 = vpack.c.bf16 %v3664, %v3658
    %v3865 = vpack.c.bf16 %v3676, %v3670
    %v3866 = vpack.c.bf16 %v3688, %v3682
    %v3867 = vpack.c.bf16 %v3700, %v3694
    %v3868 = vpack.c.bf16 %v3712, %v3706
    %v3869 = vpack.c.bf16 %v3630, %v3624
    %v3870 = vpack.c.bf16 %v3642, %v3636
    %v3871 = vpack.c.bf16 %v3654, %v3648
    %v3872 = vpack.c.bf16 %v3666, %v3660
    %v3873 = vpack.c.bf16 %v3678, %v3672
    %v3874 = vpack.c.bf16 %v3690, %v3684
    %v3875 = vpack.c.bf16 %v3702, %v3696
    %v3876 = vpack.c.bf16 %v3714, %v3708
    %v3885 = vunpack.c.l.b16 %v3869
    %v3886 = vunpack.c.h.b16 %v3869
    %v3887 = vunpack.c.l.b16 %v3870
    %v3888 = vunpack.c.h.b16 %v3870
    %v3889 = vunpack.c.l.b16 %v3871
    %v3890 = vunpack.c.h.b16 %v3871
    %v3891 = vunpack.c.l.b16 %v3872
    %v3892 = vunpack.c.h.b16 %v3872
    %v3893 = vunpack.c.l.b16 %v3873
    %v3894 = vunpack.c.h.b16 %v3873
    %v3895 = vunpack.c.l.b16 %v3874
    %v3896 = vunpack.c.h.b16 %v3874
    %v3897 = vunpack.c.l.b16 %v3875
    %v3898 = vunpack.c.h.b16 %v3875
    %v3899 = vunpack.c.l.b16 %v3876
    %v3900 = vunpack.c.h.b16 %v3876
    %v3901 = vpack.c.b16 %v3885, %v3885
    %v3902 = vpack.c.b16 %v3886, %v3886
    %v3903 = vpack.c.b16 %v3887, %v3887
    %v3904 = vpack.c.b16 %v3888, %v3888
    %v3905 = vpack.c.b16 %v3889, %v3889
    %v3906 = vpack.c.b16 %v3890, %v3890
    %v3907 = vpack.c.b16 %v3891, %v3891
    %v3908 = vpack.c.b16 %v3892, %v3892
    %v3909 = vpack.c.b16 %v3893, %v3893
    %v3910 = vpack.c.b16 %v3894, %v3894
    %v3911 = vpack.c.b16 %v3895, %v3895
    %v3912 = vpack.c.b16 %v3896, %v3896
    %v3913 = vpack.c.b16 %v3897, %v3897
    %v3914 = vpack.c.b16 %v3898, %v3898
    %v3915 = vpack.c.b16 %v3899, %v3899
    %v3916 = vpack.c.b16 %v3900, %v3900
    %3933 = vst [vmem:[#allocation2] sm:$0xf] %v3901
    %3934 = vst [vmem:[#allocation2 + $0x4] sm:$0xf] %v3902
    %3935 = vst [vmem:[#allocation2 + $0x8] sm:$0xf] %v3903
    %3936 = vst [vmem:[#allocation2 + $0xc] sm:$0xf] %v3904
    %3937 = vst [vmem:[#allocation2 + $0x10] sm:$0xf] %v3905
    %3938 = vst [vmem:[#allocation2 + $0x14] sm:$0xf] %v3906
    %3939 = vst [vmem:[#allocation2 + $0x18] sm:$0xf] %v3907
    %3940 = vst [vmem:[#allocation2 + $0x1c] sm:$0xf] %v3908
    %3941 = vst [vmem:[#allocation2 + $0x20] sm:$0xf] %v3909
    %3942 = vst [vmem:[#allocation2 + $0x24] sm:$0xf] %v3910
    %3943 = vst [vmem:[#allocation2 + $0x28] sm:$0xf] %v3911
    %3944 = vst [vmem:[#allocation2 + $0x2c] sm:$0xf] %v3912
    %3945 = vst [vmem:[#allocation2 + $0x30] sm:$0xf] %v3913
    %3946 = vst [vmem:[#allocation2 + $0x34] sm:$0xf] %v3914
    %3947 = vst [vmem:[#allocation2 + $0x38] sm:$0xf] %v3915
    %3948 = vst [vmem:[#allocation2 + $0x3c] sm:$0xf] %v3916
    %v3949 = vpack.c.bf16 %v3788, %v3783
    %v3950 = vpack.c.bf16 %v3798, %v3793
    %v3951 = vpack.c.bf16 %v3808, %v3803
    %v3952 = vpack.c.bf16 %v3818, %v3813
    %v3953 = vpack.c.bf16 %v3828, %v3823
    %v3954 = vpack.c.bf16 %v3838, %v3833
    %v3955 = vpack.c.bf16 %v3848, %v3843
    %v3956 = vpack.c.bf16 %v3858, %v3853
    %v3965 = vunpack.c.l.b16 %v3949
    %v3966 = vunpack.c.h.b16 %v3949
    %v3967 = vunpack.c.l.b16 %v3950
    %v3968 = vunpack.c.h.b16 %v3950
    %v3969 = vunpack.c.l.b16 %v3951
    %v3970 = vunpack.c.h.b16 %v3951
    %v3971 = vunpack.c.l.b16 %v3952
    %v3972 = vunpack.c.h.b16 %v3952
    %v3973 = vunpack.c.l.b16 %v3953
    %v3974 = vunpack.c.h.b16 %v3953
    %v3975 = vunpack.c.l.b16 %v3954
    %v3976 = vunpack.c.h.b16 %v3954
    %v3977 = vunpack.c.l.b16 %v3955
    %v3978 = vunpack.c.h.b16 %v3955
    %v3979 = vunpack.c.l.b16 %v3956
    %v3980 = vunpack.c.h.b16 %v3956
    %v3981 = vpack.c.b16 %v3965, %v3965
    %v3982 = vpack.c.b16 %v3966, %v3966
    %v3983 = vpack.c.b16 %v3967, %v3967
    %v3984 = vpack.c.b16 %v3968, %v3968
    %v3985 = vpack.c.b16 %v3969, %v3969
    %v3986 = vpack.c.b16 %v3970, %v3970
    %v3987 = vpack.c.b16 %v3971, %v3971
    %v3988 = vpack.c.b16 %v3972, %v3972
    %v3989 = vpack.c.b16 %v3973, %v3973
    %v3990 = vpack.c.b16 %v3974, %v3974
    %v3991 = vpack.c.b16 %v3975, %v3975
    %v3992 = vpack.c.b16 %v3976, %v3976
    %v3993 = vpack.c.b16 %v3977, %v3977
    %v3994 = vpack.c.b16 %v3978, %v3978
    %v3995 = vpack.c.b16 %v3979, %v3979
    %v3996 = vpack.c.b16 %v3980, %v3980
    %4013 = vst [vmem:[#allocation3] sm:$0xf] %v3981
    %4014 = vst [vmem:[#allocation3 + $0x4] sm:$0xf] %v3982
    %4015 = vst [vmem:[#allocation3 + $0x8] sm:$0xf] %v3983
    %4016 = vst [vmem:[#allocation3 + $0xc] sm:$0xf] %v3984
    %4017 = vst [vmem:[#allocation3 + $0x10] sm:$0xf] %v3985
    %4018 = vst [vmem:[#allocation3 + $0x14] sm:$0xf] %v3986
    %4019 = vst [vmem:[#allocation3 + $0x18] sm:$0xf] %v3987
    %4020 = vst [vmem:[#allocation3 + $0x1c] sm:$0xf] %v3988
    %4021 = vst [vmem:[#allocation3 + $0x20] sm:$0xf] %v3989
    %4022 = vst [vmem:[#allocation3 + $0x24] sm:$0xf] %v3990
    %4023 = vst [vmem:[#allocation3 + $0x28] sm:$0xf] %v3991
    %4024 = vst [vmem:[#allocation3 + $0x2c] sm:$0xf] %v3992
    %4025 = vst [vmem:[#allocation3 + $0x30] sm:$0xf] %v3993
    %4026 = vst [vmem:[#allocation3 + $0x34] sm:$0xf] %v3994
    %4027 = vst [vmem:[#allocation3 + $0x38] sm:$0xf] %v3995
    %4028 = vst [vmem:[#allocation3 + $0x3c] sm:$0xf] %v3996
    %4029 = vst.msk [vmem:[#allocation4] sm:$0xff] %vm872, -1e+30
    %4030 = vst.msk [vmem:[#allocation4 + $0x8] sm:$0xff] %vm872, -1e+30
    %4031 = vst.msk [vmem:[#allocation4 + $0x10] sm:$0xff] %vm872, -1e+30
    %4032 = vst.msk [vmem:[#allocation4 + $0x18] sm:$0xff] %vm872, -1e+30
    %4033 = vst.msk [vmem:[#allocation4 + $0x20] sm:$0xff] %vm872, -1e+30
    %4034 = vst.msk [vmem:[#allocation4 + $0x28] sm:$0xff] %vm872, -1e+30
    %4035 = vst.msk [vmem:[#allocation4 + $0x30] sm:$0xff] %vm872, -1e+30
    %4036 = vst.msk [vmem:[#allocation4 + $0x38] sm:$0xff] %vm872, -1e+30
    %4037 = vst.msk [vmem:[#allocation4 + $0x40] sm:$0xff] %vm872, -1e+30
    %4038 = vst.msk [vmem:[#allocation4 + $0x48] sm:$0xff] %vm872, -1e+30
    %4039 = vst.msk [vmem:[#allocation4 + $0x50] sm:$0xff] %vm872, -1e+30
    %4040 = vst.msk [vmem:[#allocation4 + $0x58] sm:$0xff] %vm872, -1e+30
    %4041 = vst.msk [vmem:[#allocation4 + $0x60] sm:$0xff] %vm872, -1e+30
    %4042 = vst.msk [vmem:[#allocation4 + $0x68] sm:$0xff] %vm872, -1e+30
    %4043 = vst.msk [vmem:[#allocation4 + $0x70] sm:$0xff] %vm872, -1e+30
    %4044 = vst.msk [vmem:[#allocation4 + $0x78] sm:$0xff] %vm872, -1e+30
    %4045 = vst.msk [vmem:[#allocation5] sm:$0xff] %vm872, 0.0
    %4046 = vst.msk [vmem:[#allocation5 + $0x8] sm:$0xff] %vm872, 0.0
    %4047 = vst.msk [vmem:[#allocation5 + $0x10] sm:$0xff] %vm872, 0.0
    %4048 = vst.msk [vmem:[#allocation5 + $0x18] sm:$0xff] %vm872, 0.0
    %4049 = vst.msk [vmem:[#allocation5 + $0x20] sm:$0xff] %vm872, 0.0
    %4050 = vst.msk [vmem:[#allocation5 + $0x28] sm:$0xff] %vm872, 0.0
    %4051 = vst.msk [vmem:[#allocation5 + $0x30] sm:$0xff] %vm872, 0.0
    %4052 = vst.msk [vmem:[#allocation5 + $0x38] sm:$0xff] %vm872, 0.0
    %4053 = vst.msk [vmem:[#allocation5 + $0x40] sm:$0xff] %vm872, 0.0
    %4054 = vst.msk [vmem:[#allocation5 + $0x48] sm:$0xff] %vm872, 0.0
    %4055 = vst.msk [vmem:[#allocation5 + $0x50] sm:$0xff] %vm872, 0.0
    %4056 = vst.msk [vmem:[#allocation5 + $0x58] sm:$0xff] %vm872, 0.0
    %4057 = vst.msk [vmem:[#allocation5 + $0x60] sm:$0xff] %vm872, 0.0
    %4058 = vst.msk [vmem:[#allocation5 + $0x68] sm:$0xff] %vm872, 0.0
    %4059 = vst.msk [vmem:[#allocation5 + $0x70] sm:$0xff] %vm872, 0.0
    %4060 = vst.msk [vmem:[#allocation5 + $0x78] sm:$0xff] %vm872, 0.0
    %4061 = vst [vmem:[#allocation6] sm:$0xff] 0.0
    %4062 = vst [vmem:[#allocation6 + $0x8] sm:$0xff] 0.0
    %4063 = vst [vmem:[#allocation6 + $0x10] sm:$0xff] 0.0
    %4064 = vst [vmem:[#allocation6 + $0x18] sm:$0xff] 0.0
    %4065 = vst [vmem:[#allocation6 + $0x20] sm:$0xff] 0.0
    %4066 = vst [vmem:[#allocation6 + $0x28] sm:$0xff] 0.0
    %4067 = vst [vmem:[#allocation6 + $0x30] sm:$0xff] 0.0
    %4068 = vst [vmem:[#allocation6 + $0x38] sm:$0xff] 0.0
    %4069 = vst [vmem:[#allocation6 + $0x40] sm:$0xff] 0.0
    %4070 = vst [vmem:[#allocation6 + $0x48] sm:$0xff] 0.0
    %4071 = vst [vmem:[#allocation6 + $0x50] sm:$0xff] 0.0
    %4072 = vst [vmem:[#allocation6 + $0x58] sm:$0xff] 0.0
    %4073 = vst [vmem:[#allocation6 + $0x60] sm:$0xff] 0.0
    %4074 = vst [vmem:[#allocation6 + $0x68] sm:$0xff] 0.0
    %4075 = vst [vmem:[#allocation6 + $0x70] sm:$0xff] 0.0
    %4076 = vst [vmem:[#allocation6 + $0x78] sm:$0xff] 0.0
    %v4077 = vld [vmem:[#allocation2] sm:$0xf]
    %v4078 = vld [vmem:[#allocation2 + $0x4] sm:$0xf]
    %v4079 = vld [vmem:[#allocation2 + $0x8] sm:$0xf]
    %v4080 = vld [vmem:[#allocation2 + $0xc] sm:$0xf]
    %v4081 = vld [vmem:[#allocation2 + $0x10] sm:$0xf]
    %v4082 = vld [vmem:[#allocation2 + $0x14] sm:$0xf]
    %v4083 = vld [vmem:[#allocation2 + $0x18] sm:$0xf]
    %v4084 = vld [vmem:[#allocation2 + $0x1c] sm:$0xf]
    %v4085 = vld [vmem:[#allocation2 + $0x20] sm:$0xf]
    %v4086 = vld [vmem:[#allocation2 + $0x24] sm:$0xf]
    %v4087 = vld [vmem:[#allocation2 + $0x28] sm:$0xf]
    %v4088 = vld [vmem:[#allocation2 + $0x2c] sm:$0xf]
    %v4089 = vld [vmem:[#allocation2 + $0x30] sm:$0xf]
    %v4090 = vld [vmem:[#allocation2 + $0x34] sm:$0xf]
    %v4091 = vld [vmem:[#allocation2 + $0x38] sm:$0xf]
    %v4092 = vld [vmem:[#allocation2 + $0x3c] sm:$0xf]
    %v4093 = vld [vmem:[#allocation3] sm:$0xf]
    %v4094 = vld [vmem:[#allocation3 + $0x4] sm:$0xf]
    %v4095 = vld [vmem:[#allocation3 + $0x8] sm:$0xf]
    %v4096 = vld [vmem:[#allocation3 + $0xc] sm:$0xf]
    %v4097 = vld [vmem:[#allocation3 + $0x10] sm:$0xf]
    %v4098 = vld [vmem:[#allocation3 + $0x14] sm:$0xf]
    %v4099 = vld [vmem:[#allocation3 + $0x18] sm:$0xf]
    %v4100 = vld [vmem:[#allocation3 + $0x1c] sm:$0xf]
    %v4101 = vld [vmem:[#allocation3 + $0x20] sm:$0xf]
    %v4102 = vld [vmem:[#allocation3 + $0x24] sm:$0xf]
    %v4103 = vld [vmem:[#allocation3 + $0x28] sm:$0xf]
    %v4104 = vld [vmem:[#allocation3 + $0x2c] sm:$0xf]
    %v4105 = vld [vmem:[#allocation3 + $0x30] sm:$0xf]
    %v4106 = vld [vmem:[#allocation3 + $0x34] sm:$0xf]
    %v4107 = vld [vmem:[#allocation3 + $0x38] sm:$0xf]
    %v4108 = vld [vmem:[#allocation3 + $0x3c] sm:$0xf]
    %v4125 = vunpack.c.l.b16 %v4077
    %v4126 = vunpack.c.l.b16 %v4078
    %v4127 = vunpack.c.l.b16 %v4079
    %v4128 = vunpack.c.l.b16 %v4080
    %v4129 = vunpack.c.l.b16 %v4081
    %v4130 = vunpack.c.l.b16 %v4082
    %v4131 = vunpack.c.l.b16 %v4083
    %v4132 = vunpack.c.l.b16 %v4084
    %v4133 = vunpack.c.l.b16 %v4085
    %v4134 = vunpack.c.l.b16 %v4086
    %v4135 = vunpack.c.l.b16 %v4087
    %v4136 = vunpack.c.l.b16 %v4088
    %v4137 = vunpack.c.l.b16 %v4089
    %v4138 = vunpack.c.l.b16 %v4090
    %v4139 = vunpack.c.l.b16 %v4091
    %v4140 = vunpack.c.l.b16 %v4092
    %v4141 = vpack.c.b16 %v4126, %v4125
    %v4142 = vpack.c.b16 %v4128, %v4127
    %v4143 = vpack.c.b16 %v4130, %v4129
    %v4144 = vpack.c.b16 %v4132, %v4131
    %v4145 = vpack.c.b16 %v4134, %v4133
    %v4146 = vpack.c.b16 %v4136, %v4135
    %v4147 = vpack.c.b16 %v4138, %v4137
    %v4148 = vpack.c.b16 %v4140, %v4139
    %4157 = vmatprep.subr.bf16.mxu0 0
    %4158 = vmatpush1.bf16.xpose.msra.mxu0 %v4148
    %4159 = vmatprep.subr.bf16.mxu0 0
    %4160 = vmatpush1.bf16.xpose.msra.mxu0 %v4147
    %4161 = vmatprep.subr.bf16.mxu0 0
    %4162 = vmatpush1.bf16.xpose.msra.mxu0 %v4146
    %4163 = vmatprep.subr.bf16.mxu0 0
    %4164 = vmatpush1.bf16.xpose.msra.mxu0 %v4145
    %4165 = vmatprep.subr.bf16.mxu0 0
    %4166 = vmatpush1.bf16.xpose.msra.mxu0 %v4144
    %4167 = vmatprep.subr.bf16.mxu0 0
    %4168 = vmatpush1.bf16.xpose.msra.mxu0 %v4143
    %4169 = vmatprep.subr.bf16.mxu0 0
    %4170 = vmatpush1.bf16.xpose.msra.mxu0 %v4142
    %4171 = vmatprep.subr.bf16.mxu0 0
    %4172 = vmatpush1.bf16.xpose.msra.mxu0 %v4141
    %4173 = vmatprep.subr.bf16.mxu0 0
    %4174 = vmatpush2.bf16.xpose.msra.mxu0 0
    %4175 = vmatprep.subr.bf16.mxu0 0
    %4176 = vmatpush2.bf16.xpose.msra.mxu0 0
    %4177 = vmatprep.subr.bf16.mxu0 0
    %4178 = vmatpush2.bf16.xpose.msra.mxu0 0
    %4179 = vmatprep.subr.bf16.mxu0 0
    %4180 = vmatpush2.bf16.xpose.msra.mxu0 0
    %4181 = vmatprep.subr.bf16.mxu0 0
    %4182 = vmatpush2.bf16.xpose.msra.mxu0 0
    %4183 = vmatprep.subr.bf16.mxu0 0
    %4184 = vmatpush2.bf16.xpose.msra.mxu0 0
    %4185 = vmatprep.subr.bf16.mxu0 0
    %4186 = vmatpush2.bf16.xpose.msra.mxu0 0
    %4187 = vmatprep.subr.bf16.mxu0 0
    %4188 = vmatpush2.bf16.xpose.msra.mxu0 0
    %4189 = vmatprep.mubr.bf16.mxu0 0
    %4190 = vmatmul.mubr.bf16.gmra.mxu0 %v3861
    %v4191 = vpop.f32.mrf.mxu0
    %v4192 = vadd.f32 %v958, %v4191
    %v4193 = vpop.f32.mrf.mxu0
    %v4194 = vpop.f32.mrf.mxu0
    %v4195 = vadd.f32 %v958, %v4194
    %v4196 = vpop.f32.mrf.mxu0
    %4197 = vmatprep.mubr.bf16.mxu0 0
    %4198 = vmatmul.mubr.bf16.gmra.mxu0 %v3862
    %v4199 = vpop.f32.mrf.mxu0
    %v4200 = vadd.f32 %v958, %v4199
    %v4201 = vpop.f32.mrf.mxu0
    %v4202 = vpop.f32.mrf.mxu0
    %v4203 = vadd.f32 %v958, %v4202
    %v4204 = vpop.f32.mrf.mxu0
    %4205 = vmatprep.mubr.bf16.mxu0 0
    %4206 = vmatmul.mubr.bf16.gmra.mxu0 %v3863
    %v4207 = vpop.f32.mrf.mxu0
    %v4208 = vadd.f32 %v958, %v4207
    %v4209 = vpop.f32.mrf.mxu0
    %v4210 = vpop.f32.mrf.mxu0
    %v4211 = vadd.f32 %v958, %v4210
    %v4212 = vpop.f32.mrf.mxu0
    %4213 = vmatprep.mubr.bf16.mxu0 0
    %4214 = vmatmul.mubr.bf16.gmra.mxu0 %v3864
    %v4215 = vpop.f32.mrf.mxu0
    %v4216 = vadd.f32 %v958, %v4215
    %v4217 = vpop.f32.mrf.mxu0
    %v4218 = vpop.f32.mrf.mxu0
    %v4219 = vadd.f32 %v958, %v4218
    %v4220 = vpop.f32.mrf.mxu0
    %4221 = vmatprep.mubr.bf16.mxu0 0
    %4222 = vmatmul.mubr.bf16.gmra.mxu0 %v3865
    %v4223 = vpop.f32.mrf.mxu0
    %v4224 = vadd.f32 %v958, %v4223
    %v4225 = vpop.f32.mrf.mxu0
    %v4226 = vpop.f32.mrf.mxu0
    %v4227 = vadd.f32 %v958, %v4226
    %v4228 = vpop.f32.mrf.mxu0
    %4229 = vmatprep.mubr.bf16.mxu0 0
    %4230 = vmatmul.mubr.bf16.gmra.mxu0 %v3866
    %v4231 = vpop.f32.mrf.mxu0
    %v4232 = vadd.f32 %v958, %v4231
    %v4233 = vpop.f32.mrf.mxu0
    %v4234 = vpop.f32.mrf.mxu0
    %v4235 = vadd.f32 %v958, %v4234
    %v4236 = vpop.f32.mrf.mxu0
    %4237 = vmatprep.mubr.bf16.mxu0 0
    %4238 = vmatmul.mubr.bf16.gmra.mxu0 %v3867
    %v4239 = vpop.f32.mrf.mxu0
    %v4240 = vadd.f32 %v958, %v4239
    %v4241 = vpop.f32.mrf.mxu0
    %v4242 = vpop.f32.mrf.mxu0
    %v4243 = vadd.f32 %v958, %v4242
    %v4244 = vpop.f32.mrf.mxu0
    %4245 = vmatprep.mubr.bf16.mxu0 0
    %4246 = vmatmul.mubr.bf16.gmra.mxu0 %v3868
    %v4247 = vpop.f32.mrf.mxu0
    %v4248 = vadd.f32 %v958, %v4247
    %v4249 = vpop.f32.mrf.mxu0
    %v4250 = vpop.f32.mrf.mxu0
    %v4251 = vadd.f32 %v958, %v4250
    %v4252 = vpop.f32.mrf.mxu0
    %4253 = vdwg.mxu0
    %v4254 = vld [vmem:[#allocation4] sm:$0xff]
    %v4255 = vld [vmem:[#allocation4 + $0x8] sm:$0xff]
    %v4256 = vld [vmem:[#allocation4 + $0x10] sm:$0xff]
    %v4257 = vld [vmem:[#allocation4 + $0x18] sm:$0xff]
    %v4258 = vld [vmem:[#allocation4 + $0x20] sm:$0xff]
    %v4259 = vld [vmem:[#allocation4 + $0x28] sm:$0xff]
    %v4260 = vld [vmem:[#allocation4 + $0x30] sm:$0xff]
    %v4261 = vld [vmem:[#allocation4 + $0x38] sm:$0xff]
    %v4262 = vld [vmem:[#allocation4 + $0x40] sm:$0xff]
    %v4263 = vld [vmem:[#allocation4 + $0x48] sm:$0xff]
    %v4264 = vld [vmem:[#allocation4 + $0x50] sm:$0xff]
    %v4265 = vld [vmem:[#allocation4 + $0x58] sm:$0xff]
    %v4266 = vld [vmem:[#allocation4 + $0x60] sm:$0xff]
    %v4267 = vld [vmem:[#allocation4 + $0x68] sm:$0xff]
    %v4268 = vld [vmem:[#allocation4 + $0x70] sm:$0xff]
    %v4269 = vld [vmem:[#allocation4 + $0x78] sm:$0xff]
    %4270 = vmax.xlane.f32.xlu0 %v4192
    %v4271 = vpop.xlane.xlu0 %4270
    %4272 = vmax.xlane.f32.xlu0 %v4195
    %v4273 = vpop.xlane.xlu0 %4272
    %4274 = vmax.xlane.f32.xlu0 %v4200
    %v4275 = vpop.xlane.xlu0 %4274
    %4276 = vmax.xlane.f32.xlu0 %v4203
    %v4277 = vpop.xlane.xlu0 %4276
    %4278 = vmax.xlane.f32.xlu0 %v4208
    %v4279 = vpop.xlane.xlu0 %4278
    %4280 = vmax.xlane.f32.xlu0 %v4211
    %v4281 = vpop.xlane.xlu0 %4280
    %4282 = vmax.xlane.f32.xlu0 %v4216
    %v4283 = vpop.xlane.xlu0 %4282
    %4284 = vmax.xlane.f32.xlu0 %v4219
    %v4285 = vpop.xlane.xlu0 %4284
    %4286 = vmax.xlane.f32.xlu0 %v4224
    %v4287 = vpop.xlane.xlu0 %4286
    %4288 = vmax.xlane.f32.xlu0 %v4227
    %v4289 = vpop.xlane.xlu0 %4288
    %4290 = vmax.xlane.f32.xlu0 %v4232
    %v4291 = vpop.xlane.xlu0 %4290
    %4292 = vmax.xlane.f32.xlu0 %v4235
    %v4293 = vpop.xlane.xlu0 %4292
    %4294 = vmax.xlane.f32.xlu0 %v4240
    %v4295 = vpop.xlane.xlu0 %4294
    %4296 = vmax.xlane.f32.xlu0 %v4243
    %v4297 = vpop.xlane.xlu0 %4296
    %4298 = vmax.xlane.f32.xlu0 %v4248
    %v4299 = vpop.xlane.xlu0 %4298
    %4300 = vmax.xlane.f32.xlu0 %v4251
    %v4301 = vpop.xlane.xlu0 %4300
    %v4302 = vmax.f32 %v4254, %v4271
    %v4303 = vmax.f32 %v4255, %v4273
    %v4304 = vmax.f32 %v4256, %v4275
    %v4305 = vmax.f32 %v4257, %v4277
    %v4306 = vmax.f32 %v4258, %v4279
    %v4307 = vmax.f32 %v4259, %v4281
    %v4308 = vmax.f32 %v4260, %v4283
    %v4309 = vmax.f32 %v4261, %v4285
    %v4310 = vmax.f32 %v4262, %v4287
    %v4311 = vmax.f32 %v4263, %v4289
    %v4312 = vmax.f32 %v4264, %v4291
    %v4313 = vmax.f32 %v4265, %v4293
    %v4314 = vmax.f32 %v4266, %v4295
    %v4315 = vmax.f32 %v4267, %v4297
    %v4316 = vmax.f32 %v4268, %v4299
    %v4317 = vmax.f32 %v4269, %v4301
    %v4318 = vsub.f32 %v4254, %v4302
    %v4319 = vsub.f32 %v4255, %v4303
    %v4320 = vsub.f32 %v4256, %v4304
    %v4321 = vsub.f32 %v4257, %v4305
    %v4322 = vsub.f32 %v4258, %v4306
    %v4323 = vsub.f32 %v4259, %v4307
    %v4324 = vsub.f32 %v4260, %v4308
    %v4325 = vsub.f32 %v4261, %v4309
    %v4326 = vsub.f32 %v4262, %v4310
    %v4327 = vsub.f32 %v4263, %v4311
    %v4328 = vsub.f32 %v4264, %v4312
    %v4329 = vsub.f32 %v4265, %v4313
    %v4330 = vsub.f32 %v4266, %v4314
    %v4331 = vsub.f32 %v4267, %v4315
    %v4332 = vsub.f32 %v4268, %v4316
    %v4333 = vsub.f32 %v4269, %v4317
    %v4334 = vmul.f32 %v4318, 1.442695
    %v4335 = vpow.pop %v4334
    %v4336 = vmul.f32 %v4319, 1.442695
    %v4337 = vpow.pop %v4336
    %v4338 = vmul.f32 %v4320, 1.442695
    %v4339 = vpow.pop %v4338
    %v4340 = vmul.f32 %v4321, 1.442695
    %v4341 = vpow.pop %v4340
    %v4342 = vmul.f32 %v4322, 1.442695
    %v4343 = vpow.pop %v4342
    %v4344 = vmul.f32 %v4323, 1.442695
    %v4345 = vpow.pop %v4344
    %v4346 = vmul.f32 %v4324, 1.442695
    %v4347 = vpow.pop %v4346
    %v4348 = vmul.f32 %v4325, 1.442695
    %v4349 = vpow.pop %v4348
    %v4350 = vmul.f32 %v4326, 1.442695
    %v4351 = vpow.pop %v4350
    %v4352 = vmul.f32 %v4327, 1.442695
    %v4353 = vpow.pop %v4352
    %v4354 = vmul.f32 %v4328, 1.442695
    %v4355 = vpow.pop %v4354
    %v4356 = vmul.f32 %v4329, 1.442695
    %v4357 = vpow.pop %v4356
    %v4358 = vmul.f32 %v4330, 1.442695
    %v4359 = vpow.pop %v4358
    %v4360 = vmul.f32 %v4331, 1.442695
    %v4361 = vpow.pop %v4360
    %v4362 = vmul.f32 %v4332, 1.442695
    %v4363 = vpow.pop %v4362
    %v4364 = vmul.f32 %v4333, 1.442695
    %v4365 = vpow.pop %v4364
    %4367 = vset.pattern.permute.xlu0 0
    %4368 = vperm.xlu0 %4367, %v4302
    %v4369 = vpop.permute.xlu0 %4368
    %4372 = vset.pattern.permute.xlu0 0
    %4373 = vperm.xlu0 %4372, %v4303
    %v4374 = vpop.permute.xlu0 %4373
    %4377 = vset.pattern.permute.xlu0 0
    %4378 = vperm.xlu0 %4377, %v4304
    %v4379 = vpop.permute.xlu0 %4378
    %4382 = vset.pattern.permute.xlu0 0
    %4383 = vperm.xlu0 %4382, %v4305
    %v4384 = vpop.permute.xlu0 %4383
    %4387 = vset.pattern.permute.xlu0 0
    %4388 = vperm.xlu0 %4387, %v4306
    %v4389 = vpop.permute.xlu0 %4388
    %4392 = vset.pattern.permute.xlu0 0
    %4393 = vperm.xlu0 %4392, %v4307
    %v4394 = vpop.permute.xlu0 %4393
    %4397 = vset.pattern.permute.xlu0 0
    %4398 = vperm.xlu0 %4397, %v4308
    %v4399 = vpop.permute.xlu0 %4398
    %4402 = vset.pattern.permute.xlu0 0
    %4403 = vperm.xlu0 %4402, %v4309
    %v4404 = vpop.permute.xlu0 %4403
    %4407 = vset.pattern.permute.xlu0 0
    %4408 = vperm.xlu0 %4407, %v4310
    %v4409 = vpop.permute.xlu0 %4408
    %4412 = vset.pattern.permute.xlu0 0
    %4413 = vperm.xlu0 %4412, %v4311
    %v4414 = vpop.permute.xlu0 %4413
    %4417 = vset.pattern.permute.xlu0 0
    %4418 = vperm.xlu0 %4417, %v4312
    %v4419 = vpop.permute.xlu0 %4418
    %4422 = vset.pattern.permute.xlu0 0
    %4423 = vperm.xlu0 %4422, %v4313
    %v4424 = vpop.permute.xlu0 %4423
    %4427 = vset.pattern.permute.xlu0 0
    %4428 = vperm.xlu0 %4427, %v4314
    %v4429 = vpop.permute.xlu0 %4428
    %4432 = vset.pattern.permute.xlu0 0
    %4433 = vperm.xlu0 %4432, %v4315
    %v4434 = vpop.permute.xlu0 %4433
    %4437 = vset.pattern.permute.xlu0 0
    %4438 = vperm.xlu0 %4437, %v4316
    %v4439 = vpop.permute.xlu0 %4438
    %4442 = vset.pattern.permute.xlu0 0
    %4443 = vperm.xlu0 %4442, %v4317
    %v4444 = vpop.permute.xlu0 %4443
    %v4446 = vsub.f32 %v4192, %v4369
    %v4447 = vsub.f32 %v4195, %v4374
    %v4448 = vsub.f32 %v4200, %v4379
    %v4449 = vsub.f32 %v4203, %v4384
    %v4450 = vsub.f32 %v4208, %v4389
    %v4451 = vsub.f32 %v4211, %v4394
    %v4452 = vsub.f32 %v4216, %v4399
    %v4453 = vsub.f32 %v4219, %v4404
    %v4454 = vsub.f32 %v4224, %v4409
    %v4455 = vsub.f32 %v4227, %v4414
    %v4456 = vsub.f32 %v4232, %v4419
    %v4457 = vsub.f32 %v4235, %v4424
    %v4458 = vsub.f32 %v4240, %v4429
    %v4459 = vsub.f32 %v4243, %v4434
    %v4460 = vsub.f32 %v4248, %v4439
    %v4461 = vsub.f32 %v4251, %v4444
    %v4462 = vmul.f32 %v4446, 1.442695
    %v4463 = vpow.pop %v4462
    %v4464 = vmul.f32 %v4447, 1.442695
    %v4465 = vpow.pop %v4464
    %v4466 = vmul.f32 %v4448, 1.442695
    %v4467 = vpow.pop %v4466
    %v4468 = vmul.f32 %v4449, 1.442695
    %v4469 = vpow.pop %v4468
    %v4470 = vmul.f32 %v4450, 1.442695
    %v4471 = vpow.pop %v4470
    %v4472 = vmul.f32 %v4451, 1.442695
    %v4473 = vpow.pop %v4472
    %v4474 = vmul.f32 %v4452, 1.442695
    %v4475 = vpow.pop %v4474
    %v4476 = vmul.f32 %v4453, 1.442695
    %v4477 = vpow.pop %v4476
    %v4478 = vmul.f32 %v4454, 1.442695
    %v4479 = vpow.pop %v4478
    %v4480 = vmul.f32 %v4455, 1.442695
    %v4481 = vpow.pop %v4480
    %v4482 = vmul.f32 %v4456, 1.442695
    %v4483 = vpow.pop %v4482
    %v4484 = vmul.f32 %v4457, 1.442695
    %v4485 = vpow.pop %v4484
    %v4486 = vmul.f32 %v4458, 1.442695
    %v4487 = vpow.pop %v4486
    %v4488 = vmul.f32 %v4459, 1.442695
    %v4489 = vpow.pop %v4488
    %v4490 = vmul.f32 %v4460, 1.442695
    %v4491 = vpow.pop %v4490
    %v4492 = vmul.f32 %v4461, 1.442695
    %v4493 = vpow.pop %v4492
    %v4494 = vld [vmem:[#allocation5] sm:$0xff]
    %v4495 = vld [vmem:[#allocation5 + $0x8] sm:$0xff]
    %v4496 = vld [vmem:[#allocation5 + $0x10] sm:$0xff]
    %v4497 = vld [vmem:[#allocation5 + $0x18] sm:$0xff]
    %v4498 = vld [vmem:[#allocation5 + $0x20] sm:$0xff]
    %v4499 = vld [vmem:[#allocation5 + $0x28] sm:$0xff]
    %v4500 = vld [vmem:[#allocation5 + $0x30] sm:$0xff]
    %v4501 = vld [vmem:[#allocation5 + $0x38] sm:$0xff]
    %v4502 = vld [vmem:[#allocation5 + $0x40] sm:$0xff]
    %v4503 = vld [vmem:[#allocation5 + $0x48] sm:$0xff]
    %v4504 = vld [vmem:[#allocation5 + $0x50] sm:$0xff]
    %v4505 = vld [vmem:[#allocation5 + $0x58] sm:$0xff]
    %v4506 = vld [vmem:[#allocation5 + $0x60] sm:$0xff]
    %v4507 = vld [vmem:[#allocation5 + $0x68] sm:$0xff]
    %v4508 = vld [vmem:[#allocation5 + $0x70] sm:$0xff]
    %v4509 = vld [vmem:[#allocation5 + $0x78] sm:$0xff]
    %v4510 = vmul.f32 %v4335, %v4494
    %v4511 = vmul.f32 %v4337, %v4495
    %v4512 = vmul.f32 %v4339, %v4496
    %v4513 = vmul.f32 %v4341, %v4497
    %v4514 = vmul.f32 %v4343, %v4498
    %v4515 = vmul.f32 %v4345, %v4499
    %v4516 = vmul.f32 %v4347, %v4500
    %v4517 = vmul.f32 %v4349, %v4501
    %v4518 = vmul.f32 %v4351, %v4502
    %v4519 = vmul.f32 %v4353, %v4503
    %v4520 = vmul.f32 %v4355, %v4504
    %v4521 = vmul.f32 %v4357, %v4505
    %v4522 = vmul.f32 %v4359, %v4506
    %v4523 = vmul.f32 %v4361, %v4507
    %v4524 = vmul.f32 %v4363, %v4508
    %v4525 = vmul.f32 %v4365, %v4509
    %4526 = vadd.xlane.f32.xlu0 %v4463
    %v4527 = vpop.xlane.xlu0 %4526
    %4528 = vadd.xlane.f32.xlu0 %v4465
    %v4529 = vpop.xlane.xlu0 %4528
    %4530 = vadd.xlane.f32.xlu0 %v4467
    %v4531 = vpop.xlane.xlu0 %4530
    %4532 = vadd.xlane.f32.xlu0 %v4469
    %v4533 = vpop.xlane.xlu0 %4532
    %4534 = vadd.xlane.f32.xlu0 %v4471
    %v4535 = vpop.xlane.xlu0 %4534
    %4536 = vadd.xlane.f32.xlu0 %v4473
    %v4537 = vpop.xlane.xlu0 %4536
    %4538 = vadd.xlane.f32.xlu0 %v4475
    %v4539 = vpop.xlane.xlu0 %4538
    %4540 = vadd.xlane.f32.xlu0 %v4477
    %v4541 = vpop.xlane.xlu0 %4540
    %4542 = vadd.xlane.f32.xlu0 %v4479
    %v4543 = vpop.xlane.xlu0 %4542
    %4544 = vadd.xlane.f32.xlu0 %v4481
    %v4545 = vpop.xlane.xlu0 %4544
    %4546 = vadd.xlane.f32.xlu0 %v4483
    %v4547 = vpop.xlane.xlu0 %4546
    %4548 = vadd.xlane.f32.xlu0 %v4485
    %v4549 = vpop.xlane.xlu0 %4548
    %4550 = vadd.xlane.f32.xlu0 %v4487
    %v4551 = vpop.xlane.xlu0 %4550
    %4552 = vadd.xlane.f32.xlu0 %v4489
    %v4553 = vpop.xlane.xlu0 %4552
    %4554 = vadd.xlane.f32.xlu0 %v4491
    %v4555 = vpop.xlane.xlu0 %4554
    %4556 = vadd.xlane.f32.xlu0 %v4493
    %v4557 = vpop.xlane.xlu0 %4556
    %v4558 = vadd.f32 %v4510, %v4527
    %v4559 = vadd.f32 %v4511, %v4529
    %v4560 = vadd.f32 %v4512, %v4531
    %v4561 = vadd.f32 %v4513, %v4533
    %v4562 = vadd.f32 %v4514, %v4535
    %v4563 = vadd.f32 %v4515, %v4537
    %v4564 = vadd.f32 %v4516, %v4539
    %v4565 = vadd.f32 %v4517, %v4541
    %v4566 = vadd.f32 %v4518, %v4543
    %v4567 = vadd.f32 %v4519, %v4545
    %v4568 = vadd.f32 %v4520, %v4547
    %v4569 = vadd.f32 %v4521, %v4549
    %v4570 = vadd.f32 %v4522, %v4551
    %v4571 = vadd.f32 %v4523, %v4553
    %v4572 = vadd.f32 %v4524, %v4555
    %v4573 = vadd.f32 %v4525, %v4557
    %4574 = vst.msk [vmem:[#allocation5] sm:$0xff] %vm872, %v4558
    %4575 = vst.msk [vmem:[#allocation5 + $0x8] sm:$0xff] %vm872, %v4559
    %4576 = vst.msk [vmem:[#allocation5 + $0x10] sm:$0xff] %vm872, %v4560
    %4577 = vst.msk [vmem:[#allocation5 + $0x18] sm:$0xff] %vm872, %v4561
    %4578 = vst.msk [vmem:[#allocation5 + $0x20] sm:$0xff] %vm872, %v4562
    %4579 = vst.msk [vmem:[#allocation5 + $0x28] sm:$0xff] %vm872, %v4563
    %4580 = vst.msk [vmem:[#allocation5 + $0x30] sm:$0xff] %vm872, %v4564
    %4581 = vst.msk [vmem:[#allocation5 + $0x38] sm:$0xff] %vm872, %v4565
    %4582 = vst.msk [vmem:[#allocation5 + $0x40] sm:$0xff] %vm872, %v4566
    %4583 = vst.msk [vmem:[#allocation5 + $0x48] sm:$0xff] %vm872, %v4567
    %4584 = vst.msk [vmem:[#allocation5 + $0x50] sm:$0xff] %vm872, %v4568
    %4585 = vst.msk [vmem:[#allocation5 + $0x58] sm:$0xff] %vm872, %v4569
    %4586 = vst.msk [vmem:[#allocation5 + $0x60] sm:$0xff] %vm872, %v4570
    %4587 = vst.msk [vmem:[#allocation5 + $0x68] sm:$0xff] %vm872, %v4571
    %4588 = vst.msk [vmem:[#allocation5 + $0x70] sm:$0xff] %vm872, %v4572
    %4589 = vst.msk [vmem:[#allocation5 + $0x78] sm:$0xff] %vm872, %v4573
    %v4590 = vld [vmem:[#allocation6] sm:$0xff]
    %v4591 = vld [vmem:[#allocation6 + $0x8] sm:$0xff]
    %v4592 = vld [vmem:[#allocation6 + $0x10] sm:$0xff]
    %v4593 = vld [vmem:[#allocation6 + $0x18] sm:$0xff]
    %v4594 = vld [vmem:[#allocation6 + $0x20] sm:$0xff]
    %v4595 = vld [vmem:[#allocation6 + $0x28] sm:$0xff]
    %v4596 = vld [vmem:[#allocation6 + $0x30] sm:$0xff]
    %v4597 = vld [vmem:[#allocation6 + $0x38] sm:$0xff]
    %v4598 = vld [vmem:[#allocation6 + $0x40] sm:$0xff]
    %v4599 = vld [vmem:[#allocation6 + $0x48] sm:$0xff]
    %v4600 = vld [vmem:[#allocation6 + $0x50] sm:$0xff]
    %v4601 = vld [vmem:[#allocation6 + $0x58] sm:$0xff]
    %v4602 = vld [vmem:[#allocation6 + $0x60] sm:$0xff]
    %v4603 = vld [vmem:[#allocation6 + $0x68] sm:$0xff]
    %v4604 = vld [vmem:[#allocation6 + $0x70] sm:$0xff]
    %v4605 = vld [vmem:[#allocation6 + $0x78] sm:$0xff]
    %4607 = vset.pattern.permute.xlu0 0
    %4608 = vperm.xlu0 %4607, %v4335
    %v4609 = vpop.permute.xlu0 %4608
    %4612 = vset.pattern.permute.xlu0 0
    %4613 = vperm.xlu0 %4612, %v4337
    %v4614 = vpop.permute.xlu0 %4613
    %4617 = vset.pattern.permute.xlu0 0
    %4618 = vperm.xlu0 %4617, %v4339
    %v4619 = vpop.permute.xlu0 %4618
    %4622 = vset.pattern.permute.xlu0 0
    %4623 = vperm.xlu0 %4622, %v4341
    %v4624 = vpop.permute.xlu0 %4623
    %4627 = vset.pattern.permute.xlu0 0
    %4628 = vperm.xlu0 %4627, %v4343
    %v4629 = vpop.permute.xlu0 %4628
    %4632 = vset.pattern.permute.xlu0 0
    %4633 = vperm.xlu0 %4632, %v4345
    %v4634 = vpop.permute.xlu0 %4633
    %4637 = vset.pattern.permute.xlu0 0
    %4638 = vperm.xlu0 %4637, %v4347
    %v4639 = vpop.permute.xlu0 %4638
    %4642 = vset.pattern.permute.xlu0 0
    %4643 = vperm.xlu0 %4642, %v4349
    %v4644 = vpop.permute.xlu0 %4643
    %4647 = vset.pattern.permute.xlu0 0
    %4648 = vperm.xlu0 %4647, %v4351
    %v4649 = vpop.permute.xlu0 %4648
    %4652 = vset.pattern.permute.xlu0 0
    %4653 = vperm.xlu0 %4652, %v4353
    %v4654 = vpop.permute.xlu0 %4653
    %4657 = vset.pattern.permute.xlu0 0
    %4658 = vperm.xlu0 %4657, %v4355
    %v4659 = vpop.permute.xlu0 %4658
    %4662 = vset.pattern.permute.xlu0 0
    %4663 = vperm.xlu0 %4662, %v4357
    %v4664 = vpop.permute.xlu0 %4663
    %4667 = vset.pattern.permute.xlu0 0
    %4668 = vperm.xlu0 %4667, %v4359
    %v4669 = vpop.permute.xlu0 %4668
    %4672 = vset.pattern.permute.xlu0 0
    %4673 = vperm.xlu0 %4672, %v4361
    %v4674 = vpop.permute.xlu0 %4673
    %4677 = vset.pattern.permute.xlu0 0
    %4678 = vperm.xlu0 %4677, %v4363
    %v4679 = vpop.permute.xlu0 %4678
    %4682 = vset.pattern.permute.xlu0 0
    %4683 = vperm.xlu0 %4682, %v4365
    %v4684 = vpop.permute.xlu0 %4683
    %v4686 = vmul.f32 %v4609, %v4590
    %v4687 = vmul.f32 %v4614, %v4591
    %v4688 = vmul.f32 %v4619, %v4592
    %v4689 = vmul.f32 %v4624, %v4593
    %v4690 = vmul.f32 %v4629, %v4594
    %v4691 = vmul.f32 %v4634, %v4595
    %v4692 = vmul.f32 %v4639, %v4596
    %v4693 = vmul.f32 %v4644, %v4597
    %v4694 = vmul.f32 %v4649, %v4598
    %v4695 = vmul.f32 %v4654, %v4599
    %v4696 = vmul.f32 %v4659, %v4600
    %v4697 = vmul.f32 %v4664, %v4601
    %v4698 = vmul.f32 %v4669, %v4602
    %v4699 = vmul.f32 %v4674, %v4603
    %v4700 = vmul.f32 %v4679, %v4604
    %v4701 = vmul.f32 %v4684, %v4605
    %v4702 = vpack.c.bf16 %v4465, %v4463
    %v4703 = vpack.c.bf16 %v4469, %v4467
    %v4704 = vpack.c.bf16 %v4473, %v4471
    %v4705 = vpack.c.bf16 %v4477, %v4475
    %v4706 = vpack.c.bf16 %v4481, %v4479
    %v4707 = vpack.c.bf16 %v4485, %v4483
    %v4708 = vpack.c.bf16 %v4489, %v4487
    %v4709 = vpack.c.bf16 %v4493, %v4491
    %v4726 = vunpack.c.l.b16 %v4093
    %v4727 = vunpack.c.l.b16 %v4094
    %v4728 = vunpack.c.l.b16 %v4095
    %v4729 = vunpack.c.l.b16 %v4096
    %v4730 = vunpack.c.l.b16 %v4097
    %v4731 = vunpack.c.l.b16 %v4098
    %v4732 = vunpack.c.l.b16 %v4099
    %v4733 = vunpack.c.l.b16 %v4100
    %v4734 = vunpack.c.l.b16 %v4101
    %v4735 = vunpack.c.l.b16 %v4102
    %v4736 = vunpack.c.l.b16 %v4103
    %v4737 = vunpack.c.l.b16 %v4104
    %v4738 = vunpack.c.l.b16 %v4105
    %v4739 = vunpack.c.l.b16 %v4106
    %v4740 = vunpack.c.l.b16 %v4107
    %v4741 = vunpack.c.l.b16 %v4108
    %v4742 = vpack.c.b16 %v4727, %v4726
    %v4743 = vpack.c.b16 %v4729, %v4728
    %v4744 = vpack.c.b16 %v4731, %v4730
    %v4745 = vpack.c.b16 %v4733, %v4732
    %v4746 = vpack.c.b16 %v4735, %v4734
    %v4747 = vpack.c.b16 %v4737, %v4736
    %v4748 = vpack.c.b16 %v4739, %v4738
    %v4749 = vpack.c.b16 %v4741, %v4740
    %4758 = vmatprep.subr.bf16.mxu0 0
    %4759 = vmatpush1.bf16.msra.mxu0 %v4749
    %4760 = vmatprep.subr.bf16.mxu0 0
    %4761 = vmatpush1.bf16.msra.mxu0 %v4748
    %4762 = vmatprep.subr.bf16.mxu0 0
    %4763 = vmatpush1.bf16.msra.mxu0 %v4747
    %4764 = vmatprep.subr.bf16.mxu0 0
    %4765 = vmatpush1.bf16.msra.mxu0 %v4746
    %4766 = vmatprep.subr.bf16.mxu0 0
    %4767 = vmatpush1.bf16.msra.mxu0 %v4745
    %4768 = vmatprep.subr.bf16.mxu0 0
    %4769 = vmatpush1.bf16.msra.mxu0 %v4744
    %4770 = vmatprep.subr.bf16.mxu0 0
    %4771 = vmatpush1.bf16.msra.mxu0 %v4743
    %4772 = vmatprep.subr.bf16.mxu0 0
    %4773 = vmatpush1.bf16.msra.mxu0 %v4742
    %4774 = vmatprep.subr.bf16.mxu0 0
    %4775 = vmatpush2.bf16.msra.mxu0 0
    %4776 = vmatprep.subr.bf16.mxu0 0
    %4777 = vmatpush2.bf16.msra.mxu0 0
    %4778 = vmatprep.subr.bf16.mxu0 0
    %4779 = vmatpush2.bf16.msra.mxu0 0
    %4780 = vmatprep.subr.bf16.mxu0 0
    %4781 = vmatpush2.bf16.msra.mxu0 0
    %4782 = vmatprep.subr.bf16.mxu0 0
    %4783 = vmatpush2.bf16.msra.mxu0 0
    %4784 = vmatprep.subr.bf16.mxu0 0
    %4785 = vmatpush2.bf16.msra.mxu0 0
    %4786 = vmatprep.subr.bf16.mxu0 0
    %4787 = vmatpush2.bf16.msra.mxu0 0
    %4788 = vmatprep.subr.bf16.mxu0 0
    %4789 = vmatpush2.bf16.msra.mxu0 0
    %4790 = vmatprep.mubr.bf16.mxu0 0
    %4791 = vmatmul.mubr.bf16.gmra.mxu0 %v4702
    %v4792 = vpop.f32.mrf.mxu0
    %v4793 = vadd.f32 0.0, %v4792
    %v4794 = vpop.f32.mrf.mxu0
    %v4795 = vpop.f32.mrf.mxu0
    %v4796 = vadd.f32 0.0, %v4795
    %v4797 = vpop.f32.mrf.mxu0
    %4798 = vmatprep.mubr.bf16.mxu0 0
    %4799 = vmatmul.mubr.bf16.gmra.mxu0 %v4703
    %v4800 = vpop.f32.mrf.mxu0
    %v4801 = vadd.f32 0.0, %v4800
    %v4802 = vpop.f32.mrf.mxu0
    %v4803 = vpop.f32.mrf.mxu0
    %v4804 = vadd.f32 0.0, %v4803
    %v4805 = vpop.f32.mrf.mxu0
    %4806 = vmatprep.mubr.bf16.mxu0 0
    %4807 = vmatmul.mubr.bf16.gmra.mxu0 %v4704
    %v4808 = vpop.f32.mrf.mxu0
    %v4809 = vadd.f32 0.0, %v4808
    %v4810 = vpop.f32.mrf.mxu0
    %v4811 = vpop.f32.mrf.mxu0
    %v4812 = vadd.f32 0.0, %v4811
    %v4813 = vpop.f32.mrf.mxu0
    %4814 = vmatprep.mubr.bf16.mxu0 0
    %4815 = vmatmul.mubr.bf16.gmra.mxu0 %v4705
    %v4816 = vpop.f32.mrf.mxu0
    %v4817 = vadd.f32 0.0, %v4816
    %v4818 = vpop.f32.mrf.mxu0
    %v4819 = vpop.f32.mrf.mxu0
    %v4820 = vadd.f32 0.0, %v4819
    %v4821 = vpop.f32.mrf.mxu0
    %4822 = vmatprep.mubr.bf16.mxu0 0
    %4823 = vmatmul.mubr.bf16.gmra.mxu0 %v4706
    %v4824 = vpop.f32.mrf.mxu0
    %v4825 = vadd.f32 0.0, %v4824
    %v4826 = vpop.f32.mrf.mxu0
    %v4827 = vpop.f32.mrf.mxu0
    %v4828 = vadd.f32 0.0, %v4827
    %v4829 = vpop.f32.mrf.mxu0
    %4830 = vmatprep.mubr.bf16.mxu0 0
    %4831 = vmatmul.mubr.bf16.gmra.mxu0 %v4707
    %v4832 = vpop.f32.mrf.mxu0
    %v4833 = vadd.f32 0.0, %v4832
    %v4834 = vpop.f32.mrf.mxu0
    %v4835 = vpop.f32.mrf.mxu0
    %v4836 = vadd.f32 0.0, %v4835
    %v4837 = vpop.f32.mrf.mxu0
    %4838 = vmatprep.mubr.bf16.mxu0 0
    %4839 = vmatmul.mubr.bf16.gmra.mxu0 %v4708
    %v4840 = vpop.f32.mrf.mxu0
    %v4841 = vadd.f32 0.0, %v4840
    %v4842 = vpop.f32.mrf.mxu0
    %v4843 = vpop.f32.mrf.mxu0
    %v4844 = vadd.f32 0.0, %v4843
    %v4845 = vpop.f32.mrf.mxu0
    %4846 = vmatprep.mubr.bf16.mxu0 0
    %4847 = vmatmul.mubr.bf16.gmra.mxu0 %v4709
    %v4848 = vpop.f32.mrf.mxu0
    %v4849 = vadd.f32 0.0, %v4848
    %v4850 = vpop.f32.mrf.mxu0
    %v4851 = vpop.f32.mrf.mxu0
    %v4852 = vadd.f32 0.0, %v4851
    %v4853 = vpop.f32.mrf.mxu0
    %4854 = vdwg.mxu0
    %v4855 = vadd.f32 %v4686, %v4793
    %v4856 = vadd.f32 %v4687, %v4796
    %v4857 = vadd.f32 %v4688, %v4801
    %v4858 = vadd.f32 %v4689, %v4804
    %v4859 = vadd.f32 %v4690, %v4809
    %v4860 = vadd.f32 %v4691, %v4812
    %v4861 = vadd.f32 %v4692, %v4817
    %v4862 = vadd.f32 %v4693, %v4820
    %v4863 = vadd.f32 %v4694, %v4825
    %v4864 = vadd.f32 %v4695, %v4828
    %v4865 = vadd.f32 %v4696, %v4833
    %v4866 = vadd.f32 %v4697, %v4836
    %v4867 = vadd.f32 %v4698, %v4841
    %v4868 = vadd.f32 %v4699, %v4844
    %v4869 = vadd.f32 %v4700, %v4849
    %v4870 = vadd.f32 %v4701, %v4852
    %4871 = vst [vmem:[#allocation6] sm:$0xff] %v4855
    %4872 = vst [vmem:[#allocation6 + $0x8] sm:$0xff] %v4856
    %4873 = vst [vmem:[#allocation6 + $0x10] sm:$0xff] %v4857
    %4874 = vst [vmem:[#allocation6 + $0x18] sm:$0xff] %v4858
    %4875 = vst [vmem:[#allocation6 + $0x20] sm:$0xff] %v4859
    %4876 = vst [vmem:[#allocation6 + $0x28] sm:$0xff] %v4860
    %4877 = vst [vmem:[#allocation6 + $0x30] sm:$0xff] %v4861
    %4878 = vst [vmem:[#allocation6 + $0x38] sm:$0xff] %v4862
    %4879 = vst [vmem:[#allocation6 + $0x40] sm:$0xff] %v4863
    %4880 = vst [vmem:[#allocation6 + $0x48] sm:$0xff] %v4864
    %4881 = vst [vmem:[#allocation6 + $0x50] sm:$0xff] %v4865
    %4882 = vst [vmem:[#allocation6 + $0x58] sm:$0xff] %v4866
    %4883 = vst [vmem:[#allocation6 + $0x60] sm:$0xff] %v4867
    %4884 = vst [vmem:[#allocation6 + $0x68] sm:$0xff] %v4868
    %4885 = vst [vmem:[#allocation6 + $0x70] sm:$0xff] %v4869
    %4886 = vst [vmem:[#allocation6 + $0x78] sm:$0xff] %v4870
    %4887 = vst.msk [vmem:[#allocation4] sm:$0xff] %vm872, %v4302
    %4888 = vst.msk [vmem:[#allocation4 + $0x8] sm:$0xff] %vm872, %v4303
    %4889 = vst.msk [vmem:[#allocation4 + $0x10] sm:$0xff] %vm872, %v4304
    %4890 = vst.msk [vmem:[#allocation4 + $0x18] sm:$0xff] %vm872, %v4305
    %4891 = vst.msk [vmem:[#allocation4 + $0x20] sm:$0xff] %vm872, %v4306
    %4892 = vst.msk [vmem:[#allocation4 + $0x28] sm:$0xff] %vm872, %v4307
    %4893 = vst.msk [vmem:[#allocation4 + $0x30] sm:$0xff] %vm872, %v4308
    %4894 = vst.msk [vmem:[#allocation4 + $0x38] sm:$0xff] %vm872, %v4309
    %4895 = vst.msk [vmem:[#allocation4 + $0x40] sm:$0xff] %vm872, %v4310
    %4896 = vst.msk [vmem:[#allocation4 + $0x48] sm:$0xff] %vm872, %v4311
    %4897 = vst.msk [vmem:[#allocation4 + $0x50] sm:$0xff] %vm872, %v4312
    %4898 = vst.msk [vmem:[#allocation4 + $0x58] sm:$0xff] %vm872, %v4313
    %4899 = vst.msk [vmem:[#allocation4 + $0x60] sm:$0xff] %vm872, %v4314
    %4900 = vst.msk [vmem:[#allocation4 + $0x68] sm:$0xff] %vm872, %v4315
    %4901 = vst.msk [vmem:[#allocation4 + $0x70] sm:$0xff] %vm872, %v4316
    %4902 = vst.msk [vmem:[#allocation4 + $0x78] sm:$0xff] %vm872, %v4317
    %v4903 = vld [vmem:[#allocation6] sm:$0xff]
    %v4904 = vld [vmem:[#allocation6 + $0x8] sm:$0xff]
    %v4905 = vld [vmem:[#allocation6 + $0x10] sm:$0xff]
    %v4906 = vld [vmem:[#allocation6 + $0x18] sm:$0xff]
    %v4907 = vld [vmem:[#allocation6 + $0x20] sm:$0xff]
    %v4908 = vld [vmem:[#allocation6 + $0x28] sm:$0xff]
    %v4909 = vld [vmem:[#allocation6 + $0x30] sm:$0xff]
    %v4910 = vld [vmem:[#allocation6 + $0x38] sm:$0xff]
    %v4911 = vld [vmem:[#allocation6 + $0x40] sm:$0xff]
    %v4912 = vld [vmem:[#allocation6 + $0x48] sm:$0xff]
    %v4913 = vld [vmem:[#allocation6 + $0x50] sm:$0xff]
    %v4914 = vld [vmem:[#allocation6 + $0x58] sm:$0xff]
    %v4915 = vld [vmem:[#allocation6 + $0x60] sm:$0xff]
    %v4916 = vld [vmem:[#allocation6 + $0x68] sm:$0xff]
    %v4917 = vld [vmem:[#allocation6 + $0x70] sm:$0xff]
    %v4918 = vld [vmem:[#allocation6 + $0x78] sm:$0xff]
    %v4919 = vld [vmem:[#allocation5] sm:$0xff]
    %v4920 = vld [vmem:[#allocation5 + $0x8] sm:$0xff]
    %v4921 = vld [vmem:[#allocation5 + $0x10] sm:$0xff]
    %v4922 = vld [vmem:[#allocation5 + $0x18] sm:$0xff]
    %v4923 = vld [vmem:[#allocation5 + $0x20] sm:$0xff]
    %v4924 = vld [vmem:[#allocation5 + $0x28] sm:$0xff]
    %v4925 = vld [vmem:[#allocation5 + $0x30] sm:$0xff]
    %v4926 = vld [vmem:[#allocation5 + $0x38] sm:$0xff]
    %v4927 = vld [vmem:[#allocation5 + $0x40] sm:$0xff]
    %v4928 = vld [vmem:[#allocation5 + $0x48] sm:$0xff]
    %v4929 = vld [vmem:[#allocation5 + $0x50] sm:$0xff]
    %v4930 = vld [vmem:[#allocation5 + $0x58] sm:$0xff]
    %v4931 = vld [vmem:[#allocation5 + $0x60] sm:$0xff]
    %v4932 = vld [vmem:[#allocation5 + $0x68] sm:$0xff]
    %v4933 = vld [vmem:[#allocation5 + $0x70] sm:$0xff]
    %v4934 = vld [vmem:[#allocation5 + $0x78] sm:$0xff]
    %v4935 = vrcp.pop %v4919
    %v4936 = vrcp.pop %v4920
    %v4937 = vrcp.pop %v4921
    %v4938 = vrcp.pop %v4922
    %v4939 = vrcp.pop %v4923
    %v4940 = vrcp.pop %v4924
    %v4941 = vrcp.pop %v4925
    %v4942 = vrcp.pop %v4926
    %v4943 = vrcp.pop %v4927
    %v4944 = vrcp.pop %v4928
    %v4945 = vrcp.pop %v4929
    %v4946 = vrcp.pop %v4930
    %v4947 = vrcp.pop %v4931
    %v4948 = vrcp.pop %v4932
    %v4949 = vrcp.pop %v4933
    %v4950 = vrcp.pop %v4934
    %4952 = vset.pattern.permute.xlu0 0
    %4953 = vperm.xlu0 %4952, %v4935
    %v4954 = vpop.permute.xlu0 %4953
    %4957 = vset.pattern.permute.xlu0 0
    %4958 = vperm.xlu0 %4957, %v4936
    %v4959 = vpop.permute.xlu0 %4958
    %4962 = vset.pattern.permute.xlu0 0
    %4963 = vperm.xlu0 %4962, %v4937
    %v4964 = vpop.permute.xlu0 %4963
    %4967 = vset.pattern.permute.xlu0 0
    %4968 = vperm.xlu0 %4967, %v4938
    %v4969 = vpop.permute.xlu0 %4968
    %4972 = vset.pattern.permute.xlu0 0
    %4973 = vperm.xlu0 %4972, %v4939
    %v4974 = vpop.permute.xlu0 %4973
    %4977 = vset.pattern.permute.xlu0 0
    %4978 = vperm.xlu0 %4977, %v4940
    %v4979 = vpop.permute.xlu0 %4978
    %4982 = vset.pattern.permute.xlu0 0
    %4983 = vperm.xlu0 %4982, %v4941
    %v4984 = vpop.permute.xlu0 %4983
    %4987 = vset.pattern.permute.xlu0 0
    %4988 = vperm.xlu0 %4987, %v4942
    %v4989 = vpop.permute.xlu0 %4988
    %4992 = vset.pattern.permute.xlu0 0
    %4993 = vperm.xlu0 %4992, %v4943
    %v4994 = vpop.permute.xlu0 %4993
    %4997 = vset.pattern.permute.xlu0 0
    %4998 = vperm.xlu0 %4997, %v4944
    %v4999 = vpop.permute.xlu0 %4998
    %5002 = vset.pattern.permute.xlu0 0
    %5003 = vperm.xlu0 %5002, %v4945
    %v5004 = vpop.permute.xlu0 %5003
    %5007 = vset.pattern.permute.xlu0 0
    %5008 = vperm.xlu0 %5007, %v4946
    %v5009 = vpop.permute.xlu0 %5008
    %5012 = vset.pattern.permute.xlu0 0
    %5013 = vperm.xlu0 %5012, %v4947
    %v5014 = vpop.permute.xlu0 %5013
    %5017 = vset.pattern.permute.xlu0 0
    %5018 = vperm.xlu0 %5017, %v4948
    %v5019 = vpop.permute.xlu0 %5018
    %5022 = vset.pattern.permute.xlu0 0
    %5023 = vperm.xlu0 %5022, %v4949
    %v5024 = vpop.permute.xlu0 %5023
    %5027 = vset.pattern.permute.xlu0 0
    %5028 = vperm.xlu0 %5027, %v4950
    %v5029 = vpop.permute.xlu0 %5028
    %v5031 = vmul.f32 %v4903, %v4954
    %v5032 = vmul.f32 %v4904, %v4959
    %v5033 = vmul.f32 %v4905, %v4964
    %v5034 = vmul.f32 %v4906, %v4969
    %v5035 = vmul.f32 %v4907, %v4974
    %v5036 = vmul.f32 %v4908, %v4979
    %v5037 = vmul.f32 %v4909, %v4984
    %v5038 = vmul.f32 %v4910, %v4989
    %v5039 = vmul.f32 %v4911, %v4994
    %v5040 = vmul.f32 %v4912, %v4999
    %v5041 = vmul.f32 %v4913, %v5004
    %v5042 = vmul.f32 %v4914, %v5009
    %v5043 = vmul.f32 %v4915, %v5014
    %v5044 = vmul.f32 %v4916, %v5019
    %v5045 = vmul.f32 %v4917, %v5024
    %v5046 = vmul.f32 %v4918, %v5029
    %v5047 = vadd.f32 %v3472, %v5031
    %v5048 = vadd.f32 %v3473, %v5032
    %v5049 = vadd.f32 %v3474, %v5033
    %v5050 = vadd.f32 %v3475, %v5034
    %v5051 = vadd.f32 %v3476, %v5035
    %v5052 = vadd.f32 %v3477, %v5036
    %v5053 = vadd.f32 %v3478, %v5037
    %v5054 = vadd.f32 %v3479, %v5038
    %v5055 = vadd.f32 %v3480, %v5039
    %v5056 = vadd.f32 %v3481, %v5040
    %v5057 = vadd.f32 %v3482, %v5041
    %v5058 = vadd.f32 %v3483, %v5042
    %v5059 = vadd.f32 %v3484, %v5043
    %v5060 = vadd.f32 %v3485, %v5044
    %v5061 = vadd.f32 %v3486, %v5045
    %v5062 = vadd.f32 %v3487, %v5046
    %v5063 = vld [vmem:[#allocation12] sm:$0xff]
    %v5064 = vld [vmem:[#allocation12 + $0x8] sm:$0xff]
    %v5065 = vld [vmem:[#allocation12 + $0x10] sm:$0xff]
    %v5066 = vld [vmem:[#allocation12 + $0x18] sm:$0xff]
    %v5067 = vld [vmem:[#allocation12 + $0x20] sm:$0xff]
    %v5068 = vld [vmem:[#allocation12 + $0x28] sm:$0xff]
    %v5069 = vld [vmem:[#allocation12 + $0x30] sm:$0xff]
    %v5070 = vld [vmem:[#allocation12 + $0x38] sm:$0xff]
    %v5071 = vld [vmem:[#allocation12 + $0x40] sm:$0xff]
    %v5072 = vld [vmem:[#allocation12 + $0x48] sm:$0xff]
    %v5073 = vld [vmem:[#allocation12 + $0x50] sm:$0xff]
    %v5074 = vld [vmem:[#allocation12 + $0x58] sm:$0xff]
    %v5075 = vld [vmem:[#allocation12 + $0x60] sm:$0xff]
    %v5076 = vld [vmem:[#allocation12 + $0x68] sm:$0xff]
    %v5077 = vld [vmem:[#allocation12 + $0x70] sm:$0xff]
    %v5078 = vld [vmem:[#allocation12 + $0x78] sm:$0xff]
    %v5079 = vld [vmem:[%s9] sm:$0x1]
    %v5080 = vlaneseq
    %v5081 = vshrl.u32 %v5080, 7
    %v5082 = vsub.s32 0, %v5081
    %v5083 = vrot.slane %v5079, %v5082
    %5084 = vmatprep.subr.mxu0 0.0
    %5085 = vmatpush1.msra.mxu0 %v5078
    %5086 = vmatprep.subr.mxu0 0.0
    %5087 = vmatpush1.msra.mxu0 %v5077
    %5088 = vmatprep.subr.mxu0 0.0
    %5089 = vmatpush1.msra.mxu0 %v5076
    %5090 = vmatprep.subr.mxu0 0.0
    %5091 = vmatpush1.msra.mxu0 %v5075
    %5092 = vmatprep.subr.mxu0 0.0
    %5093 = vmatpush1.msra.mxu0 %v5074
    %5094 = vmatprep.subr.mxu0 0.0
    %5095 = vmatpush1.msra.mxu0 %v5073
    %5096 = vmatprep.subr.mxu0 0.0
    %5097 = vmatpush1.msra.mxu0 %v5072
    %5098 = vmatprep.subr.mxu0 0.0
    %5099 = vmatpush1.msra.mxu0 %v5071
    %5100 = vmatprep.subr.mxu0 0.0
    %5101 = vmatpush1.msra.mxu0 %v5070
    %5102 = vmatprep.subr.mxu0 0.0
    %5103 = vmatpush1.msra.mxu0 %v5069
    %5104 = vmatprep.subr.mxu0 0.0
    %5105 = vmatpush1.msra.mxu0 %v5068
    %5106 = vmatprep.subr.mxu0 0.0
    %5107 = vmatpush1.msra.mxu0 %v5067
    %5108 = vmatprep.subr.mxu0 0.0
    %5109 = vmatpush1.msra.mxu0 %v5066
    %5110 = vmatprep.subr.mxu0 0.0
    %5111 = vmatpush1.msra.mxu0 %v5065
    %5112 = vmatprep.subr.mxu0 0.0
    %5113 = vmatpush1.msra.mxu0 %v5064
    %5114 = vmatprep.subr.mxu0 0.0
    %5115 = vmatpush1.msra.mxu0 %v5063
    %5116 = vmatprep.subr.mxu0 0.0
    %5117 = vmatpush2.msra.mxu0 0.0
    %5118 = vmatprep.subr.mxu0 0.0
    %5119 = vmatpush2.msra.mxu0 0.0
    %5120 = vmatprep.subr.mxu0 0.0
    %5121 = vmatpush2.msra.mxu0 0.0
    %5122 = vmatprep.subr.mxu0 0.0
    %5123 = vmatpush2.msra.mxu0 0.0
    %5124 = vmatprep.subr.mxu0 0.0
    %5125 = vmatpush2.msra.mxu0 0.0
    %5126 = vmatprep.subr.mxu0 0.0
    %5127 = vmatpush2.msra.mxu0 0.0
    %5128 = vmatprep.subr.mxu0 0.0
    %5129 = vmatpush2.msra.mxu0 0.0
    %5130 = vmatprep.subr.mxu0 0.0
    %5131 = vmatpush2.msra.mxu0 0.0
    %5132 = vmatprep.subr.mxu0 0.0
    %5133 = vmatpush2.msra.mxu0 0.0
    %5134 = vmatprep.subr.mxu0 0.0
    %5135 = vmatpush2.msra.mxu0 0.0
    %5136 = vmatprep.subr.mxu0 0.0
    %5137 = vmatpush2.msra.mxu0 0.0
    %5138 = vmatprep.subr.mxu0 0.0
    %5139 = vmatpush2.msra.mxu0 0.0
    %5140 = vmatprep.subr.mxu0 0.0
    %5141 = vmatpush2.msra.mxu0 0.0
    %5142 = vmatprep.subr.mxu0 0.0
    %5143 = vmatpush2.msra.mxu0 0.0
    %5144 = vmatprep.subr.mxu0 0.0
    %5145 = vmatpush2.msra.mxu0 0.0
    %5146 = vmatprep.subr.mxu0 0.0
    %5147 = vmatpush2.msra.mxu0 0.0
    %5148 = vmatprep.mubr.f32.mxu0 0.0
    %5149 = vmatmul.mubr.f32.gmra.mxu0 %v5047
    %v5150 = vpop.f32.mrf.mxu0
    %v5151 = vadd.f32 %v5083, %v5150
    %v5152 = vpop.f32.mrf.mxu0
    %5153 = vmatprep.mubr.f32.mxu0 0.0
    %5154 = vmatmul.mubr.f32.gmra.mxu0 %v5048
    %v5155 = vpop.f32.mrf.mxu0
    %v5156 = vadd.f32 %v5083, %v5155
    %v5157 = vpop.f32.mrf.mxu0
    %5158 = vmatprep.mubr.f32.mxu0 0.0
    %5159 = vmatmul.mubr.f32.gmra.mxu0 %v5049
    %v5160 = vpop.f32.mrf.mxu0
    %v5161 = vadd.f32 %v5083, %v5160
    %v5162 = vpop.f32.mrf.mxu0
    %5163 = vmatprep.mubr.f32.mxu0 0.0
    %5164 = vmatmul.mubr.f32.gmra.mxu0 %v5050
    %v5165 = vpop.f32.mrf.mxu0
    %v5166 = vadd.f32 %v5083, %v5165
    %v5167 = vpop.f32.mrf.mxu0
    %5168 = vmatprep.mubr.f32.mxu0 0.0
    %5169 = vmatmul.mubr.f32.gmra.mxu0 %v5051
    %v5170 = vpop.f32.mrf.mxu0
    %v5171 = vadd.f32 %v5083, %v5170
    %v5172 = vpop.f32.mrf.mxu0
    %5173 = vmatprep.mubr.f32.mxu0 0.0
    %5174 = vmatmul.mubr.f32.gmra.mxu0 %v5052
    %v5175 = vpop.f32.mrf.mxu0
    %v5176 = vadd.f32 %v5083, %v5175
    %v5177 = vpop.f32.mrf.mxu0
    %5178 = vmatprep.mubr.f32.mxu0 0.0
    %5179 = vmatmul.mubr.f32.gmra.mxu0 %v5053
    %v5180 = vpop.f32.mrf.mxu0
    %v5181 = vadd.f32 %v5083, %v5180
    %v5182 = vpop.f32.mrf.mxu0
    %5183 = vmatprep.mubr.f32.mxu0 0.0
    %5184 = vmatmul.mubr.f32.gmra.mxu0 %v5054
    %v5185 = vpop.f32.mrf.mxu0
    %v5186 = vadd.f32 %v5083, %v5185
    %v5187 = vpop.f32.mrf.mxu0
    %5188 = vmatprep.mubr.f32.mxu0 0.0
    %5189 = vmatmul.mubr.f32.gmra.mxu0 %v5055
    %v5190 = vpop.f32.mrf.mxu0
    %v5191 = vadd.f32 %v5083, %v5190
    %v5192 = vpop.f32.mrf.mxu0
    %5193 = vmatprep.mubr.f32.mxu0 0.0
    %5194 = vmatmul.mubr.f32.gmra.mxu0 %v5056
    %v5195 = vpop.f32.mrf.mxu0
    %v5196 = vadd.f32 %v5083, %v5195
    %v5197 = vpop.f32.mrf.mxu0
    %5198 = vmatprep.mubr.f32.mxu0 0.0
    %5199 = vmatmul.mubr.f32.gmra.mxu0 %v5057
    %v5200 = vpop.f32.mrf.mxu0
    %v5201 = vadd.f32 %v5083, %v5200
    %v5202 = vpop.f32.mrf.mxu0
    %5203 = vmatprep.mubr.f32.mxu0 0.0
    %5204 = vmatmul.mubr.f32.gmra.mxu0 %v5058
    %v5205 = vpop.f32.mrf.mxu0
    %v5206 = vadd.f32 %v5083, %v5205
    %v5207 = vpop.f32.mrf.mxu0
    %5208 = vmatprep.mubr.f32.mxu0 0.0
    %5209 = vmatmul.mubr.f32.gmra.mxu0 %v5059
    %v5210 = vpop.f32.mrf.mxu0
    %v5211 = vadd.f32 %v5083, %v5210
    %v5212 = vpop.f32.mrf.mxu0
    %5213 = vmatprep.mubr.f32.mxu0 0.0
    %5214 = vmatmul.mubr.f32.gmra.mxu0 %v5060
    %v5215 = vpop.f32.mrf.mxu0
    %v5216 = vadd.f32 %v5083, %v5215
    %v5217 = vpop.f32.mrf.mxu0
    %5218 = vmatprep.mubr.f32.mxu0 0.0
    %5219 = vmatmul.mubr.f32.gmra.mxu0 %v5061
    %v5220 = vpop.f32.mrf.mxu0
    %v5221 = vadd.f32 %v5083, %v5220
    %v5222 = vpop.f32.mrf.mxu0
    %5223 = vmatprep.mubr.f32.mxu0 0.0
    %5224 = vmatmul.mubr.f32.gmra.mxu0 %v5062
    %v5225 = vpop.f32.mrf.mxu0
    %v5226 = vadd.f32 %v5083, %v5225
    %v5227 = vpop.f32.mrf.mxu0
    %5228 = vdwg.mxu0
    %5229 = vst [vmem:[#allocation16] sm:$0xff] %v5151
    %5230 = vst [vmem:[#allocation16 + $0x8] sm:$0xff] %v5156
    %5231 = vst [vmem:[#allocation16 + $0x10] sm:$0xff] %v5161
    %5232 = vst [vmem:[#allocation16 + $0x18] sm:$0xff] %v5166
    %5233 = vst [vmem:[#allocation16 + $0x20] sm:$0xff] %v5171
    %5234 = vst [vmem:[#allocation16 + $0x28] sm:$0xff] %v5176
    %5235 = vst [vmem:[#allocation16 + $0x30] sm:$0xff] %v5181
    %5236 = vst [vmem:[#allocation16 + $0x38] sm:$0xff] %v5186
    %5237 = vst [vmem:[#allocation16 + $0x40] sm:$0xff] %v5191
    %5238 = vst [vmem:[#allocation16 + $0x48] sm:$0xff] %v5196
    %5239 = vst [vmem:[#allocation16 + $0x50] sm:$0xff] %v5201
    %5240 = vst [vmem:[#allocation16 + $0x58] sm:$0xff] %v5206
    %5241 = vst [vmem:[#allocation16 + $0x60] sm:$0xff] %v5211
    %5242 = vst [vmem:[#allocation16 + $0x68] sm:$0xff] %v5216
    %5243 = vst [vmem:[#allocation16 + $0x70] sm:$0xff] %v5221
    %5244 = vst [vmem:[#allocation16 + $0x78] sm:$0xff] %v5226
    %v5245 = vld [vmem:[%s2] sm:$0x1]
    %v5246 = vlaneseq
    %v5247 = vshrl.u32 %v5246, 7
    %v5248 = vlaneseq
    %v5249 = vshrl.u32 %v5248, 7
    %v5250 = vsub.s32 0, %v5249
    %v5251 = vrot.slane %v5245, %v5250
    %vm5252 = vcmp.eq.s32.totalorder %v5251, %v5247
    %v5253 = vsel %vm5252, 1, 0
    %v5254 = vcvt.s32.f32 %v5253
    %vm5255 = vcmask 1041408
    %v5256 = vsel %vm5255, %v5254, 0.0
    %5257 = vadd.xlane.f32.xlu0 %v5256
    %v5258 = vpop.xlane.xlu0 %5257
    %v5259 = vmax.f32 %v5258, 1.0
    %v5260 = vrcp.pop %v5259
    %v5261 = vmul.f32 %v5254, %v5260
    %5262 = vmatprep.subr.mxu0 0.0
    %5263 = vmatpush1.msra.mxu0 %v5062
    %5264 = vmatprep.subr.mxu0 0.0
    %5265 = vmatpush1.msra.mxu0 %v5061
    %5266 = vmatprep.subr.mxu0 0.0
    %5267 = vmatpush1.msra.mxu0 %v5060
    %5268 = vmatprep.subr.mxu0 0.0
    %5269 = vmatpush1.msra.mxu0 %v5059
    %5270 = vmatprep.subr.mxu0 0.0
    %5271 = vmatpush1.msra.mxu0 %v5058
    %5272 = vmatprep.subr.mxu0 0.0
    %5273 = vmatpush1.msra.mxu0 %v5057
    %5274 = vmatprep.subr.mxu0 0.0
    %5275 = vmatpush1.msra.mxu0 %v5056
    %5276 = vmatprep.subr.mxu0 0.0
    %5277 = vmatpush1.msra.mxu0 %v5055
    %5278 = vmatprep.subr.mxu0 0.0
    %5279 = vmatpush1.msra.mxu0 %v5054
    %5280 = vmatprep.subr.mxu0 0.0
    %5281 = vmatpush1.msra.mxu0 %v5053
    %5282 = vmatprep.subr.mxu0 0.0
    %5283 = vmatpush1.msra.mxu0 %v5052
    %5284 = vmatprep.subr.mxu0 0.0
    %5285 = vmatpush1.msra.mxu0 %v5051
    %5286 = vmatprep.subr.mxu0 0.0
    %5287 = vmatpush1.msra.mxu0 %v5050
    %5288 = vmatprep.subr.mxu0 0.0
    %5289 = vmatpush1.msra.mxu0 %v5049
    %5290 = vmatprep.subr.mxu0 0.0
    %5291 = vmatpush1.msra.mxu0 %v5048
    %5292 = vmatprep.subr.mxu0 0.0
    %5293 = vmatpush1.msra.mxu0 %v5047
    %5294 = vmatprep.subr.mxu0 0.0
    %5295 = vmatpush2.msra.mxu0 0.0
    %5296 = vmatprep.subr.mxu0 0.0
    %5297 = vmatpush2.msra.mxu0 0.0
    %5298 = vmatprep.subr.mxu0 0.0
    %5299 = vmatpush2.msra.mxu0 0.0
    %5300 = vmatprep.subr.mxu0 0.0
    %5301 = vmatpush2.msra.mxu0 0.0
    %5302 = vmatprep.subr.mxu0 0.0
    %5303 = vmatpush2.msra.mxu0 0.0
    %5304 = vmatprep.subr.mxu0 0.0
    %5305 = vmatpush2.msra.mxu0 0.0
    %5306 = vmatprep.subr.mxu0 0.0
    %5307 = vmatpush2.msra.mxu0 0.0
    %5308 = vmatprep.subr.mxu0 0.0
    %5309 = vmatpush2.msra.mxu0 0.0
    %5310 = vmatprep.subr.mxu0 0.0
    %5311 = vmatpush2.msra.mxu0 0.0
    %5312 = vmatprep.subr.mxu0 0.0
    %5313 = vmatpush2.msra.mxu0 0.0
    %5314 = vmatprep.subr.mxu0 0.0
    %5315 = vmatpush2.msra.mxu0 0.0
    %5316 = vmatprep.subr.mxu0 0.0
    %5317 = vmatpush2.msra.mxu0 0.0
    %5318 = vmatprep.subr.mxu0 0.0
    %5319 = vmatpush2.msra.mxu0 0.0
    %5320 = vmatprep.subr.mxu0 0.0
    %5321 = vmatpush2.msra.mxu0 0.0
    %5322 = vmatprep.subr.mxu0 0.0
    %5323 = vmatpush2.msra.mxu0 0.0
    %5324 = vmatprep.subr.mxu0 0.0
    %5325 = vmatpush2.msra.mxu0 0.0
    %5326 = vmatprep.mubr.f32.mxu0 0.0
    %5327 = vmatmul.mubr.f32.gmra.mxu0 %v5261
    %v5328 = vpop.f32.mrf.mxu0
    %v5329 = vadd.f32 0.0, %v5328
    %v5330 = vpop.f32.mrf.mxu0
    %5331 = vdwg.mxu0
    %v5332 = vld [vmem:[#allocation13] sm:$0xff]
    %v5333 = vld [vmem:[#allocation13 + $0x8] sm:$0xff]
    %v5334 = vld [vmem:[#allocation13 + $0x10] sm:$0xff]
    %v5335 = vld [vmem:[#allocation13 + $0x18] sm:$0xff]
    %v5336 = vld [vmem:[#allocation13 + $0x20] sm:$0xff]
    %v5337 = vld [vmem:[#allocation13 + $0x28] sm:$0xff]
    %v5338 = vld [vmem:[#allocation13 + $0x30] sm:$0xff]
    %v5339 = vld [vmem:[#allocation13 + $0x38] sm:$0xff]
    %v5340 = vld [vmem:[#allocation13 + $0x40] sm:$0xff]
    %v5341 = vld [vmem:[#allocation13 + $0x48] sm:$0xff]
    %v5342 = vld [vmem:[#allocation13 + $0x50] sm:$0xff]
    %v5343 = vld [vmem:[#allocation13 + $0x58] sm:$0xff]
    %v5344 = vld [vmem:[#allocation13 + $0x60] sm:$0xff]
    %v5345 = vld [vmem:[#allocation13 + $0x68] sm:$0xff]
    %v5346 = vld [vmem:[#allocation13 + $0x70] sm:$0xff]
    %v5347 = vld [vmem:[#allocation13 + $0x78] sm:$0xff]
    %v5348 = vld [vmem:[%s9 + $0x1] sm:$0x1]
    %v5349 = vlaneseq
    %v5350 = vshrl.u32 %v5349, 7
    %v5351 = vsub.s32 0, %v5350
    %v5352 = vrot.slane %v5348, %v5351
    %5353 = vmatprep.subr.mxu0 0.0
    %5354 = vmatpush1.msra.mxu0 %v5347
    %5355 = vmatprep.subr.mxu0 0.0
    %5356 = vmatpush1.msra.mxu0 %v5346
    %5357 = vmatprep.subr.mxu0 0.0
    %5358 = vmatpush1.msra.mxu0 %v5345
    %5359 = vmatprep.subr.mxu0 0.0
    %5360 = vmatpush1.msra.mxu0 %v5344
    %5361 = vmatprep.subr.mxu0 0.0
    %5362 = vmatpush1.msra.mxu0 %v5343
    %5363 = vmatprep.subr.mxu0 0.0
    %5364 = vmatpush1.msra.mxu0 %v5342
    %5365 = vmatprep.subr.mxu0 0.0
    %5366 = vmatpush1.msra.mxu0 %v5341
    %5367 = vmatprep.subr.mxu0 0.0
    %5368 = vmatpush1.msra.mxu0 %v5340
    %5369 = vmatprep.subr.mxu0 0.0
    %5370 = vmatpush1.msra.mxu0 %v5339
    %5371 = vmatprep.subr.mxu0 0.0
    %5372 = vmatpush1.msra.mxu0 %v5338
    %5373 = vmatprep.subr.mxu0 0.0
    %5374 = vmatpush1.msra.mxu0 %v5337
    %5375 = vmatprep.subr.mxu0 0.0
    %5376 = vmatpush1.msra.mxu0 %v5336
    %5377 = vmatprep.subr.mxu0 0.0
    %5378 = vmatpush1.msra.mxu0 %v5335
    %5379 = vmatprep.subr.mxu0 0.0
    %5380 = vmatpush1.msra.mxu0 %v5334
    %5381 = vmatprep.subr.mxu0 0.0
    %5382 = vmatpush1.msra.mxu0 %v5333
    %5383 = vmatprep.subr.mxu0 0.0
    %5384 = vmatpush1.msra.mxu0 %v5332
    %5385 = vmatprep.subr.mxu0 0.0
    %5386 = vmatpush2.msra.mxu0 0.0
    %5387 = vmatprep.subr.mxu0 0.0
    %5388 = vmatpush2.msra.mxu0 0.0
    %5389 = vmatprep.subr.mxu0 0.0
    %5390 = vmatpush2.msra.mxu0 0.0
    %5391 = vmatprep.subr.mxu0 0.0
    %5392 = vmatpush2.msra.mxu0 0.0
    %5393 = vmatprep.subr.mxu0 0.0
    %5394 = vmatpush2.msra.mxu0 0.0
    %5395 = vmatprep.subr.mxu0 0.0
    %5396 = vmatpush2.msra.mxu0 0.0
    %5397 = vmatprep.subr.mxu0 0.0
    %5398 = vmatpush2.msra.mxu0 0.0
    %5399 = vmatprep.subr.mxu0 0.0
    %5400 = vmatpush2.msra.mxu0 0.0
    %5401 = vmatprep.subr.mxu0 0.0
    %5402 = vmatpush2.msra.mxu0 0.0
    %5403 = vmatprep.subr.mxu0 0.0
    %5404 = vmatpush2.msra.mxu0 0.0
    %5405 = vmatprep.subr.mxu0 0.0
    %5406 = vmatpush2.msra.mxu0 0.0
    %5407 = vmatprep.subr.mxu0 0.0
    %5408 = vmatpush2.msra.mxu0 0.0
    %5409 = vmatprep.subr.mxu0 0.0
    %5410 = vmatpush2.msra.mxu0 0.0
    %5411 = vmatprep.subr.mxu0 0.0
    %5412 = vmatpush2.msra.mxu0 0.0
    %5413 = vmatprep.subr.mxu0 0.0
    %5414 = vmatpush2.msra.mxu0 0.0
    %5415 = vmatprep.subr.mxu0 0.0
    %5416 = vmatpush2.msra.mxu0 0.0
    %5417 = vmatprep.mubr.f32.mxu0 0.0
    %5418 = vmatmul.mubr.f32.gmra.mxu0 %v5329
    %v5419 = vpop.f32.mrf.mxu0
    %v5420 = vadd.f32 %v5352, %v5419
    %v5421 = vpop.f32.mrf.mxu0
    %5422 = vdwg.mxu0
    %v5423 = vmax.f32 %v5420, 0.0
    %v5424 = vld [vmem:[#allocation15] sm:$0xff]
    %v5425 = vld [vmem:[#allocation15 + $0x8] sm:$0xff]
    %v5426 = vld [vmem:[#allocation15 + $0x10] sm:$0xff]
    %v5427 = vld [vmem:[#allocation15 + $0x18] sm:$0xff]
    %v5428 = vld [vmem:[#allocation15 + $0x20] sm:$0xff]
    %v5429 = vld [vmem:[#allocation15 + $0x28] sm:$0xff]
    %v5430 = vld [vmem:[#allocation15 + $0x30] sm:$0xff]
    %v5431 = vld [vmem:[#allocation15 + $0x38] sm:$0xff]
    %v5432 = vld [vmem:[#allocation15 + $0x40] sm:$0xff]
    %v5433 = vld [vmem:[#allocation15 + $0x48] sm:$0xff]
    %v5434 = vld [vmem:[#allocation15 + $0x50] sm:$0xff]
    %v5435 = vld [vmem:[#allocation15 + $0x58] sm:$0xff]
    %v5436 = vld [vmem:[#allocation15 + $0x60] sm:$0xff]
    %v5437 = vld [vmem:[#allocation15 + $0x68] sm:$0xff]
    %v5438 = vld [vmem:[#allocation15 + $0x70] sm:$0xff]
    %v5439 = vld [vmem:[#allocation15 + $0x78] sm:$0xff]
    %v5440 = vld [vmem:[%s9 + $0x2] sm:$0x1]
    %v5441 = vlaneseq
    %v5442 = vshrl.u32 %v5441, 7
    %v5443 = vsub.s32 0, %v5442
    %v5444 = vrot.slane %v5440, %v5443
    %5445 = vmatprep.subr.mxu0 0.0
    %5446 = vmatpush1.msra.mxu0 %v5439
    %5447 = vmatprep.subr.mxu0 0.0
    %5448 = vmatpush1.msra.mxu0 %v5438
    %5449 = vmatprep.subr.mxu0 0.0
    %5450 = vmatpush1.msra.mxu0 %v5437
    %5451 = vmatprep.subr.mxu0 0.0
    %5452 = vmatpush1.msra.mxu0 %v5436
    %5453 = vmatprep.subr.mxu0 0.0
    %5454 = vmatpush1.msra.mxu0 %v5435
    %5455 = vmatprep.subr.mxu0 0.0
    %5456 = vmatpush1.msra.mxu0 %v5434
    %5457 = vmatprep.subr.mxu0 0.0
    %5458 = vmatpush1.msra.mxu0 %v5433
    %5459 = vmatprep.subr.mxu0 0.0
    %5460 = vmatpush1.msra.mxu0 %v5432
    %5461 = vmatprep.subr.mxu0 0.0
    %5462 = vmatpush1.msra.mxu0 %v5431
    %5463 = vmatprep.subr.mxu0 0.0
    %5464 = vmatpush1.msra.mxu0 %v5430
    %5465 = vmatprep.subr.mxu0 0.0
    %5466 = vmatpush1.msra.mxu0 %v5429
    %5467 = vmatprep.subr.mxu0 0.0
    %5468 = vmatpush1.msra.mxu0 %v5428
    %5469 = vmatprep.subr.mxu0 0.0
    %5470 = vmatpush1.msra.mxu0 %v5427
    %5471 = vmatprep.subr.mxu0 0.0
    %5472 = vmatpush1.msra.mxu0 %v5426
    %5473 = vmatprep.subr.mxu0 0.0
    %5474 = vmatpush1.msra.mxu0 %v5425
    %5475 = vmatprep.subr.mxu0 0.0
    %5476 = vmatpush1.msra.mxu0 %v5424
    %5477 = vmatprep.subr.mxu0 0.0
    %5478 = vmatpush2.msra.mxu0 0.0
    %5479 = vmatprep.subr.mxu0 0.0
    %5480 = vmatpush2.msra.mxu0 0.0
    %5481 = vmatprep.subr.mxu0 0.0
    %5482 = vmatpush2.msra.mxu0 0.0
    %5483 = vmatprep.subr.mxu0 0.0
    %5484 = vmatpush2.msra.mxu0 0.0
    %5485 = vmatprep.subr.mxu0 0.0
    %5486 = vmatpush2.msra.mxu0 0.0
    %5487 = vmatprep.subr.mxu0 0.0
    %5488 = vmatpush2.msra.mxu0 0.0
    %5489 = vmatprep.subr.mxu0 0.0
    %5490 = vmatpush2.msra.mxu0 0.0
    %5491 = vmatprep.subr.mxu0 0.0
    %5492 = vmatpush2.msra.mxu0 0.0
    %5493 = vmatprep.subr.mxu0 0.0
    %5494 = vmatpush2.msra.mxu0 0.0
    %5495 = vmatprep.subr.mxu0 0.0
    %5496 = vmatpush2.msra.mxu0 0.0
    %5497 = vmatprep.subr.mxu0 0.0
    %5498 = vmatpush2.msra.mxu0 0.0
    %5499 = vmatprep.subr.mxu0 0.0
    %5500 = vmatpush2.msra.mxu0 0.0
    %5501 = vmatprep.subr.mxu0 0.0
    %5502 = vmatpush2.msra.mxu0 0.0
    %5503 = vmatprep.subr.mxu0 0.0
    %5504 = vmatpush2.msra.mxu0 0.0
    %5505 = vmatprep.subr.mxu0 0.0
    %5506 = vmatpush2.msra.mxu0 0.0
    %5507 = vmatprep.subr.mxu0 0.0
    %5508 = vmatpush2.msra.mxu0 0.0
    %5509 = vmatprep.mubr.f32.mxu0 0.0
    %5510 = vmatmul.mubr.f32.gmra.mxu0 %v5423
    %v5511 = vpop.f32.mrf.mxu0
    %v5512 = vadd.f32 %v5444, %v5511
    %v5513 = vpop.f32.mrf.mxu0
    %5514 = vdwg.mxu0
    %5515 = vst [vmem:[#allocation17] sm:$0x3] %v5512
    // Predicated region
    $region62: #{tpu_custom_call.1} parent=1 // pred_check
      _
    $region63: #{tpu_custom_call.1} parent=1 // pred_check_branch
      %5517 = sbr.rel (0) target = $region65
    $region64: #{tpu_custom_call.1} parent=1 // pred_region
      %s5519 = ssub.s32 2048, 2048
      %5520 = vsyncadd [#allocation9], %s5519
      %s5521 = sshll.u32 [#allocation16], 4
      %s5522 = int_to_ptr.vmem [resolvable:$true] %s5521
      %5527 = dma.vmem_to_hbm [thread:$0]  %s5522, 2048, %s10, [#allocation9], 128, 128, 8
    $region65: #{tpu_custom_call.1} parent=1 // pred_fallthru
      _
    // Predicated region
    $region66: #{tpu_custom_call.1} parent=1 // pred_check
      _
    $region67: #{tpu_custom_call.1} parent=1 // pred_check_branch
      %5529 = sbr.rel (0) target = $region69
    $region68: #{tpu_custom_call.1} parent=1 // pred_region
      %s5531 = ssub.s32 32, 32
      %5532 = vsyncadd [#allocation18], %s5531
      %s5534 = sshll.u32 [#allocation17], 4
      %s5535 = int_to_ptr.vmem [resolvable:$true] %s5534
      %5537 = dma.vmem_to_hbm [thread:$0]  %s5535, 32, %s11, [#allocation18]
    $region69: #{tpu_custom_call.1} parent=1 // pred_fallthru
      _
    // Predicated region
    $region70: #{tpu_custom_call.1} parent=1 // pred_check
      _
    $region71: #{tpu_custom_call.1} parent=1 // pred_check_branch
      %5539 = sbr.rel (0) target = $region73
    $region72: #{tpu_custom_call.1} parent=1 // pred_region
      %5540 = dma.done [#allocation9], 2048
    $region73: #{tpu_custom_call.1} parent=1 // pred_fallthru
      _
    // Predicated region
    $region74: #{tpu_custom_call.1} parent=1 // pred_check
      _
    $region75: #{tpu_custom_call.1} parent=1 // pred_check_branch
      %5542 = sbr.rel (0) target = $region77
    $region76: #{tpu_custom_call.1} parent=1 // pred_region
      %5543 = dma.done [#allocation18], 32
    $region77: #{tpu_custom_call.1} parent=1 // pred_fallthru
      _
    %5544 = vsyncpa [#allocation8], 1
    %5545 = vsyncpa [#allocation11], 1
    %5546 = vsyncpa [#allocation14], 1
    %5547 = vsyncpa [#allocation9], 1
    %5548 = vsyncpa [#allocation18], 1

</llo_original>
